<compile_context>
chip_gen: v7x
topology: tpu7x:2x2x1
jax: 0.10.0
libtpu: 0.0.40
codegen_flags: <defaults>
</compile_context>

<pallas_src>
import functools

import numpy as np
import jax
import jax.numpy as jnp
from jax import lax
from jax.experimental import pallas as pl
from jax.experimental.pallas import tpu as pltpu

OC = 2            # conv out_channels (fixed by the module)
KH, KW = 3, 3     # conv kernel size (fixed by the module, dim=2 path)
HIDDEN = 512      # fc1 out_features (fixed by the module)


def fused_kernel(x_ref, wcf_ref, bc_ref, w1t_ref, b1_ref, w2t_ref, b2_ref,
                 o1_ref, o2_ref, xpad_ref, flat_ref, *, B, C, H, W):
    """conv3x3(pad=1)+ReLU -> flatten -> fc1+ReLU -> fc2, fully fused.

    x_ref   : (B, 2, C, H, W)        f32 VMEM   (x_list, untouched NCHW frames)
    wcf_ref : (OC*C*KH*KW,)          f32 SMEM   (conv1.weight, OIHW flattened)
    bc_ref  : (OC,)                  f32 SMEM   (conv1.bias)
    w1t_ref : (D, HIDDEN)            f32 VMEM   (fc1.weight, pre-transposed once)
    b1_ref  : (1, HIDDEN)            f32 VMEM
    w2t_ref : (HIDDEN, A)            f32 VMEM   (fc2.weight, pre-transposed once)
    b2_ref  : (1, A)                 f32 VMEM
    o1_ref  : (B, A)                 f32 VMEM   (output for frame 0)
    o2_ref  : (B, A)                 f32 VMEM   (output for frame 1)
    xpad_ref: (2B, C, H+2, W+2)      f32 VMEM scratch (in-kernel concat + pad-1)
    flat_ref: (2B, OC*H*W)           f32 VMEM scratch (lane-dense FC input)
    """
    N = 2 * B
    HW = H * W

    # ---- two-frame "concat" + zero pad-1, done in VMEM (no wrapper XLA ops) ----
    xpad_ref[...] = jnp.zeros_like(xpad_ref)
    xpad_ref[0:B, :, 1:H + 1, 1:W + 1] = x_ref[:, 0, :, :, :]   # frame 0 -> rows [0, B)
    xpad_ref[B:N, :, 1:H + 1, 1:W + 1] = x_ref[:, 1, :, :, :]   # frame 1 -> rows [B, 2B)

    # ---- 3x3 stride-1 conv (shared CNN_1) ----
    # One slab load per input channel; the 9 shifted windows are register slices
    # of that loaded value, reused for both output channels.
    acc = [jnp.full((N, H, W), bc_ref[oc], jnp.float32) for oc in range(OC)]
    for ic in range(C):
        xc = xpad_ref[:, ic, :, :]                              # (N, H+2, W+2), loaded once
        for oc in range(OC):
            base = (oc * C + ic) * (KH * KW)
            for dy in range(KH):
                for dx in range(KW):
                    w = wcf_ref[base + dy * KW + dx]
                    acc[oc] = acc[oc] + w * xc[:, dy:dy + H, dx:dx + W]

    # ---- ReLU + flatten into lane-dense (N, OC*H*W), matching torch .view order ----
    for oc in range(OC):
        a = jnp.maximum(acc[oc], 0.0)
        for y in range(H):
            off = oc * HW + y * W
            flat_ref[:, off:off + W] = a[:, y, :]

    # ---- fc1 + ReLU + fc2, back-to-back on the MXU (no intermediate HBM trip) ----
    h = jnp.dot(flat_ref[...], w1t_ref[...], preferred_element_type=jnp.float32)
    h = jnp.maximum(h + b1_ref[...], 0.0)
    out = jnp.dot(h, w2t_ref[...], preferred_element_type=jnp.float32) + b2_ref[...]

    o1_ref[...] = out[0:B, :].astype(o1_ref.dtype)
    o2_ref[...] = out[B:N, :].astype(o2_ref.dtype)


def prepare_params(params):
    """One-time parameter preparation (runs OUTSIDE the jitted forward).

    Hoists the fc weight transposes / bias reshapes / conv-weight flatten off the
    per-call hot path, as per the perf review.
    """
    wc, bc, w1, b1, w2, b2 = params
    return (jnp.asarray(wc, jnp.float32).reshape(-1),     # (OC*C*KH*KW,)
            jnp.asarray(bc, jnp.float32),                  # (OC,)
            jnp.asarray(w1, jnp.float32).T,                # (D, HIDDEN)
            jnp.asarray(b1, jnp.float32)[None, :],         # (1, HIDDEN)
            jnp.asarray(w2, jnp.float32).T,                # (HIDDEN, A)
            jnp.asarray(b2, jnp.float32)[None, :])         # (1, A)


def n_concat_cnns_forward(x_list, prepared):
    """Pallas implementation of N_Concat_CNNs.forward (dim=2).

    x_list  : (B, 2, C, H, W) float32, NCHW per frame.
    prepared: output of prepare_params().
    Returns [out1, out2], each (B, num_actions).
    """
    wcf, bc, w1t, b1r, w2t, b2r = prepared
    B, S, C, H, W = x_list.shape
    assert S == 2
    D = OC * H * W
    assert w1t.shape == (D, HIDDEN)
    A = w2t.shape[1]

    out1, out2 = pl.pallas_call(
        functools.partial(fused_kernel, B=B, C=C, H=H, W=W),
        out_shape=(jax.ShapeDtypeStruct((B, A), jnp.float32),
                   jax.ShapeDtypeStruct((B, A), jnp.float32)),
        in_specs=[
            pl.BlockSpec(memory_space=pltpu.MemorySpace.VMEM),   # x_list
            pl.BlockSpec(memory_space=pltpu.MemorySpace.SMEM),   # conv weight (flat)
            pl.BlockSpec(memory_space=pltpu.MemorySpace.SMEM),   # conv bias
            pl.BlockSpec(memory_space=pltpu.MemorySpace.VMEM),   # fc1 weight^T
            pl.BlockSpec(memory_space=pltpu.MemorySpace.VMEM),   # fc1 bias row
            pl.BlockSpec(memory_space=pltpu.MemorySpace.VMEM),   # fc2 weight^T
            pl.BlockSpec(memory_space=pltpu.MemorySpace.VMEM),   # fc2 bias row
        ],
        out_specs=(pl.BlockSpec(memory_space=pltpu.MemorySpace.VMEM),
                   pl.BlockSpec(memory_space=pltpu.MemorySpace.VMEM)),
        scratch_shapes=[
            pltpu.VMEM((2 * B, C, H + 2, W + 2), jnp.float32),   # padded input
            pltpu.VMEM((2 * B, D), jnp.float32),                 # lane-dense flat
        ],
    )(x_list, wcf, bc, w1t, b1r, w2t, b2r)
    return [out1, out2]


def reference_forward(x_list, params):
    """Pure-JAX reference mirroring the PyTorch module exactly."""
    wc, bc, w1, b1, w2, b2 = params

    def cnn(x):  # x: (B, C, H, W)
        y = lax.conv_general_dilated(
            x, wc, window_strides=(1, 1), padding=((1, 1), (1, 1)),
            dimension_numbers=("NCHW", "OIHW", "NCHW"),
            precision=lax.Precision.HIGHEST)
        y = jax.nn.relu(y + bc[None, :, None, None])
        y = y.reshape(y.shape[0], -1)
        h = jax.nn.relu(jnp.dot(y, w1.T, precision=lax.Precision.HIGHEST) + b1)
        return jnp.dot(h, w2.T, precision=lax.Precision.HIGHEST) + b2

    return [cnn(x_list[:, 0]), cnn(x_list[:, 1])]


if __name__ == "__main__":
    B, C, H, W = 2, 4, 16, 16
    num_actions = 8
    D = OC * H * W   # input_dim derived from example_input path: conv preserves HxW

    key = jax.random.PRNGKey(0)
    kx, kwc, kbc, kw1, kb1, kw2, kb2 = jax.random.split(key, 7)

    # Deterministic parameter init (shapes follow the PyTorch module's __init__).
    wc = jax.random.uniform(kwc, (OC, C, KH, KW), jnp.float32, -0.3, 0.3)          # conv1.weight
    bc = jax.random.uniform(kbc, (OC,), jnp.float32, -0.3, 0.3)                    # conv1.bias
    w1 = jax.random.uniform(kw1, (HIDDEN, D), jnp.float32, -0.04, 0.04)            # fc1.weight
    b1 = jax.random.uniform(kb1, (HIDDEN,), jnp.float32, -0.04, 0.04)              # fc1.bias
    w2 = jax.random.uniform(kw2, (num_actions, HIDDEN), jnp.float32, -0.04, 0.04)  # fc2.weight
    b2 = jax.random.uniform(kb2, (num_actions,), jnp.float32, -0.04, 0.04)         # fc2.bias
    # NOTE: fc3 exists in the PyTorch __init__ but is unused in forward -> not materialized.
    params = (wc, bc, w1, b1, w2, b2)

    x_list = jax.random.normal(kx, (B, 2, C, H, W), jnp.float32)

    prepared = prepare_params(params)             # one-time, outside the jitted hot path
    fwd = jax.jit(n_concat_cnns_forward)
    out1, out2 = fwd(x_list, prepared)
    jax.block_until_ready(out1)
    jax.block_until_ready(out2)

    ref1, ref2 = reference_forward(x_list, params)

    ok = (np.allclose(np.asarray(out1), np.asarray(ref1), rtol=1e-3, atol=1e-3)
          and np.allclose(np.asarray(out2), np.asarray(ref2), rtol=1e-3, atol=1e-3))
    if not ok:
        raise AssertionError("Pallas output does not match reference")
    print("KERNEL_OK")
</pallas_src>

<mosaic_0001>
module attributes {stable_mosaic.version = 11 : i64} {
  func.func @fused_kernel(%arg0: memref<2x2x4x16x16xf32, #tpu.memory_space<vmem>>, %arg1: memref<72xf32, #tpu.memory_space<smem>>, %arg2: memref<2xf32, #tpu.memory_space<smem>>, %arg3: memref<512x512xf32, #tpu.memory_space<vmem>>, %arg4: memref<1x512xf32, #tpu.memory_space<vmem>>, %arg5: memref<512x8xf32, #tpu.memory_space<vmem>>, %arg6: memref<1x8xf32, #tpu.memory_space<vmem>>, %arg7: memref<2x8xf32, #tpu.memory_space<vmem>>, %arg8: memref<2x8xf32, #tpu.memory_space<vmem>>, %arg9: memref<4x4x18x18xf32, #tpu.memory_space<vmem>>, %arg10: memref<4x512xf32, #tpu.memory_space<vmem>>) attributes {dimension_semantics = [], scalar_prefetch = 0 : i64, scratch_operands = 2 : i64, tpu.core_type = #tpu.core_type<tc>} {
    %cst = arith.constant 0.000000e+00 : f32
    %0 = vector.broadcast %cst : f32 to vector<4x4x18x18xf32>
    %c0 = arith.constant 0 : index
    %c0_0 = arith.constant 0 : index
    %c0_1 = arith.constant 0 : index
    %c0_2 = arith.constant 0 : index
    %1 = vector.load %arg9[%c0, %c0_0, %c0_1, %c0_2] : memref<4x4x18x18xf32, #tpu.memory_space<vmem>>, vector<4x4x18x18xf32>
    tpu.vector_store %arg9[%c0, %c0_0, %c0_1, %c0_2], %0 {strides = array<i32>} : memref<4x4x18x18xf32, #tpu.memory_space<vmem>>, vector<4x4x18x18xf32>,
    %c0_3 = arith.constant 0 : index
    %c0_4 = arith.constant 0 : index
    %c0_5 = arith.constant 0 : index
    %c0_6 = arith.constant 0 : index
    %c0_7 = arith.constant 0 : index
    %2 = vector.load %arg0[%c0_3, %c0_4, %c0_5, %c0_6, %c0_7] : memref<2x2x4x16x16xf32, #tpu.memory_space<vmem>>, vector<2x1x4x16x16xf32>
    %3 = vector.shape_cast %2 : vector<2x1x4x16x16xf32> to vector<2x4x16x16xf32>
    %c0_8 = arith.constant 0 : index
    %c0_9 = arith.constant 0 : index
    %c1 = arith.constant 1 : index
    %c1_10 = arith.constant 1 : index
    %4 = vector.load %arg9[%c0_8, %c0_9, %c1, %c1_10] : memref<4x4x18x18xf32, #tpu.memory_space<vmem>>, vector<2x4x16x16xf32>
    tpu.vector_store %arg9[%c0_8, %c0_9, %c1, %c1_10], %3 {strides = array<i32>} : memref<4x4x18x18xf32, #tpu.memory_space<vmem>>, vector<2x4x16x16xf32>,
    %c0_11 = arith.constant 0 : index
    %c1_12 = arith.constant 1 : index
    %c0_13 = arith.constant 0 : index
    %c0_14 = arith.constant 0 : index
    %c0_15 = arith.constant 0 : index
    %5 = vector.load %arg0[%c0_11, %c1_12, %c0_13, %c0_14, %c0_15] : memref<2x2x4x16x16xf32, #tpu.memory_space<vmem>>, vector<2x1x4x16x16xf32>
    %6 = vector.shape_cast %5 : vector<2x1x4x16x16xf32> to vector<2x4x16x16xf32>
    %c2 = arith.constant 2 : index
    %c0_16 = arith.constant 0 : index
    %c1_17 = arith.constant 1 : index
    %c1_18 = arith.constant 1 : index
    %7 = vector.load %arg9[%c2, %c0_16, %c1_17, %c1_18] : memref<4x4x18x18xf32, #tpu.memory_space<vmem>>, vector<2x4x16x16xf32>
    tpu.vector_store %arg9[%c2, %c0_16, %c1_17, %c1_18], %6 {strides = array<i32>} : memref<4x4x18x18xf32, #tpu.memory_space<vmem>>, vector<2x4x16x16xf32>,
    %c0_19 = arith.constant 0 : index
    %8 = memref.load %arg2[%c0_19] : memref<2xf32, #tpu.memory_space<smem>>
    %9 = vector.broadcast %8 : f32 to vector<4x16x16xf32>
    %c1_20 = arith.constant 1 : index
    %10 = memref.load %arg2[%c1_20] : memref<2xf32, #tpu.memory_space<smem>>
    %11 = vector.broadcast %10 : f32 to vector<4x16x16xf32>
    %c0_21 = arith.constant 0 : index
    %c0_22 = arith.constant 0 : index
    %c0_23 = arith.constant 0 : index
    %c0_24 = arith.constant 0 : index
    %12 = vector.load %arg9[%c0_21, %c0_22, %c0_23, %c0_24] : memref<4x4x18x18xf32, #tpu.memory_space<vmem>>, vector<4x1x18x18xf32>
    %13 = vector.shape_cast %12 : vector<4x1x18x18xf32> to vector<4x18x18xf32>
    %c0_25 = arith.constant 0 : index
    %14 = memref.load %arg1[%c0_25] : memref<72xf32, #tpu.memory_space<smem>>
    %15 = vector.extract_strided_slice %13 {offsets = [0, 0, 0], sizes = [4, 16, 16], strides = [1, 1, 1]} : vector<4x18x18xf32> to vector<4x16x16xf32>
    %16 = vector.broadcast %14 : f32 to vector<4x16x16xf32>
    %17 = arith.mulf %16, %15 : vector<4x16x16xf32>
    %18 = arith.addf %9, %17 : vector<4x16x16xf32>
    %c1_26 = arith.constant 1 : index
    %19 = memref.load %arg1[%c1_26] : memref<72xf32, #tpu.memory_space<smem>>
    %20 = vector.extract_strided_slice %13 {offsets = [0, 0, 1], sizes = [4, 16, 16], strides = [1, 1, 1]} : vector<4x18x18xf32> to vector<4x16x16xf32>
    %21 = vector.broadcast %19 : f32 to vector<4x16x16xf32>
    %22 = arith.mulf %21, %20 : vector<4x16x16xf32>
    %23 = arith.addf %18, %22 : vector<4x16x16xf32>
    %c2_27 = arith.constant 2 : index
    %24 = memref.load %arg1[%c2_27] : memref<72xf32, #tpu.memory_space<smem>>
    %25 = vector.extract_strided_slice %13 {offsets = [0, 0, 2], sizes = [4, 16, 16], strides = [1, 1, 1]} : vector<4x18x18xf32> to vector<4x16x16xf32>
    %26 = vector.broadcast %24 : f32 to vector<4x16x16xf32>
    %27 = arith.mulf %26, %25 : vector<4x16x16xf32>
    %28 = arith.addf %23, %27 : vector<4x16x16xf32>
    %c3 = arith.constant 3 : index
    %29 = memref.load %arg1[%c3] : memref<72xf32, #tpu.memory_space<smem>>
    %30 = vector.extract_strided_slice %13 {offsets = [0, 1, 0], sizes = [4, 16, 16], strides = [1, 1, 1]} : vector<4x18x18xf32> to vector<4x16x16xf32>
    %31 = vector.broadcast %29 : f32 to vector<4x16x16xf32>
    %32 = arith.mulf %31, %30 : vector<4x16x16xf32>
    %33 = arith.addf %28, %32 : vector<4x16x16xf32>
    %c4 = arith.constant 4 : index
    %34 = memref.load %arg1[%c4] : memref<72xf32, #tpu.memory_space<smem>>
    %35 = vector.extract_strided_slice %13 {offsets = [0, 1, 1], sizes = [4, 16, 16], strides = [1, 1, 1]} : vector<4x18x18xf32> to vector<4x16x16xf32>
    %36 = vector.broadcast %34 : f32 to vector<4x16x16xf32>
    %37 = arith.mulf %36, %35 : vector<4x16x16xf32>
    %38 = arith.addf %33, %37 : vector<4x16x16xf32>
    %c5 = arith.constant 5 : index
    %39 = memref.load %arg1[%c5] : memref<72xf32, #tpu.memory_space<smem>>
    %40 = vector.extract_strided_slice %13 {offsets = [0, 1, 2], sizes = [4, 16, 16], strides = [1, 1, 1]} : vector<4x18x18xf32> to vector<4x16x16xf32>
    %41 = vector.broadcast %39 : f32 to vector<4x16x16xf32>
    %42 = arith.mulf %41, %40 : vector<4x16x16xf32>
    %43 = arith.addf %38, %42 : vector<4x16x16xf32>
    %c6 = arith.constant 6 : index
    %44 = memref.load %arg1[%c6] : memref<72xf32, #tpu.memory_space<smem>>
    %45 = vector.extract_strided_slice %13 {offsets = [0, 2, 0], sizes = [4, 16, 16], strides = [1, 1, 1]} : vector<4x18x18xf32> to vector<4x16x16xf32>
    %46 = vector.broadcast %44 : f32 to vector<4x16x16xf32>
    %47 = arith.mulf %46, %45 : vector<4x16x16xf32>
    %48 = arith.addf %43, %47 : vector<4x16x16xf32>
    %c7 = arith.constant 7 : index
    %49 = memref.load %arg1[%c7] : memref<72xf32, #tpu.memory_space<smem>>
    %50 = vector.extract_strided_slice %13 {offsets = [0, 2, 1], sizes = [4, 16, 16], strides = [1, 1, 1]} : vector<4x18x18xf32> to vector<4x16x16xf32>
    %51 = vector.broadcast %49 : f32 to vector<4x16x16xf32>
    %52 = arith.mulf %51, %50 : vector<4x16x16xf32>
    %53 = arith.addf %48, %52 : vector<4x16x16xf32>
    %c8 = arith.constant 8 : index
    %54 = memref.load %arg1[%c8] : memref<72xf32, #tpu.memory_space<smem>>
    %55 = vector.extract_strided_slice %13 {offsets = [0, 2, 2], sizes = [4, 16, 16], strides = [1, 1, 1]} : vector<4x18x18xf32> to vector<4x16x16xf32>
    %56 = vector.broadcast %54 : f32 to vector<4x16x16xf32>
    %57 = arith.mulf %56, %55 : vector<4x16x16xf32>
    %58 = arith.addf %53, %57 : vector<4x16x16xf32>
    %c36 = arith.constant 36 : index
    %59 = memref.load %arg1[%c36] : memref<72xf32, #tpu.memory_space<smem>>
    %60 = vector.extract_strided_slice %13 {offsets = [0, 0, 0], sizes = [4, 16, 16], strides = [1, 1, 1]} : vector<4x18x18xf32> to vector<4x16x16xf32>
    %61 = vector.broadcast %59 : f32 to vector<4x16x16xf32>
    %62 = arith.mulf %61, %60 : vector<4x16x16xf32>
    %63 = arith.addf %11, %62 : vector<4x16x16xf32>
    %c37 = arith.constant 37 : index
    %64 = memref.load %arg1[%c37] : memref<72xf32, #tpu.memory_space<smem>>
    %65 = vector.extract_strided_slice %13 {offsets = [0, 0, 1], sizes = [4, 16, 16], strides = [1, 1, 1]} : vector<4x18x18xf32> to vector<4x16x16xf32>
    %66 = vector.broadcast %64 : f32 to vector<4x16x16xf32>
    %67 = arith.mulf %66, %65 : vector<4x16x16xf32>
    %68 = arith.addf %63, %67 : vector<4x16x16xf32>
    %c38 = arith.constant 38 : index
    %69 = memref.load %arg1[%c38] : memref<72xf32, #tpu.memory_space<smem>>
    %70 = vector.extract_strided_slice %13 {offsets = [0, 0, 2], sizes = [4, 16, 16], strides = [1, 1, 1]} : vector<4x18x18xf32> to vector<4x16x16xf32>
    %71 = vector.broadcast %69 : f32 to vector<4x16x16xf32>
    %72 = arith.mulf %71, %70 : vector<4x16x16xf32>
    %73 = arith.addf %68, %72 : vector<4x16x16xf32>
    %c39 = arith.constant 39 : index
    %74 = memref.load %arg1[%c39] : memref<72xf32, #tpu.memory_space<smem>>
    %75 = vector.extract_strided_slice %13 {offsets = [0, 1, 0], sizes = [4, 16, 16], strides = [1, 1, 1]} : vector<4x18x18xf32> to vector<4x16x16xf32>
    %76 = vector.broadcast %74 : f32 to vector<4x16x16xf32>
    %77 = arith.mulf %76, %75 : vector<4x16x16xf32>
    %78 = arith.addf %73, %77 : vector<4x16x16xf32>
    %c40 = arith.constant 40 : index
    %79 = memref.load %arg1[%c40] : memref<72xf32, #tpu.memory_space<smem>>
    %80 = vector.extract_strided_slice %13 {offsets = [0, 1, 1], sizes = [4, 16, 16], strides = [1, 1, 1]} : vector<4x18x18xf32> to vector<4x16x16xf32>
    %81 = vector.broadcast %79 : f32 to vector<4x16x16xf32>
    %82 = arith.mulf %81, %80 : vector<4x16x16xf32>
    %83 = arith.addf %78, %82 : vector<4x16x16xf32>
    %c41 = arith.constant 41 : index
    %84 = memref.load %arg1[%c41] : memref<72xf32, #tpu.memory_space<smem>>
    %85 = vector.extract_strided_slice %13 {offsets = [0, 1, 2], sizes = [4, 16, 16], strides = [1, 1, 1]} : vector<4x18x18xf32> to vector<4x16x16xf32>
    %86 = vector.broadcast %84 : f32 to vector<4x16x16xf32>
    %87 = arith.mulf %86, %85 : vector<4x16x16xf32>
    %88 = arith.addf %83, %87 : vector<4x16x16xf32>
    %c42 = arith.constant 42 : index
    %89 = memref.load %arg1[%c42] : memref<72xf32, #tpu.memory_space<smem>>
    %90 = vector.extract_strided_slice %13 {offsets = [0, 2, 0], sizes = [4, 16, 16], strides = [1, 1, 1]} : vector<4x18x18xf32> to vector<4x16x16xf32>
    %91 = vector.broadcast %89 : f32 to vector<4x16x16xf32>
    %92 = arith.mulf %91, %90 : vector<4x16x16xf32>
    %93 = arith.addf %88, %92 : vector<4x16x16xf32>
    %c43 = arith.constant 43 : index
    %94 = memref.load %arg1[%c43] : memref<72xf32, #tpu.memory_space<smem>>
    %95 = vector.extract_strided_slice %13 {offsets = [0, 2, 1], sizes = [4, 16, 16], strides = [1, 1, 1]} : vector<4x18x18xf32> to vector<4x16x16xf32>
    %96 = vector.broadcast %94 : f32 to vector<4x16x16xf32>
    %97 = arith.mulf %96, %95 : vector<4x16x16xf32>
    %98 = arith.addf %93, %97 : vector<4x16x16xf32>
    %c44 = arith.constant 44 : index
    %99 = memref.load %arg1[%c44] : memref<72xf32, #tpu.memory_space<smem>>
    %100 = vector.extract_strided_slice %13 {offsets = [0, 2, 2], sizes = [4, 16, 16], strides = [1, 1, 1]} : vector<4x18x18xf32> to vector<4x16x16xf32>
    %101 = vector.broadcast %99 : f32 to vector<4x16x16xf32>
    %102 = arith.mulf %101, %100 : vector<4x16x16xf32>
    %103 = arith.addf %98, %102 : vector<4x16x16xf32>
    %c0_28 = arith.constant 0 : index
    %c1_29 = arith.constant 1 : index
    %c0_30 = arith.constant 0 : index
    %c0_31 = arith.constant 0 : index
    %104 = vector.load %arg9[%c0_28, %c1_29, %c0_30, %c0_31] : memref<4x4x18x18xf32, #tpu.memory_space<vmem>>, vector<4x1x18x18xf32>
    %105 = vector.shape_cast %104 : vector<4x1x18x18xf32> to vector<4x18x18xf32>
    %c9 = arith.constant 9 : index
    %106 = memref.load %arg1[%c9] : memref<72xf32, #tpu.memory_space<smem>>
    %107 = vector.extract_strided_slice %105 {offsets = [0, 0, 0], sizes = [4, 16, 16], strides = [1, 1, 1]} : vector<4x18x18xf32> to vector<4x16x16xf32>
    %108 = vector.broadcast %106 : f32 to vector<4x16x16xf32>
    %109 = arith.mulf %108, %107 : vector<4x16x16xf32>
    %110 = arith.addf %58, %109 : vector<4x16x16xf32>
    %c10 = arith.constant 10 : index
    %111 = memref.load %arg1[%c10] : memref<72xf32, #tpu.memory_space<smem>>
    %112 = vector.extract_strided_slice %105 {offsets = [0, 0, 1], sizes = [4, 16, 16], strides = [1, 1, 1]} : vector<4x18x18xf32> to vector<4x16x16xf32>
    %113 = vector.broadcast %111 : f32 to vector<4x16x16xf32>
    %114 = arith.mulf %113, %112 : vector<4x16x16xf32>
    %115 = arith.addf %110, %114 : vector<4x16x16xf32>
    %c11 = arith.constant 11 : index
    %116 = memref.load %arg1[%c11] : memref<72xf32, #tpu.memory_space<smem>>
    %117 = vector.extract_strided_slice %105 {offsets = [0, 0, 2], sizes = [4, 16, 16], strides = [1, 1, 1]} : vector<4x18x18xf32> to vector<4x16x16xf32>
    %118 = vector.broadcast %116 : f32 to vector<4x16x16xf32>
    %119 = arith.mulf %118, %117 : vector<4x16x16xf32>
    %120 = arith.addf %115, %119 : vector<4x16x16xf32>
    %c12 = arith.constant 12 : index
    %121 = memref.load %arg1[%c12] : memref<72xf32, #tpu.memory_space<smem>>
    %122 = vector.extract_strided_slice %105 {offsets = [0, 1, 0], sizes = [4, 16, 16], strides = [1, 1, 1]} : vector<4x18x18xf32> to vector<4x16x16xf32>
    %123 = vector.broadcast %121 : f32 to vector<4x16x16xf32>
    %124 = arith.mulf %123, %122 : vector<4x16x16xf32>
    %125 = arith.addf %120, %124 : vector<4x16x16xf32>
    %c13 = arith.constant 13 : index
    %126 = memref.load %arg1[%c13] : memref<72xf32, #tpu.memory_space<smem>>
    %127 = vector.extract_strided_slice %105 {offsets = [0, 1, 1], sizes = [4, 16, 16], strides = [1, 1, 1]} : vector<4x18x18xf32> to vector<4x16x16xf32>
    %128 = vector.broadcast %126 : f32 to vector<4x16x16xf32>
    %129 = arith.mulf %128, %127 : vector<4x16x16xf32>
    %130 = arith.addf %125, %129 : vector<4x16x16xf32>
    %c14 = arith.constant 14 : index
    %131 = memref.load %arg1[%c14] : memref<72xf32, #tpu.memory_space<smem>>
    %132 = vector.extract_strided_slice %105 {offsets = [0, 1, 2], sizes = [4, 16, 16], strides = [1, 1, 1]} : vector<4x18x18xf32> to vector<4x16x16xf32>
    %133 = vector.broadcast %131 : f32 to vector<4x16x16xf32>
    %134 = arith.mulf %133, %132 : vector<4x16x16xf32>
    %135 = arith.addf %130, %134 : vector<4x16x16xf32>
    %c15 = arith.constant 15 : index
    %136 = memref.load %arg1[%c15] : memref<72xf32, #tpu.memory_space<smem>>
    %137 = vector.extract_strided_slice %105 {offsets = [0, 2, 0], sizes = [4, 16, 16], strides = [1, 1, 1]} : vector<4x18x18xf32> to vector<4x16x16xf32>
    %138 = vector.broadcast %136 : f32 to vector<4x16x16xf32>
    %139 = arith.mulf %138, %137 : vector<4x16x16xf32>
    %140 = arith.addf %135, %139 : vector<4x16x16xf32>
    %c16 = arith.constant 16 : index
    %141 = memref.load %arg1[%c16] : memref<72xf32, #tpu.memory_space<smem>>
    %142 = vector.extract_strided_slice %105 {offsets = [0, 2, 1], sizes = [4, 16, 16], strides = [1, 1, 1]} : vector<4x18x18xf32> to vector<4x16x16xf32>
    %143 = vector.broadcast %141 : f32 to vector<4x16x16xf32>
    %144 = arith.mulf %143, %142 : vector<4x16x16xf32>
    %145 = arith.addf %140, %144 : vector<4x16x16xf32>
    %c17 = arith.constant 17 : index
    %146 = memref.load %arg1[%c17] : memref<72xf32, #tpu.memory_space<smem>>
    %147 = vector.extract_strided_slice %105 {offsets = [0, 2, 2], sizes = [4, 16, 16], strides = [1, 1, 1]} : vector<4x18x18xf32> to vector<4x16x16xf32>
    %148 = vector.broadcast %146 : f32 to vector<4x16x16xf32>
    %149 = arith.mulf %148, %147 : vector<4x16x16xf32>
    %150 = arith.addf %145, %149 : vector<4x16x16xf32>
    %c45 = arith.constant 45 : index
    %151 = memref.load %arg1[%c45] : memref<72xf32, #tpu.memory_space<smem>>
    %152 = vector.extract_strided_slice %105 {offsets = [0, 0, 0], sizes = [4, 16, 16], strides = [1, 1, 1]} : vector<4x18x18xf32> to vector<4x16x16xf32>
    %153 = vector.broadcast %151 : f32 to vector<4x16x16xf32>
    %154 = arith.mulf %153, %152 : vector<4x16x16xf32>
    %155 = arith.addf %103, %154 : vector<4x16x16xf32>
    %c46 = arith.constant 46 : index
    %156 = memref.load %arg1[%c46] : memref<72xf32, #tpu.memory_space<smem>>
    %157 = vector.extract_strided_slice %105 {offsets = [0, 0, 1], sizes = [4, 16, 16], strides = [1, 1, 1]} : vector<4x18x18xf32> to vector<4x16x16xf32>
    %158 = vector.broadcast %156 : f32 to vector<4x16x16xf32>
    %159 = arith.mulf %158, %157 : vector<4x16x16xf32>
    %160 = arith.addf %155, %159 : vector<4x16x16xf32>
    %c47 = arith.constant 47 : index
    %161 = memref.load %arg1[%c47] : memref<72xf32, #tpu.memory_space<smem>>
    %162 = vector.extract_strided_slice %105 {offsets = [0, 0, 2], sizes = [4, 16, 16], strides = [1, 1, 1]} : vector<4x18x18xf32> to vector<4x16x16xf32>
    %163 = vector.broadcast %161 : f32 to vector<4x16x16xf32>
    %164 = arith.mulf %163, %162 : vector<4x16x16xf32>
    %165 = arith.addf %160, %164 : vector<4x16x16xf32>
    %c48 = arith.constant 48 : index
    %166 = memref.load %arg1[%c48] : memref<72xf32, #tpu.memory_space<smem>>
    %167 = vector.extract_strided_slice %105 {offsets = [0, 1, 0], sizes = [4, 16, 16], strides = [1, 1, 1]} : vector<4x18x18xf32> to vector<4x16x16xf32>
    %168 = vector.broadcast %166 : f32 to vector<4x16x16xf32>
    %169 = arith.mulf %168, %167 : vector<4x16x16xf32>
    %170 = arith.addf %165, %169 : vector<4x16x16xf32>
    %c49 = arith.constant 49 : index
    %171 = memref.load %arg1[%c49] : memref<72xf32, #tpu.memory_space<smem>>
    %172 = vector.extract_strided_slice %105 {offsets = [0, 1, 1], sizes = [4, 16, 16], strides = [1, 1, 1]} : vector<4x18x18xf32> to vector<4x16x16xf32>
    %173 = vector.broadcast %171 : f32 to vector<4x16x16xf32>
    %174 = arith.mulf %173, %172 : vector<4x16x16xf32>
    %175 = arith.addf %170, %174 : vector<4x16x16xf32>
    %c50 = arith.constant 50 : index
    %176 = memref.load %arg1[%c50] : memref<72xf32, #tpu.memory_space<smem>>
    %177 = vector.extract_strided_slice %105 {offsets = [0, 1, 2], sizes = [4, 16, 16], strides = [1, 1, 1]} : vector<4x18x18xf32> to vector<4x16x16xf32>
    %178 = vector.broadcast %176 : f32 to vector<4x16x16xf32>
    %179 = arith.mulf %178, %177 : vector<4x16x16xf32>
    %180 = arith.addf %175, %179 : vector<4x16x16xf32>
    %c51 = arith.constant 51 : index
    %181 = memref.load %arg1[%c51] : memref<72xf32, #tpu.memory_space<smem>>
    %182 = vector.extract_strided_slice %105 {offsets = [0, 2, 0], sizes = [4, 16, 16], strides = [1, 1, 1]} : vector<4x18x18xf32> to vector<4x16x16xf32>
    %183 = vector.broadcast %181 : f32 to vector<4x16x16xf32>
    %184 = arith.mulf %183, %182 : vector<4x16x16xf32>
    %185 = arith.addf %180, %184 : vector<4x16x16xf32>
    %c52 = arith.constant 52 : index
    %186 = memref.load %arg1[%c52] : memref<72xf32, #tpu.memory_space<smem>>
    %187 = vector.extract_strided_slice %105 {offsets = [0, 2, 1], sizes = [4, 16, 16], strides = [1, 1, 1]} : vector<4x18x18xf32> to vector<4x16x16xf32>
    %188 = vector.broadcast %186 : f32 to vector<4x16x16xf32>
    %189 = arith.mulf %188, %187 : vector<4x16x16xf32>
    %190 = arith.addf %185, %189 : vector<4x16x16xf32>
    %c53 = arith.constant 53 : index
    %191 = memref.load %arg1[%c53] : memref<72xf32, #tpu.memory_space<smem>>
    %192 = vector.extract_strided_slice %105 {offsets = [0, 2, 2], sizes = [4, 16, 16], strides = [1, 1, 1]} : vector<4x18x18xf32> to vector<4x16x16xf32>
    %193 = vector.broadcast %191 : f32 to vector<4x16x16xf32>
    %194 = arith.mulf %193, %192 : vector<4x16x16xf32>
    %195 = arith.addf %190, %194 : vector<4x16x16xf32>
    %c0_32 = arith.constant 0 : index
    %c2_33 = arith.constant 2 : index
    %c0_34 = arith.constant 0 : index
    %c0_35 = arith.constant 0 : index
    %196 = vector.load %arg9[%c0_32, %c2_33, %c0_34, %c0_35] : memref<4x4x18x18xf32, #tpu.memory_space<vmem>>, vector<4x1x18x18xf32>
    %197 = vector.shape_cast %196 : vector<4x1x18x18xf32> to vector<4x18x18xf32>
    %c18 = arith.constant 18 : index
    %198 = memref.load %arg1[%c18] : memref<72xf32, #tpu.memory_space<smem>>
    %199 = vector.extract_strided_slice %197 {offsets = [0, 0, 0], sizes = [4, 16, 16], strides = [1, 1, 1]} : vector<4x18x18xf32> to vector<4x16x16xf32>
    %200 = vector.broadcast %198 : f32 to vector<4x16x16xf32>
    %201 = arith.mulf %200, %199 : vector<4x16x16xf32>
    %202 = arith.addf %150, %201 : vector<4x16x16xf32>
    %c19 = arith.constant 19 : index
    %203 = memref.load %arg1[%c19] : memref<72xf32, #tpu.memory_space<smem>>
    %204 = vector.extract_strided_slice %197 {offsets = [0, 0, 1], sizes = [4, 16, 16], strides = [1, 1, 1]} : vector<4x18x18xf32> to vector<4x16x16xf32>
    %205 = vector.broadcast %203 : f32 to vector<4x16x16xf32>
    %206 = arith.mulf %205, %204 : vector<4x16x16xf32>
    %207 = arith.addf %202, %206 : vector<4x16x16xf32>
    %c20 = arith.constant 20 : index
    %208 = memref.load %arg1[%c20] : memref<72xf32, #tpu.memory_space<smem>>
    %209 = vector.extract_strided_slice %197 {offsets = [0, 0, 2], sizes = [4, 16, 16], strides = [1, 1, 1]} : vector<4x18x18xf32> to vector<4x16x16xf32>
    %210 = vector.broadcast %208 : f32 to vector<4x16x16xf32>
    %211 = arith.mulf %210, %209 : vector<4x16x16xf32>
    %212 = arith.addf %207, %211 : vector<4x16x16xf32>
    %c21 = arith.constant 21 : index
    %213 = memref.load %arg1[%c21] : memref<72xf32, #tpu.memory_space<smem>>
    %214 = vector.extract_strided_slice %197 {offsets = [0, 1, 0], sizes = [4, 16, 16], strides = [1, 1, 1]} : vector<4x18x18xf32> to vector<4x16x16xf32>
    %215 = vector.broadcast %213 : f32 to vector<4x16x16xf32>
    %216 = arith.mulf %215, %214 : vector<4x16x16xf32>
    %217 = arith.addf %212, %216 : vector<4x16x16xf32>
    %c22 = arith.constant 22 : index
    %218 = memref.load %arg1[%c22] : memref<72xf32, #tpu.memory_space<smem>>
    %219 = vector.extract_strided_slice %197 {offsets = [0, 1, 1], sizes = [4, 16, 16], strides = [1, 1, 1]} : vector<4x18x18xf32> to vector<4x16x16xf32>
    %220 = vector.broadcast %218 : f32 to vector<4x16x16xf32>
    %221 = arith.mulf %220, %219 : vector<4x16x16xf32>
    %222 = arith.addf %217, %221 : vector<4x16x16xf32>
    %c23 = arith.constant 23 : index
    %223 = memref.load %arg1[%c23] : memref<72xf32, #tpu.memory_space<smem>>
    %224 = vector.extract_strided_slice %197 {offsets = [0, 1, 2], sizes = [4, 16, 16], strides = [1, 1, 1]} : vector<4x18x18xf32> to vector<4x16x16xf32>
    %225 = vector.broadcast %223 : f32 to vector<4x16x16xf32>
    %226 = arith.mulf %225, %224 : vector<4x16x16xf32>
    %227 = arith.addf %222, %226 : vector<4x16x16xf32>
    %c24 = arith.constant 24 : index
    %228 = memref.load %arg1[%c24] : memref<72xf32, #tpu.memory_space<smem>>
    %229 = vector.extract_strided_slice %197 {offsets = [0, 2, 0], sizes = [4, 16, 16], strides = [1, 1, 1]} : vector<4x18x18xf32> to vector<4x16x16xf32>
    %230 = vector.broadcast %228 : f32 to vector<4x16x16xf32>
    %231 = arith.mulf %230, %229 : vector<4x16x16xf32>
    %232 = arith.addf %227, %231 : vector<4x16x16xf32>
    %c25 = arith.constant 25 : index
    %233 = memref.load %arg1[%c25] : memref<72xf32, #tpu.memory_space<smem>>
    %234 = vector.extract_strided_slice %197 {offsets = [0, 2, 1], sizes = [4, 16, 16], strides = [1, 1, 1]} : vector<4x18x18xf32> to vector<4x16x16xf32>
    %235 = vector.broadcast %233 : f32 to vector<4x16x16xf32>
    %236 = arith.mulf %235, %234 : vector<4x16x16xf32>
    %237 = arith.addf %232, %236 : vector<4x16x16xf32>
    %c26 = arith.constant 26 : index
    %238 = memref.load %arg1[%c26] : memref<72xf32, #tpu.memory_space<smem>>
    %239 = vector.extract_strided_slice %197 {offsets = [0, 2, 2], sizes = [4, 16, 16], strides = [1, 1, 1]} : vector<4x18x18xf32> to vector<4x16x16xf32>
    %240 = vector.broadcast %238 : f32 to vector<4x16x16xf32>
    %241 = arith.mulf %240, %239 : vector<4x16x16xf32>
    %242 = arith.addf %237, %241 : vector<4x16x16xf32>
    %c54 = arith.constant 54 : index
    %243 = memref.load %arg1[%c54] : memref<72xf32, #tpu.memory_space<smem>>
    %244 = vector.extract_strided_slice %197 {offsets = [0, 0, 0], sizes = [4, 16, 16], strides = [1, 1, 1]} : vector<4x18x18xf32> to vector<4x16x16xf32>
    %245 = vector.broadcast %243 : f32 to vector<4x16x16xf32>
    %246 = arith.mulf %245, %244 : vector<4x16x16xf32>
    %247 = arith.addf %195, %246 : vector<4x16x16xf32>
    %c55 = arith.constant 55 : index
    %248 = memref.load %arg1[%c55] : memref<72xf32, #tpu.memory_space<smem>>
    %249 = vector.extract_strided_slice %197 {offsets = [0, 0, 1], sizes = [4, 16, 16], strides = [1, 1, 1]} : vector<4x18x18xf32> to vector<4x16x16xf32>
    %250 = vector.broadcast %248 : f32 to vector<4x16x16xf32>
    %251 = arith.mulf %250, %249 : vector<4x16x16xf32>
    %252 = arith.addf %247, %251 : vector<4x16x16xf32>
    %c56 = arith.constant 56 : index
    %253 = memref.load %arg1[%c56] : memref<72xf32, #tpu.memory_space<smem>>
    %254 = vector.extract_strided_slice %197 {offsets = [0, 0, 2], sizes = [4, 16, 16], strides = [1, 1, 1]} : vector<4x18x18xf32> to vector<4x16x16xf32>
    %255 = vector.broadcast %253 : f32 to vector<4x16x16xf32>
    %256 = arith.mulf %255, %254 : vector<4x16x16xf32>
    %257 = arith.addf %252, %256 : vector<4x16x16xf32>
    %c57 = arith.constant 57 : index
    %258 = memref.load %arg1[%c57] : memref<72xf32, #tpu.memory_space<smem>>
    %259 = vector.extract_strided_slice %197 {offsets = [0, 1, 0], sizes = [4, 16, 16], strides = [1, 1, 1]} : vector<4x18x18xf32> to vector<4x16x16xf32>
    %260 = vector.broadcast %258 : f32 to vector<4x16x16xf32>
    %261 = arith.mulf %260, %259 : vector<4x16x16xf32>
    %262 = arith.addf %257, %261 : vector<4x16x16xf32>
    %c58 = arith.constant 58 : index
    %263 = memref.load %arg1[%c58] : memref<72xf32, #tpu.memory_space<smem>>
    %264 = vector.extract_strided_slice %197 {offsets = [0, 1, 1], sizes = [4, 16, 16], strides = [1, 1, 1]} : vector<4x18x18xf32> to vector<4x16x16xf32>
    %265 = vector.broadcast %263 : f32 to vector<4x16x16xf32>
    %266 = arith.mulf %265, %264 : vector<4x16x16xf32>
    %267 = arith.addf %262, %266 : vector<4x16x16xf32>
    %c59 = arith.constant 59 : index
    %268 = memref.load %arg1[%c59] : memref<72xf32, #tpu.memory_space<smem>>
    %269 = vector.extract_strided_slice %197 {offsets = [0, 1, 2], sizes = [4, 16, 16], strides = [1, 1, 1]} : vector<4x18x18xf32> to vector<4x16x16xf32>
    %270 = vector.broadcast %268 : f32 to vector<4x16x16xf32>
    %271 = arith.mulf %270, %269 : vector<4x16x16xf32>
    %272 = arith.addf %267, %271 : vector<4x16x16xf32>
    %c60 = arith.constant 60 : index
    %273 = memref.load %arg1[%c60] : memref<72xf32, #tpu.memory_space<smem>>
    %274 = vector.extract_strided_slice %197 {offsets = [0, 2, 0], sizes = [4, 16, 16], strides = [1, 1, 1]} : vector<4x18x18xf32> to vector<4x16x16xf32>
    %275 = vector.broadcast %273 : f32 to vector<4x16x16xf32>
    %276 = arith.mulf %275, %274 : vector<4x16x16xf32>
    %277 = arith.addf %272, %276 : vector<4x16x16xf32>
    %c61 = arith.constant 61 : index
    %278 = memref.load %arg1[%c61] : memref<72xf32, #tpu.memory_space<smem>>
    %279 = vector.extract_strided_slice %197 {offsets = [0, 2, 1], sizes = [4, 16, 16], strides = [1, 1, 1]} : vector<4x18x18xf32> to vector<4x16x16xf32>
    %280 = vector.broadcast %278 : f32 to vector<4x16x16xf32>
    %281 = arith.mulf %280, %279 : vector<4x16x16xf32>
    %282 = arith.addf %277, %281 : vector<4x16x16xf32>
    %c62 = arith.constant 62 : index
    %283 = memref.load %arg1[%c62] : memref<72xf32, #tpu.memory_space<smem>>
    %284 = vector.extract_strided_slice %197 {offsets = [0, 2, 2], sizes = [4, 16, 16], strides = [1, 1, 1]} : vector<4x18x18xf32> to vector<4x16x16xf32>
    %285 = vector.broadcast %283 : f32 to vector<4x16x16xf32>
    %286 = arith.mulf %285, %284 : vector<4x16x16xf32>
    %287 = arith.addf %282, %286 : vector<4x16x16xf32>
    %c0_36 = arith.constant 0 : index
    %c3_37 = arith.constant 3 : index
    %c0_38 = arith.constant 0 : index
    %c0_39 = arith.constant 0 : index
    %288 = vector.load %arg9[%c0_36, %c3_37, %c0_38, %c0_39] : memref<4x4x18x18xf32, #tpu.memory_space<vmem>>, vector<4x1x18x18xf32>
    %289 = vector.shape_cast %288 : vector<4x1x18x18xf32> to vector<4x18x18xf32>
    %c27 = arith.constant 27 : index
    %290 = memref.load %arg1[%c27] : memref<72xf32, #tpu.memory_space<smem>>
    %291 = vector.extract_strided_slice %289 {offsets = [0, 0, 0], sizes = [4, 16, 16], strides = [1, 1, 1]} : vector<4x18x18xf32> to vector<4x16x16xf32>
    %292 = vector.broadcast %290 : f32 to vector<4x16x16xf32>
    %293 = arith.mulf %292, %291 : vector<4x16x16xf32>
    %294 = arith.addf %242, %293 : vector<4x16x16xf32>
    %c28 = arith.constant 28 : index
    %295 = memref.load %arg1[%c28] : memref<72xf32, #tpu.memory_space<smem>>
    %296 = vector.extract_strided_slice %289 {offsets = [0, 0, 1], sizes = [4, 16, 16], strides = [1, 1, 1]} : vector<4x18x18xf32> to vector<4x16x16xf32>
    %297 = vector.broadcast %295 : f32 to vector<4x16x16xf32>
    %298 = arith.mulf %297, %296 : vector<4x16x16xf32>
    %299 = arith.addf %294, %298 : vector<4x16x16xf32>
    %c29 = arith.constant 29 : index
    %300 = memref.load %arg1[%c29] : memref<72xf32, #tpu.memory_space<smem>>
    %301 = vector.extract_strided_slice %289 {offsets = [0, 0, 2], sizes = [4, 16, 16], strides = [1, 1, 1]} : vector<4x18x18xf32> to vector<4x16x16xf32>
    %302 = vector.broadcast %300 : f32 to vector<4x16x16xf32>
    %303 = arith.mulf %302, %301 : vector<4x16x16xf32>
    %304 = arith.addf %299, %303 : vector<4x16x16xf32>
    %c30 = arith.constant 30 : index
    %305 = memref.load %arg1[%c30] : memref<72xf32, #tpu.memory_space<smem>>
    %306 = vector.extract_strided_slice %289 {offsets = [0, 1, 0], sizes = [4, 16, 16], strides = [1, 1, 1]} : vector<4x18x18xf32> to vector<4x16x16xf32>
    %307 = vector.broadcast %305 : f32 to vector<4x16x16xf32>
    %308 = arith.mulf %307, %306 : vector<4x16x16xf32>
    %309 = arith.addf %304, %308 : vector<4x16x16xf32>
    %c31 = arith.constant 31 : index
    %310 = memref.load %arg1[%c31] : memref<72xf32, #tpu.memory_space<smem>>
    %311 = vector.extract_strided_slice %289 {offsets = [0, 1, 1], sizes = [4, 16, 16], strides = [1, 1, 1]} : vector<4x18x18xf32> to vector<4x16x16xf32>
    %312 = vector.broadcast %310 : f32 to vector<4x16x16xf32>
    %313 = arith.mulf %312, %311 : vector<4x16x16xf32>
    %314 = arith.addf %309, %313 : vector<4x16x16xf32>
    %c32 = arith.constant 32 : index
    %315 = memref.load %arg1[%c32] : memref<72xf32, #tpu.memory_space<smem>>
    %316 = vector.extract_strided_slice %289 {offsets = [0, 1, 2], sizes = [4, 16, 16], strides = [1, 1, 1]} : vector<4x18x18xf32> to vector<4x16x16xf32>
    %317 = vector.broadcast %315 : f32 to vector<4x16x16xf32>
    %318 = arith.mulf %317, %316 : vector<4x16x16xf32>
    %319 = arith.addf %314, %318 : vector<4x16x16xf32>
    %c33 = arith.constant 33 : index
    %320 = memref.load %arg1[%c33] : memref<72xf32, #tpu.memory_space<smem>>
    %321 = vector.extract_strided_slice %289 {offsets = [0, 2, 0], sizes = [4, 16, 16], strides = [1, 1, 1]} : vector<4x18x18xf32> to vector<4x16x16xf32>
    %322 = vector.broadcast %320 : f32 to vector<4x16x16xf32>
    %323 = arith.mulf %322, %321 : vector<4x16x16xf32>
    %324 = arith.addf %319, %323 : vector<4x16x16xf32>
    %c34 = arith.constant 34 : index
    %325 = memref.load %arg1[%c34] : memref<72xf32, #tpu.memory_space<smem>>
    %326 = vector.extract_strided_slice %289 {offsets = [0, 2, 1], sizes = [4, 16, 16], strides = [1, 1, 1]} : vector<4x18x18xf32> to vector<4x16x16xf32>
    %327 = vector.broadcast %325 : f32 to vector<4x16x16xf32>
    %328 = arith.mulf %327, %326 : vector<4x16x16xf32>
    %329 = arith.addf %324, %328 : vector<4x16x16xf32>
    %c35 = arith.constant 35 : index
    %330 = memref.load %arg1[%c35] : memref<72xf32, #tpu.memory_space<smem>>
    %331 = vector.extract_strided_slice %289 {offsets = [0, 2, 2], sizes = [4, 16, 16], strides = [1, 1, 1]} : vector<4x18x18xf32> to vector<4x16x16xf32>
    %332 = vector.broadcast %330 : f32 to vector<4x16x16xf32>
    %333 = arith.mulf %332, %331 : vector<4x16x16xf32>
    %334 = arith.addf %329, %333 : vector<4x16x16xf32>
    %c63 = arith.constant 63 : index
    %335 = memref.load %arg1[%c63] : memref<72xf32, #tpu.memory_space<smem>>
    %336 = vector.extract_strided_slice %289 {offsets = [0, 0, 0], sizes = [4, 16, 16], strides = [1, 1, 1]} : vector<4x18x18xf32> to vector<4x16x16xf32>
    %337 = vector.broadcast %335 : f32 to vector<4x16x16xf32>
    %338 = arith.mulf %337, %336 : vector<4x16x16xf32>
    %339 = arith.addf %287, %338 : vector<4x16x16xf32>
    %c64 = arith.constant 64 : index
    %340 = memref.load %arg1[%c64] : memref<72xf32, #tpu.memory_space<smem>>
    %341 = vector.extract_strided_slice %289 {offsets = [0, 0, 1], sizes = [4, 16, 16], strides = [1, 1, 1]} : vector<4x18x18xf32> to vector<4x16x16xf32>
    %342 = vector.broadcast %340 : f32 to vector<4x16x16xf32>
    %343 = arith.mulf %342, %341 : vector<4x16x16xf32>
    %344 = arith.addf %339, %343 : vector<4x16x16xf32>
    %c65 = arith.constant 65 : index
    %345 = memref.load %arg1[%c65] : memref<72xf32, #tpu.memory_space<smem>>
    %346 = vector.extract_strided_slice %289 {offsets = [0, 0, 2], sizes = [4, 16, 16], strides = [1, 1, 1]} : vector<4x18x18xf32> to vector<4x16x16xf32>
    %347 = vector.broadcast %345 : f32 to vector<4x16x16xf32>
    %348 = arith.mulf %347, %346 : vector<4x16x16xf32>
    %349 = arith.addf %344, %348 : vector<4x16x16xf32>
    %c66 = arith.constant 66 : index
    %350 = memref.load %arg1[%c66] : memref<72xf32, #tpu.memory_space<smem>>
    %351 = vector.extract_strided_slice %289 {offsets = [0, 1, 0], sizes = [4, 16, 16], strides = [1, 1, 1]} : vector<4x18x18xf32> to vector<4x16x16xf32>
    %352 = vector.broadcast %350 : f32 to vector<4x16x16xf32>
    %353 = arith.mulf %352, %351 : vector<4x16x16xf32>
    %354 = arith.addf %349, %353 : vector<4x16x16xf32>
    %c67 = arith.constant 67 : index
    %355 = memref.load %arg1[%c67] : memref<72xf32, #tpu.memory_space<smem>>
    %356 = vector.extract_strided_slice %289 {offsets = [0, 1, 1], sizes = [4, 16, 16], strides = [1, 1, 1]} : vector<4x18x18xf32> to vector<4x16x16xf32>
    %357 = vector.broadcast %355 : f32 to vector<4x16x16xf32>
    %358 = arith.mulf %357, %356 : vector<4x16x16xf32>
    %359 = arith.addf %354, %358 : vector<4x16x16xf32>
    %c68 = arith.constant 68 : index
    %360 = memref.load %arg1[%c68] : memref<72xf32, #tpu.memory_space<smem>>
    %361 = vector.extract_strided_slice %289 {offsets = [0, 1, 2], sizes = [4, 16, 16], strides = [1, 1, 1]} : vector<4x18x18xf32> to vector<4x16x16xf32>
    %362 = vector.broadcast %360 : f32 to vector<4x16x16xf32>
    %363 = arith.mulf %362, %361 : vector<4x16x16xf32>
    %364 = arith.addf %359, %363 : vector<4x16x16xf32>
    %c69 = arith.constant 69 : index
    %365 = memref.load %arg1[%c69] : memref<72xf32, #tpu.memory_space<smem>>
    %366 = vector.extract_strided_slice %289 {offsets = [0, 2, 0], sizes = [4, 16, 16], strides = [1, 1, 1]} : vector<4x18x18xf32> to vector<4x16x16xf32>
    %367 = vector.broadcast %365 : f32 to vector<4x16x16xf32>
    %368 = arith.mulf %367, %366 : vector<4x16x16xf32>
    %369 = arith.addf %364, %368 : vector<4x16x16xf32>
    %c70 = arith.constant 70 : index
    %370 = memref.load %arg1[%c70] : memref<72xf32, #tpu.memory_space<smem>>
    %371 = vector.extract_strided_slice %289 {offsets = [0, 2, 1], sizes = [4, 16, 16], strides = [1, 1, 1]} : vector<4x18x18xf32> to vector<4x16x16xf32>
    %372 = vector.broadcast %370 : f32 to vector<4x16x16xf32>
    %373 = arith.mulf %372, %371 : vector<4x16x16xf32>
    %374 = arith.addf %369, %373 : vector<4x16x16xf32>
    %c71 = arith.constant 71 : index
    %375 = memref.load %arg1[%c71] : memref<72xf32, #tpu.memory_space<smem>>
    %376 = vector.extract_strided_slice %289 {offsets = [0, 2, 2], sizes = [4, 16, 16], strides = [1, 1, 1]} : vector<4x18x18xf32> to vector<4x16x16xf32>
    %377 = vector.broadcast %375 : f32 to vector<4x16x16xf32>
    %378 = arith.mulf %377, %376 : vector<4x16x16xf32>
    %379 = arith.addf %374, %378 : vector<4x16x16xf32>
    %cst_40 = arith.constant 0.000000e+00 : f32
    %380 = vector.broadcast %cst_40 : f32 to vector<4x16x16xf32>
    %381 = arith.maximumf %334, %380 : vector<4x16x16xf32>
    %382 = vector.extract_strided_slice %381 {offsets = [0, 0, 0], sizes = [4, 1, 16], strides = [1, 1, 1]} : vector<4x16x16xf32> to vector<4x1x16xf32>
    %383 = vector.shape_cast %382 : vector<4x1x16xf32> to vector<4x16xf32>
    %c0_41 = arith.constant 0 : index
    %c0_42 = arith.constant 0 : index
    %384 = vector.load %arg10[%c0_41, %c0_42] : memref<4x512xf32, #tpu.memory_space<vmem>>, vector<4x16xf32>
    tpu.vector_store %arg10[%c0_41, %c0_42], %383 {strides = array<i32>} : memref<4x512xf32, #tpu.memory_space<vmem>>, vector<4x16xf32>,
    %385 = vector.extract_strided_slice %381 {offsets = [0, 1, 0], sizes = [4, 1, 16], strides = [1, 1, 1]} : vector<4x16x16xf32> to vector<4x1x16xf32>
    %386 = vector.shape_cast %385 : vector<4x1x16xf32> to vector<4x16xf32>
    %c0_43 = arith.constant 0 : index
    %c16_44 = arith.constant 16 : index
    %387 = vector.load %arg10[%c0_43, %c16_44] : memref<4x512xf32, #tpu.memory_space<vmem>>, vector<4x16xf32>
    tpu.vector_store %arg10[%c0_43, %c16_44], %386 {strides = array<i32>} : memref<4x512xf32, #tpu.memory_space<vmem>>, vector<4x16xf32>,
    %388 = vector.extract_strided_slice %381 {offsets = [0, 2, 0], sizes = [4, 1, 16], strides = [1, 1, 1]} : vector<4x16x16xf32> to vector<4x1x16xf32>
    %389 = vector.shape_cast %388 : vector<4x1x16xf32> to vector<4x16xf32>
    %c0_45 = arith.constant 0 : index
    %c32_46 = arith.constant 32 : index
    %390 = vector.load %arg10[%c0_45, %c32_46] : memref<4x512xf32, #tpu.memory_space<vmem>>, vector<4x16xf32>
    tpu.vector_store %arg10[%c0_45, %c32_46], %389 {strides = array<i32>} : memref<4x512xf32, #tpu.memory_space<vmem>>, vector<4x16xf32>,
    %391 = vector.extract_strided_slice %381 {offsets = [0, 3, 0], sizes = [4, 1, 16], strides = [1, 1, 1]} : vector<4x16x16xf32> to vector<4x1x16xf32>
    %392 = vector.shape_cast %391 : vector<4x1x16xf32> to vector<4x16xf32>
    %c0_47 = arith.constant 0 : index
    %c48_48 = arith.constant 48 : index
    %393 = vector.load %arg10[%c0_47, %c48_48] : memref<4x512xf32, #tpu.memory_space<vmem>>, vector<4x16xf32>
    tpu.vector_store %arg10[%c0_47, %c48_48], %392 {strides = array<i32>} : memref<4x512xf32, #tpu.memory_space<vmem>>, vector<4x16xf32>,
    %394 = vector.extract_strided_slice %381 {offsets = [0, 4, 0], sizes = [4, 1, 16], strides = [1, 1, 1]} : vector<4x16x16xf32> to vector<4x1x16xf32>
    %395 = vector.shape_cast %394 : vector<4x1x16xf32> to vector<4x16xf32>
    %c0_49 = arith.constant 0 : index
    %c64_50 = arith.constant 64 : index
    %396 = vector.load %arg10[%c0_49, %c64_50] : memref<4x512xf32, #tpu.memory_space<vmem>>, vector<4x16xf32>
    tpu.vector_store %arg10[%c0_49, %c64_50], %395 {strides = array<i32>} : memref<4x512xf32, #tpu.memory_space<vmem>>, vector<4x16xf32>,
    %397 = vector.extract_strided_slice %381 {offsets = [0, 5, 0], sizes = [4, 1, 16], strides = [1, 1, 1]} : vector<4x16x16xf32> to vector<4x1x16xf32>
    %398 = vector.shape_cast %397 : vector<4x1x16xf32> to vector<4x16xf32>
    %c0_51 = arith.constant 0 : index
    %c80 = arith.constant 80 : index
    %399 = vector.load %arg10[%c0_51, %c80] : memref<4x512xf32, #tpu.memory_space<vmem>>, vector<4x16xf32>
    tpu.vector_store %arg10[%c0_51, %c80], %398 {strides = array<i32>} : memref<4x512xf32, #tpu.memory_space<vmem>>, vector<4x16xf32>,
    %400 = vector.extract_strided_slice %381 {offsets = [0, 6, 0], sizes = [4, 1, 16], strides = [1, 1, 1]} : vector<4x16x16xf32> to vector<4x1x16xf32>
    %401 = vector.shape_cast %400 : vector<4x1x16xf32> to vector<4x16xf32>
    %c0_52 = arith.constant 0 : index
    %c96 = arith.constant 96 : index
    %402 = vector.load %arg10[%c0_52, %c96] : memref<4x512xf32, #tpu.memory_space<vmem>>, vector<4x16xf32>
    tpu.vector_store %arg10[%c0_52, %c96], %401 {strides = array<i32>} : memref<4x512xf32, #tpu.memory_space<vmem>>, vector<4x16xf32>,
    %403 = vector.extract_strided_slice %381 {offsets = [0, 7, 0], sizes = [4, 1, 16], strides = [1, 1, 1]} : vector<4x16x16xf32> to vector<4x1x16xf32>
    %404 = vector.shape_cast %403 : vector<4x1x16xf32> to vector<4x16xf32>
    %c0_53 = arith.constant 0 : index
    %c112 = arith.constant 112 : index
    %405 = vector.load %arg10[%c0_53, %c112] : memref<4x512xf32, #tpu.memory_space<vmem>>, vector<4x16xf32>
    tpu.vector_store %arg10[%c0_53, %c112], %404 {strides = array<i32>} : memref<4x512xf32, #tpu.memory_space<vmem>>, vector<4x16xf32>,
    %406 = vector.extract_strided_slice %381 {offsets = [0, 8, 0], sizes = [4, 1, 16], strides = [1, 1, 1]} : vector<4x16x16xf32> to vector<4x1x16xf32>
    %407 = vector.shape_cast %406 : vector<4x1x16xf32> to vector<4x16xf32>
    %c0_54 = arith.constant 0 : index
    %c128 = arith.constant 128 : index
    %408 = vector.load %arg10[%c0_54, %c128] : memref<4x512xf32, #tpu.memory_space<vmem>>, vector<4x16xf32>
    tpu.vector_store %arg10[%c0_54, %c128], %407 {strides = array<i32>} : memref<4x512xf32, #tpu.memory_space<vmem>>, vector<4x16xf32>,
    %409 = vector.extract_strided_slice %381 {offsets = [0, 9, 0], sizes = [4, 1, 16], strides = [1, 1, 1]} : vector<4x16x16xf32> to vector<4x1x16xf32>
    %410 = vector.shape_cast %409 : vector<4x1x16xf32> to vector<4x16xf32>
    %c0_55 = arith.constant 0 : index
    %c144 = arith.constant 144 : index
    %411 = vector.load %arg10[%c0_55, %c144] : memref<4x512xf32, #tpu.memory_space<vmem>>, vector<4x16xf32>
    tpu.vector_store %arg10[%c0_55, %c144], %410 {strides = array<i32>} : memref<4x512xf32, #tpu.memory_space<vmem>>, vector<4x16xf32>,
    %412 = vector.extract_strided_slice %381 {offsets = [0, 10, 0], sizes = [4, 1, 16], strides = [1, 1, 1]} : vector<4x16x16xf32> to vector<4x1x16xf32>
    %413 = vector.shape_cast %412 : vector<4x1x16xf32> to vector<4x16xf32>
    %c0_56 = arith.constant 0 : index
    %c160 = arith.constant 160 : index
    %414 = vector.load %arg10[%c0_56, %c160] : memref<4x512xf32, #tpu.memory_space<vmem>>, vector<4x16xf32>
    tpu.vector_store %arg10[%c0_56, %c160], %413 {strides = array<i32>} : memref<4x512xf32, #tpu.memory_space<vmem>>, vector<4x16xf32>,
    %415 = vector.extract_strided_slice %381 {offsets = [0, 11, 0], sizes = [4, 1, 16], strides = [1, 1, 1]} : vector<4x16x16xf32> to vector<4x1x16xf32>
    %416 = vector.shape_cast %415 : vector<4x1x16xf32> to vector<4x16xf32>
    %c0_57 = arith.constant 0 : index
    %c176 = arith.constant 176 : index
    %417 = vector.load %arg10[%c0_57, %c176] : memref<4x512xf32, #tpu.memory_space<vmem>>, vector<4x16xf32>
    tpu.vector_store %arg10[%c0_57, %c176], %416 {strides = array<i32>} : memref<4x512xf32, #tpu.memory_space<vmem>>, vector<4x16xf32>,
    %418 = vector.extract_strided_slice %381 {offsets = [0, 12, 0], sizes = [4, 1, 16], strides = [1, 1, 1]} : vector<4x16x16xf32> to vector<4x1x16xf32>
    %419 = vector.shape_cast %418 : vector<4x1x16xf32> to vector<4x16xf32>
    %c0_58 = arith.constant 0 : index
    %c192 = arith.constant 192 : index
    %420 = vector.load %arg10[%c0_58, %c192] : memref<4x512xf32, #tpu.memory_space<vmem>>, vector<4x16xf32>
    tpu.vector_store %arg10[%c0_58, %c192], %419 {strides = array<i32>} : memref<4x512xf32, #tpu.memory_space<vmem>>, vector<4x16xf32>,
    %421 = vector.extract_strided_slice %381 {offsets = [0, 13, 0], sizes = [4, 1, 16], strides = [1, 1, 1]} : vector<4x16x16xf32> to vector<4x1x16xf32>
    %422 = vector.shape_cast %421 : vector<4x1x16xf32> to vector<4x16xf32>
    %c0_59 = arith.constant 0 : index
    %c208 = arith.constant 208 : index
    %423 = vector.load %arg10[%c0_59, %c208] : memref<4x512xf32, #tpu.memory_space<vmem>>, vector<4x16xf32>
    tpu.vector_store %arg10[%c0_59, %c208], %422 {strides = array<i32>} : memref<4x512xf32, #tpu.memory_space<vmem>>, vector<4x16xf32>,
    %424 = vector.extract_strided_slice %381 {offsets = [0, 14, 0], sizes = [4, 1, 16], strides = [1, 1, 1]} : vector<4x16x16xf32> to vector<4x1x16xf32>
    %425 = vector.shape_cast %424 : vector<4x1x16xf32> to vector<4x16xf32>
    %c0_60 = arith.constant 0 : index
    %c224 = arith.constant 224 : index
    %426 = vector.load %arg10[%c0_60, %c224] : memref<4x512xf32, #tpu.memory_space<vmem>>, vector<4x16xf32>
    tpu.vector_store %arg10[%c0_60, %c224], %425 {strides = array<i32>} : memref<4x512xf32, #tpu.memory_space<vmem>>, vector<4x16xf32>,
    %427 = vector.extract_strided_slice %381 {offsets = [0, 15, 0], sizes = [4, 1, 16], strides = [1, 1, 1]} : vector<4x16x16xf32> to vector<4x1x16xf32>
    %428 = vector.shape_cast %427 : vector<4x1x16xf32> to vector<4x16xf32>
    %c0_61 = arith.constant 0 : index
    %c240 = arith.constant 240 : index
    %429 = vector.load %arg10[%c0_61, %c240] : memref<4x512xf32, #tpu.memory_space<vmem>>, vector<4x16xf32>
    tpu.vector_store %arg10[%c0_61, %c240], %428 {strides = array<i32>} : memref<4x512xf32, #tpu.memory_space<vmem>>, vector<4x16xf32>,
    %cst_62 = arith.constant 0.000000e+00 : f32
    %430 = vector.broadcast %cst_62 : f32 to vector<4x16x16xf32>
    %431 = arith.maximumf %379, %430 : vector<4x16x16xf32>
    %432 = vector.extract_strided_slice %431 {offsets = [0, 0, 0], sizes = [4, 1, 16], strides = [1, 1, 1]} : vector<4x16x16xf32> to vector<4x1x16xf32>
    %433 = vector.shape_cast %432 : vector<4x1x16xf32> to vector<4x16xf32>
    %c0_63 = arith.constant 0 : index
    %c256 = arith.constant 256 : index
    %434 = vector.load %arg10[%c0_63, %c256] : memref<4x512xf32, #tpu.memory_space<vmem>>, vector<4x16xf32>
    tpu.vector_store %arg10[%c0_63, %c256], %433 {strides = array<i32>} : memref<4x512xf32, #tpu.memory_space<vmem>>, vector<4x16xf32>,
    %435 = vector.extract_strided_slice %431 {offsets = [0, 1, 0], sizes = [4, 1, 16], strides = [1, 1, 1]} : vector<4x16x16xf32> to vector<4x1x16xf32>
    %436 = vector.shape_cast %435 : vector<4x1x16xf32> to vector<4x16xf32>
    %c0_64 = arith.constant 0 : index
    %c272 = arith.constant 272 : index
    %437 = vector.load %arg10[%c0_64, %c272] : memref<4x512xf32, #tpu.memory_space<vmem>>, vector<4x16xf32>
    tpu.vector_store %arg10[%c0_64, %c272], %436 {strides = array<i32>} : memref<4x512xf32, #tpu.memory_space<vmem>>, vector<4x16xf32>,
    %438 = vector.extract_strided_slice %431 {offsets = [0, 2, 0], sizes = [4, 1, 16], strides = [1, 1, 1]} : vector<4x16x16xf32> to vector<4x1x16xf32>
    %439 = vector.shape_cast %438 : vector<4x1x16xf32> to vector<4x16xf32>
    %c0_65 = arith.constant 0 : index
    %c288 = arith.constant 288 : index
    %440 = vector.load %arg10[%c0_65, %c288] : memref<4x512xf32, #tpu.memory_space<vmem>>, vector<4x16xf32>
    tpu.vector_store %arg10[%c0_65, %c288], %439 {strides = array<i32>} : memref<4x512xf32, #tpu.memory_space<vmem>>, vector<4x16xf32>,
    %441 = vector.extract_strided_slice %431 {offsets = [0, 3, 0], sizes = [4, 1, 16], strides = [1, 1, 1]} : vector<4x16x16xf32> to vector<4x1x16xf32>
    %442 = vector.shape_cast %441 : vector<4x1x16xf32> to vector<4x16xf32>
    %c0_66 = arith.constant 0 : index
    %c304 = arith.constant 304 : index
    %443 = vector.load %arg10[%c0_66, %c304] : memref<4x512xf32, #tpu.memory_space<vmem>>, vector<4x16xf32>
    tpu.vector_store %arg10[%c0_66, %c304], %442 {strides = array<i32>} : memref<4x512xf32, #tpu.memory_space<vmem>>, vector<4x16xf32>,
    %444 = vector.extract_strided_slice %431 {offsets = [0, 4, 0], sizes = [4, 1, 16], strides = [1, 1, 1]} : vector<4x16x16xf32> to vector<4x1x16xf32>
    %445 = vector.shape_cast %444 : vector<4x1x16xf32> to vector<4x16xf32>
    %c0_67 = arith.constant 0 : index
    %c320 = arith.constant 320 : index
    %446 = vector.load %arg10[%c0_67, %c320] : memref<4x512xf32, #tpu.memory_space<vmem>>, vector<4x16xf32>
    tpu.vector_store %arg10[%c0_67, %c320], %445 {strides = array<i32>} : memref<4x512xf32, #tpu.memory_space<vmem>>, vector<4x16xf32>,
    %447 = vector.extract_strided_slice %431 {offsets = [0, 5, 0], sizes = [4, 1, 16], strides = [1, 1, 1]} : vector<4x16x16xf32> to vector<4x1x16xf32>
    %448 = vector.shape_cast %447 : vector<4x1x16xf32> to vector<4x16xf32>
    %c0_68 = arith.constant 0 : index
    %c336 = arith.constant 336 : index
    %449 = vector.load %arg10[%c0_68, %c336] : memref<4x512xf32, #tpu.memory_space<vmem>>, vector<4x16xf32>
    tpu.vector_store %arg10[%c0_68, %c336], %448 {strides = array<i32>} : memref<4x512xf32, #tpu.memory_space<vmem>>, vector<4x16xf32>,
    %450 = vector.extract_strided_slice %431 {offsets = [0, 6, 0], sizes = [4, 1, 16], strides = [1, 1, 1]} : vector<4x16x16xf32> to vector<4x1x16xf32>
    %451 = vector.shape_cast %450 : vector<4x1x16xf32> to vector<4x16xf32>
    %c0_69 = arith.constant 0 : index
    %c352 = arith.constant 352 : index
    %452 = vector.load %arg10[%c0_69, %c352] : memref<4x512xf32, #tpu.memory_space<vmem>>, vector<4x16xf32>
    tpu.vector_store %arg10[%c0_69, %c352], %451 {strides = array<i32>} : memref<4x512xf32, #tpu.memory_space<vmem>>, vector<4x16xf32>,
    %453 = vector.extract_strided_slice %431 {offsets = [0, 7, 0], sizes = [4, 1, 16], strides = [1, 1, 1]} : vector<4x16x16xf32> to vector<4x1x16xf32>
    %454 = vector.shape_cast %453 : vector<4x1x16xf32> to vector<4x16xf32>
    %c0_70 = arith.constant 0 : index
    %c368 = arith.constant 368 : index
    %455 = vector.load %arg10[%c0_70, %c368] : memref<4x512xf32, #tpu.memory_space<vmem>>, vector<4x16xf32>
    tpu.vector_store %arg10[%c0_70, %c368], %454 {strides = array<i32>} : memref<4x512xf32, #tpu.memory_space<vmem>>, vector<4x16xf32>,
    %456 = vector.extract_strided_slice %431 {offsets = [0, 8, 0], sizes = [4, 1, 16], strides = [1, 1, 1]} : vector<4x16x16xf32> to vector<4x1x16xf32>
    %457 = vector.shape_cast %456 : vector<4x1x16xf32> to vector<4x16xf32>
    %c0_71 = arith.constant 0 : index
    %c384 = arith.constant 384 : index
    %458 = vector.load %arg10[%c0_71, %c384] : memref<4x512xf32, #tpu.memory_space<vmem>>, vector<4x16xf32>
    tpu.vector_store %arg10[%c0_71, %c384], %457 {strides = array<i32>} : memref<4x512xf32, #tpu.memory_space<vmem>>, vector<4x16xf32>,
    %459 = vector.extract_strided_slice %431 {offsets = [0, 9, 0], sizes = [4, 1, 16], strides = [1, 1, 1]} : vector<4x16x16xf32> to vector<4x1x16xf32>
    %460 = vector.shape_cast %459 : vector<4x1x16xf32> to vector<4x16xf32>
    %c0_72 = arith.constant 0 : index
    %c400 = arith.constant 400 : index
    %461 = vector.load %arg10[%c0_72, %c400] : memref<4x512xf32, #tpu.memory_space<vmem>>, vector<4x16xf32>
    tpu.vector_store %arg10[%c0_72, %c400], %460 {strides = array<i32>} : memref<4x512xf32, #tpu.memory_space<vmem>>, vector<4x16xf32>,
    %462 = vector.extract_strided_slice %431 {offsets = [0, 10, 0], sizes = [4, 1, 16], strides = [1, 1, 1]} : vector<4x16x16xf32> to vector<4x1x16xf32>
    %463 = vector.shape_cast %462 : vector<4x1x16xf32> to vector<4x16xf32>
    %c0_73 = arith.constant 0 : index
    %c416 = arith.constant 416 : index
    %464 = vector.load %arg10[%c0_73, %c416] : memref<4x512xf32, #tpu.memory_space<vmem>>, vector<4x16xf32>
    tpu.vector_store %arg10[%c0_73, %c416], %463 {strides = array<i32>} : memref<4x512xf32, #tpu.memory_space<vmem>>, vector<4x16xf32>,
    %465 = vector.extract_strided_slice %431 {offsets = [0, 11, 0], sizes = [4, 1, 16], strides = [1, 1, 1]} : vector<4x16x16xf32> to vector<4x1x16xf32>
    %466 = vector.shape_cast %465 : vector<4x1x16xf32> to vector<4x16xf32>
    %c0_74 = arith.constant 0 : index
    %c432 = arith.constant 432 : index
    %467 = vector.load %arg10[%c0_74, %c432] : memref<4x512xf32, #tpu.memory_space<vmem>>, vector<4x16xf32>
    tpu.vector_store %arg10[%c0_74, %c432], %466 {strides = array<i32>} : memref<4x512xf32, #tpu.memory_space<vmem>>, vector<4x16xf32>,
    %468 = vector.extract_strided_slice %431 {offsets = [0, 12, 0], sizes = [4, 1, 16], strides = [1, 1, 1]} : vector<4x16x16xf32> to vector<4x1x16xf32>
    %469 = vector.shape_cast %468 : vector<4x1x16xf32> to vector<4x16xf32>
    %c0_75 = arith.constant 0 : index
    %c448 = arith.constant 448 : index
    %470 = vector.load %arg10[%c0_75, %c448] : memref<4x512xf32, #tpu.memory_space<vmem>>, vector<4x16xf32>
    tpu.vector_store %arg10[%c0_75, %c448], %469 {strides = array<i32>} : memref<4x512xf32, #tpu.memory_space<vmem>>, vector<4x16xf32>,
    %471 = vector.extract_strided_slice %431 {offsets = [0, 13, 0], sizes = [4, 1, 16], strides = [1, 1, 1]} : vector<4x16x16xf32> to vector<4x1x16xf32>
    %472 = vector.shape_cast %471 : vector<4x1x16xf32> to vector<4x16xf32>
    %c0_76 = arith.constant 0 : index
    %c464 = arith.constant 464 : index
    %473 = vector.load %arg10[%c0_76, %c464] : memref<4x512xf32, #tpu.memory_space<vmem>>, vector<4x16xf32>
    tpu.vector_store %arg10[%c0_76, %c464], %472 {strides = array<i32>} : memref<4x512xf32, #tpu.memory_space<vmem>>, vector<4x16xf32>,
    %474 = vector.extract_strided_slice %431 {offsets = [0, 14, 0], sizes = [4, 1, 16], strides = [1, 1, 1]} : vector<4x16x16xf32> to vector<4x1x16xf32>
    %475 = vector.shape_cast %474 : vector<4x1x16xf32> to vector<4x16xf32>
    %c0_77 = arith.constant 0 : index
    %c480 = arith.constant 480 : index
    %476 = vector.load %arg10[%c0_77, %c480] : memref<4x512xf32, #tpu.memory_space<vmem>>, vector<4x16xf32>
    tpu.vector_store %arg10[%c0_77, %c480], %475 {strides = array<i32>} : memref<4x512xf32, #tpu.memory_space<vmem>>, vector<4x16xf32>,
    %477 = vector.extract_strided_slice %431 {offsets = [0, 15, 0], sizes = [4, 1, 16], strides = [1, 1, 1]} : vector<4x16x16xf32> to vector<4x1x16xf32>
    %478 = vector.shape_cast %477 : vector<4x1x16xf32> to vector<4x16xf32>
    %c0_78 = arith.constant 0 : index
    %c496 = arith.constant 496 : index
    %479 = vector.load %arg10[%c0_78, %c496] : memref<4x512xf32, #tpu.memory_space<vmem>>, vector<4x16xf32>
    tpu.vector_store %arg10[%c0_78, %c496], %478 {strides = array<i32>} : memref<4x512xf32, #tpu.memory_space<vmem>>, vector<4x16xf32>,
    %c0_79 = arith.constant 0 : index
    %c0_80 = arith.constant 0 : index
    %480 = vector.load %arg10[%c0_79, %c0_80] : memref<4x512xf32, #tpu.memory_space<vmem>>, vector<4x512xf32>
    %c0_81 = arith.constant 0 : index
    %c0_82 = arith.constant 0 : index
    %481 = vector.load %arg3[%c0_81, %c0_82] : memref<512x512xf32, #tpu.memory_space<vmem>>, vector<512x512xf32>
    %cst_83 = arith.constant dense<0.000000e+00> : vector<4x512xf32>
    %482 = tpu.matmul %480, %481, %cst_83 {dimension_numbers = #tpu.dot_dimension_numbers<[1], [0], [0], [1], [0, 0, 1, 1], [], []>} : vector<4x512xf32>, vector<512x512xf32>, vector<4x512xf32> -> vector<4x512xf32>
    %c0_84 = arith.constant 0 : index
    %c0_85 = arith.constant 0 : index
    %483 = vector.load %arg4[%c0_84, %c0_85] : memref<1x512xf32, #tpu.memory_space<vmem>>, vector<1x512xf32>
    %484 = vector.broadcast %483 : vector<1x512xf32> to vector<4x512xf32>
    %485 = arith.addf %482, %484 : vector<4x512xf32>
    %cst_86 = arith.constant 0.000000e+00 : f32
    %486 = vector.broadcast %cst_86 : f32 to vector<4x512xf32>
    %487 = arith.maximumf %485, %486 : vector<4x512xf32>
    %c0_87 = arith.constant 0 : index
    %c0_88 = arith.constant 0 : index
    %488 = vector.load %arg5[%c0_87, %c0_88] : memref<512x8xf32, #tpu.memory_space<vmem>>, vector<512x8xf32>
    %cst_89 = arith.constant dense<0.000000e+00> : vector<4x8xf32>
    %489 = tpu.matmul %487, %488, %cst_89 {dimension_numbers = #tpu.dot_dimension_numbers<[1], [0], [0], [1], [0, 0, 1, 1], [], []>} : vector<4x512xf32>, vector<512x8xf32>, vector<4x8xf32> -> vector<4x8xf32>
    %c0_90 = arith.constant 0 : index
    %c0_91 = arith.constant 0 : index
    %490 = vector.load %arg6[%c0_90, %c0_91] : memref<1x8xf32, #tpu.memory_space<vmem>>, vector<1x8xf32>
    %491 = vector.broadcast %490 : vector<1x8xf32> to vector<4x8xf32>
    %492 = arith.addf %489, %491 : vector<4x8xf32>
    %493 = vector.extract_strided_slice %492 {offsets = [0, 0], sizes = [2, 8], strides = [1, 1]} : vector<4x8xf32> to vector<2x8xf32>
    %c0_92 = arith.constant 0 : index
    %c0_93 = arith.constant 0 : index
    %494 = vector.load %arg7[%c0_92, %c0_93] : memref<2x8xf32, #tpu.memory_space<vmem>>, vector<2x8xf32>
    tpu.vector_store %arg7[%c0_92, %c0_93], %493 {strides = array<i32>} : memref<2x8xf32, #tpu.memory_space<vmem>>, vector<2x8xf32>,
    %495 = vector.extract_strided_slice %492 {offsets = [2, 0], sizes = [2, 8], strides = [1, 1]} : vector<4x8xf32> to vector<2x8xf32>
    %c0_94 = arith.constant 0 : index
    %c0_95 = arith.constant 0 : index
    %496 = vector.load %arg8[%c0_94, %c0_95] : memref<2x8xf32, #tpu.memory_space<vmem>>, vector<2x8xf32>
    tpu.vector_store %arg8[%c0_94, %c0_95], %495 {strides = array<i32>} : memref<2x8xf32, #tpu.memory_space<vmem>>, vector<2x8xf32>,
    return
  }
}

</mosaic_0001>

<llo_original>
// kernel: n_concat_cnns_forward.1
$region0: #{n_concat_cnns_forward.1}
  #allocation0 [shape = 'u32[]', space=smem, size = 0x4, offset = 0x4, fixed_abs, tag = 'smem constant byte address 0x4 - core index']
  #allocation1 [shape = 'u32[144,128]{1,0:T(1,128)}', space=vmem, size = 0x12000, scoped, tag = 'internal scratch']
  #allocation2 [shape = 'f32[4,4,18,18]{3,2,1,0:T(8,128)}', space=vmem, size = 0x30000, scoped, tag = 'scratch operand']
  #allocation3 [shape = 'f32[4,512]{1,0:T(4,128)}', space=vmem, size = 0x2000, scoped, tag = 'scratch operand']
  %s0 = inlined_call_operand.vmem [shape: f32[2,2,4,16,16], index: 0, kind: input, shape index: {}]
  %s1 = inlined_call_operand.vmem [shape: f32[72], index: 1, kind: input, shape index: {}]
  %s2 = inlined_call_operand.vmem [shape: f32[2], index: 2, kind: input, shape index: {}]
  %s3 = inlined_call_operand.hbm [shape: f32[512,512], index: 3, kind: input, shape index: {}]
  %s4 = inlined_call_operand.vmem [shape: f32[1,512], index: 4, kind: input, shape index: {}]
  %s5 = inlined_call_operand.vmem [shape: f32[512,8], index: 5, kind: input, shape index: {}]
  %s6 = inlined_call_operand.vmem [shape: f32[1,8], index: 6, kind: input, shape index: {}]
  %s7 = inlined_call_operand.hbm [shape: f32[2,8], index: 7, kind: output, shape index: {0}]
  %s8 = inlined_call_operand.hbm [shape: f32[2,8], index: 8, kind: output, shape index: {1}]
  %9 = xla_tuple %s7, %s8
  %s10 = sld [smem:[#allocation0]]
  $region58: #{n_concat_cnns_forward.1} parent=0
    _
  %s12 = ssub.s32 1, %s10
  %s13 = scalar_select 0, %s12, %s10
  $region1: #{n_concat_cnns_forward.1} parent=0
    #allocation4 [shape = 'u8[512]{0}', space=smem, size = 0x200, scoped, tag = 'input window, operand 1, single buffered']
    #allocation5 [shape = 's32[1]{0}', space=sflag, size = 0x4, scoped, tag = 'scoped memory for n_concat_cnns_forward.1']
    #allocation6 [shape = 's32[1]{0}', space=sflag, size = 0x4, scoped, tag = 'scoped memory for n_concat_cnns_forward.1']
    #allocation7 [shape = 's32[1]{0}', space=sflag, size = 0x4, scoped, tag = 'scoped memory for n_concat_cnns_forward.1']
    #allocation8 [shape = 'u8[512]{0}', space=smem, size = 0x200, scoped, tag = 'input window, operand 2, single buffered']
    #allocation9 [shape = 's32[1]{0}', space=sflag, size = 0x4, scoped, tag = 'scoped memory for n_concat_cnns_forward.1']
    #allocation10 [shape = 'u8[1048576]{0}', space=vmem, size = 0x100000, scoped, tag = 'input window, operand 3, single buffered']
    #allocation11 [shape = 'u8[1024]{0}', space=vmem, size = 0x400, scoped, tag = 'output window, operand 0, single buffered']
    #allocation12 [shape = 'u8[1024]{0}', space=vmem, size = 0x400, scoped, tag = 'output window, operand 1, single buffered']
    #allocation13 [shape = 's32[1]{0}', space=sflag, size = 0x4, scoped, tag = 'scoped memory for n_concat_cnns_forward.1']
    %14 = vsyncpa [#allocation7], 0
    %15 = vsyncpa [#allocation9], 0
    %16 = vsyncpa [#allocation5], 0
    %17 = vsyncpa [#allocation6], 0
    %18 = vsyncpa [#allocation13], 0
    // Predicated region
    $region2: #{n_concat_cnns_forward.1} parent=1 // pred_check
      _
    $region3: #{n_concat_cnns_forward.1} parent=1 // pred_check_branch
      %20 = sbr.rel (0) target = $region5
    $region4: #{n_concat_cnns_forward.1} parent=1 // pred_region
      _
    $region5: #{n_concat_cnns_forward.1} parent=1 // pred_fallthru
      _
    // Predicated region
    $region6: #{n_concat_cnns_forward.1} parent=1 // pred_check
      _
    $region7: #{n_concat_cnns_forward.1} parent=1 // pred_check_branch
      %22 = sbr.rel (0) target = $region9
    $region8: #{n_concat_cnns_forward.1} parent=1 // pred_region
      %s24 = ssub.s32 16, 16
      %25 = vsyncadd [#allocation7], %s24
      %s27 = sshll.u32 %s1, 4
      %s28 = int_to_ptr.vmem [resolvable:$true] %s27
      %30 = dma.vmem_to_smem %s28, 16, [#allocation4], [#allocation7]
    $region9: #{n_concat_cnns_forward.1} parent=1 // pred_fallthru
      _
    // Predicated region
    $region10: #{n_concat_cnns_forward.1} parent=1 // pred_check
      _
    $region11: #{n_concat_cnns_forward.1} parent=1 // pred_check_branch
      %32 = sbr.rel (0) target = $region13
    $region12: #{n_concat_cnns_forward.1} parent=1 // pred_region
      %s34 = ssub.s32 16, 16
      %35 = vsyncadd [#allocation9], %s34
      %s37 = sshll.u32 %s2, 4
      %s38 = int_to_ptr.vmem [resolvable:$true] %s37
      %40 = dma.vmem_to_smem %s38, 16, [#allocation8], [#allocation9]
    $region13: #{n_concat_cnns_forward.1} parent=1 // pred_fallthru
      _
    // Predicated region
    $region14: #{n_concat_cnns_forward.1} parent=1 // pred_check
      _
    $region15: #{n_concat_cnns_forward.1} parent=1 // pred_check_branch
      %42 = sbr.rel (0) target = $region17
    $region16: #{n_concat_cnns_forward.1} parent=1 // pred_region
      %s44 = ssub.s32 32768, 32768
      %45 = vsyncadd [#allocation5], %s44
      %s46 = sshll.u32 [#allocation10], 4
      %s47 = int_to_ptr.vmem [resolvable:$true] %s46
      %52 = dma.hbm_to_vmem [thread:$0]  %s3, 32768, %s47, [#allocation5], 512, 512, 32
    $region17: #{n_concat_cnns_forward.1} parent=1 // pred_fallthru
      _
    // Predicated region
    $region18: #{n_concat_cnns_forward.1} parent=1 // pred_check
      _
    $region19: #{n_concat_cnns_forward.1} parent=1 // pred_check_branch
      %54 = sbr.rel (0) target = $region21
    $region20: #{n_concat_cnns_forward.1} parent=1 // pred_region
      _
    $region21: #{n_concat_cnns_forward.1} parent=1 // pred_fallthru
      _
    // Predicated region
    $region22: #{n_concat_cnns_forward.1} parent=1 // pred_check
      _
    $region23: #{n_concat_cnns_forward.1} parent=1 // pred_check_branch
      %56 = sbr.rel (0) target = $region25
    $region24: #{n_concat_cnns_forward.1} parent=1 // pred_region
      _
    $region25: #{n_concat_cnns_forward.1} parent=1 // pred_fallthru
      _
    // Predicated region
    $region26: #{n_concat_cnns_forward.1} parent=1 // pred_check
      _
    $region27: #{n_concat_cnns_forward.1} parent=1 // pred_check_branch
      %58 = sbr.rel (0) target = $region29
    $region28: #{n_concat_cnns_forward.1} parent=1 // pred_region
      _
    $region29: #{n_concat_cnns_forward.1} parent=1 // pred_fallthru
      _
    // Predicated region
    $region30: #{n_concat_cnns_forward.1} parent=1 // pred_check
      _
    $region31: #{n_concat_cnns_forward.1} parent=1 // pred_check_branch
      %60 = sbr.rel (0) target = $region33
    $region32: #{n_concat_cnns_forward.1} parent=1 // pred_region
      %61 = dma.done [#allocation7], 16
    $region33: #{n_concat_cnns_forward.1} parent=1 // pred_fallthru
      _
    // Predicated region
    $region34: #{n_concat_cnns_forward.1} parent=1 // pred_check
      _
    $region35: #{n_concat_cnns_forward.1} parent=1 // pred_check_branch
      %63 = sbr.rel (0) target = $region37
    $region36: #{n_concat_cnns_forward.1} parent=1 // pred_region
      %64 = dma.done [#allocation9], 16
    $region37: #{n_concat_cnns_forward.1} parent=1 // pred_fallthru
      _
    // Predicated region
    $region38: #{n_concat_cnns_forward.1} parent=1 // pred_check
      _
    $region39: #{n_concat_cnns_forward.1} parent=1 // pred_check_branch
      %66 = sbr.rel (0) target = $region41
    $region40: #{n_concat_cnns_forward.1} parent=1 // pred_region
      %67 = dma.done [#allocation5], 32768
    $region41: #{n_concat_cnns_forward.1} parent=1 // pred_fallthru
      _
    %68 = sfence
    %vm69 = vcmask 146432
    %70 = vst.msk [vmem:[#allocation2] sm:$0xff] %vm69, 0.0
    %71 = vst.msk [vmem:[#allocation2 + $0x8] sm:$0xff] %vm69, 0.0
    %vm72 = vcmask 140288
    %73 = vst.msk [vmem:[#allocation2 + $0x10] sm:$0x3] %vm72, 0.0
    %74 = vst.msk [vmem:[#allocation2 + $0x18] sm:$0xff] %vm69, 0.0
    %75 = vst.msk [vmem:[#allocation2 + $0x20] sm:$0xff] %vm69, 0.0
    %76 = vst.msk [vmem:[#allocation2 + $0x28] sm:$0x3] %vm72, 0.0
    %77 = vst.msk [vmem:[#allocation2 + $0x30] sm:$0xff] %vm69, 0.0
    %78 = vst.msk [vmem:[#allocation2 + $0x38] sm:$0xff] %vm69, 0.0
    %79 = vst.msk [vmem:[#allocation2 + $0x40] sm:$0x3] %vm72, 0.0
    %80 = vst.msk [vmem:[#allocation2 + $0x48] sm:$0xff] %vm69, 0.0
    %81 = vst.msk [vmem:[#allocation2 + $0x50] sm:$0xff] %vm69, 0.0
    %82 = vst.msk [vmem:[#allocation2 + $0x58] sm:$0x3] %vm72, 0.0
    %83 = vst.msk [vmem:[#allocation2 + $0x60] sm:$0xff] %vm69, 0.0
    %84 = vst.msk [vmem:[#allocation2 + $0x68] sm:$0xff] %vm69, 0.0
    %85 = vst.msk [vmem:[#allocation2 + $0x70] sm:$0x3] %vm72, 0.0
    %86 = vst.msk [vmem:[#allocation2 + $0x78] sm:$0xff] %vm69, 0.0
    %87 = vst.msk [vmem:[#allocation2 + $0x80] sm:$0xff] %vm69, 0.0
    %88 = vst.msk [vmem:[#allocation2 + $0x88] sm:$0x3] %vm72, 0.0
    %89 = vst.msk [vmem:[#allocation2 + $0x90] sm:$0xff] %vm69, 0.0
    %90 = vst.msk [vmem:[#allocation2 + $0x98] sm:$0xff] %vm69, 0.0
    %91 = vst.msk [vmem:[#allocation2 + $0xa0] sm:$0x3] %vm72, 0.0
    %92 = vst.msk [vmem:[#allocation2 + $0xa8] sm:$0xff] %vm69, 0.0
    %93 = vst.msk [vmem:[#allocation2 + $0xb0] sm:$0xff] %vm69, 0.0
    %94 = vst.msk [vmem:[#allocation2 + $0xb8] sm:$0x3] %vm72, 0.0
    %95 = vst.msk [vmem:[#allocation2 + $0xc0] sm:$0xff] %vm69, 0.0
    %96 = vst.msk [vmem:[#allocation2 + $0xc8] sm:$0xff] %vm69, 0.0
    %97 = vst.msk [vmem:[#allocation2 + $0xd0] sm:$0x3] %vm72, 0.0
    %98 = vst.msk [vmem:[#allocation2 + $0xd8] sm:$0xff] %vm69, 0.0
    %99 = vst.msk [vmem:[#allocation2 + $0xe0] sm:$0xff] %vm69, 0.0
    %100 = vst.msk [vmem:[#allocation2 + $0xe8] sm:$0x3] %vm72, 0.0
    %101 = vst.msk [vmem:[#allocation2 + $0xf0] sm:$0xff] %vm69, 0.0
    %102 = vst.msk [vmem:[#allocation2 + $0xf8] sm:$0xff] %vm69, 0.0
    %103 = vst.msk [vmem:[#allocation2 + $0x100] sm:$0x3] %vm72, 0.0
    %104 = vst.msk [vmem:[#allocation2 + $0x108] sm:$0xff] %vm69, 0.0
    %105 = vst.msk [vmem:[#allocation2 + $0x110] sm:$0xff] %vm69, 0.0
    %106 = vst.msk [vmem:[#allocation2 + $0x118] sm:$0x3] %vm72, 0.0
    %107 = vst.msk [vmem:[#allocation2 + $0x120] sm:$0xff] %vm69, 0.0
    %108 = vst.msk [vmem:[#allocation2 + $0x128] sm:$0xff] %vm69, 0.0
    %109 = vst.msk [vmem:[#allocation2 + $0x130] sm:$0x3] %vm72, 0.0
    %110 = vst.msk [vmem:[#allocation2 + $0x138] sm:$0xff] %vm69, 0.0
    %111 = vst.msk [vmem:[#allocation2 + $0x140] sm:$0xff] %vm69, 0.0
    %112 = vst.msk [vmem:[#allocation2 + $0x148] sm:$0x3] %vm72, 0.0
    %113 = vst.msk [vmem:[#allocation2 + $0x150] sm:$0xff] %vm69, 0.0
    %114 = vst.msk [vmem:[#allocation2 + $0x158] sm:$0xff] %vm69, 0.0
    %115 = vst.msk [vmem:[#allocation2 + $0x160] sm:$0x3] %vm72, 0.0
    %116 = vst.msk [vmem:[#allocation2 + $0x168] sm:$0xff] %vm69, 0.0
    %117 = vst.msk [vmem:[#allocation2 + $0x170] sm:$0xff] %vm69, 0.0
    %118 = vst.msk [vmem:[#allocation2 + $0x178] sm:$0x3] %vm72, 0.0
    %v119 = vld [vmem:[%s0] sm:$0xff]
    %v120 = vld [vmem:[%s0 + $0x8] sm:$0xff]
    %v121 = vld [vmem:[%s0 + $0x10] sm:$0xff]
    %v122 = vld [vmem:[%s0 + $0x18] sm:$0xff]
    %v123 = vld [vmem:[%s0 + $0x20] sm:$0xff]
    %v124 = vld [vmem:[%s0 + $0x28] sm:$0xff]
    %v125 = vld [vmem:[%s0 + $0x30] sm:$0xff]
    %v126 = vld [vmem:[%s0 + $0x38] sm:$0xff]
    %v127 = vld [vmem:[%s0 + $0x80] sm:$0xff]
    %v128 = vld [vmem:[%s0 + $0x88] sm:$0xff]
    %v129 = vld [vmem:[%s0 + $0x90] sm:$0xff]
    %v130 = vld [vmem:[%s0 + $0x98] sm:$0xff]
    %v131 = vld [vmem:[%s0 + $0xa0] sm:$0xff]
    %v132 = vld [vmem:[%s0 + $0xa8] sm:$0xff]
    %v133 = vld [vmem:[%s0 + $0xb0] sm:$0xff]
    %v134 = vld [vmem:[%s0 + $0xb8] sm:$0xff]
    %151 = vrot.lane.b32.xlu0 %v119, 1
    %v152 = vpop.permute.xlu0 %151
    %153 = vrot.lane.b32.xlu0 %v120, 1
    %v154 = vpop.permute.xlu0 %153
    %155 = vrot.lane.b32.xlu0 %v121, 1
    %v156 = vpop.permute.xlu0 %155
    %157 = vrot.lane.b32.xlu0 %v122, 1
    %v158 = vpop.permute.xlu0 %157
    %159 = vrot.lane.b32.xlu0 %v123, 1
    %v160 = vpop.permute.xlu0 %159
    %161 = vrot.lane.b32.xlu0 %v124, 1
    %v162 = vpop.permute.xlu0 %161
    %163 = vrot.lane.b32.xlu0 %v125, 1
    %v164 = vpop.permute.xlu0 %163
    %165 = vrot.lane.b32.xlu0 %v126, 1
    %v166 = vpop.permute.xlu0 %165
    %167 = vrot.lane.b32.xlu0 %v127, 1
    %v168 = vpop.permute.xlu0 %167
    %169 = vrot.lane.b32.xlu0 %v128, 1
    %v170 = vpop.permute.xlu0 %169
    %171 = vrot.lane.b32.xlu0 %v129, 1
    %v172 = vpop.permute.xlu0 %171
    %173 = vrot.lane.b32.xlu0 %v130, 1
    %v174 = vpop.permute.xlu0 %173
    %175 = vrot.lane.b32.xlu0 %v131, 1
    %v176 = vpop.permute.xlu0 %175
    %177 = vrot.lane.b32.xlu0 %v132, 1
    %v178 = vpop.permute.xlu0 %177
    %179 = vrot.lane.b32.xlu0 %v133, 1
    %v180 = vpop.permute.xlu0 %179
    %181 = vrot.lane.b32.xlu0 %v134, 1
    %v182 = vpop.permute.xlu0 %181
    %vm199 = vcmask 138248
    %200 = vst.msk [vmem:[#allocation2 + $0x1] sm:$0xff] %vm199, %v152
    %201 = vst.msk [vmem:[#allocation2 + $0x9] sm:$0xff] %vm199, %v154
    %202 = vst.msk [vmem:[#allocation2 + $0x19] sm:$0xff] %vm199, %v156
    %203 = vst.msk [vmem:[#allocation2 + $0x21] sm:$0xff] %vm199, %v158
    %204 = vst.msk [vmem:[#allocation2 + $0x31] sm:$0xff] %vm199, %v160
    %205 = vst.msk [vmem:[#allocation2 + $0x39] sm:$0xff] %vm199, %v162
    %206 = vst.msk [vmem:[#allocation2 + $0x49] sm:$0xff] %vm199, %v164
    %207 = vst.msk [vmem:[#allocation2 + $0x51] sm:$0xff] %vm199, %v166
    %208 = vst.msk [vmem:[#allocation2 + $0x61] sm:$0xff] %vm199, %v168
    %209 = vst.msk [vmem:[#allocation2 + $0x69] sm:$0xff] %vm199, %v170
    %210 = vst.msk [vmem:[#allocation2 + $0x79] sm:$0xff] %vm199, %v172
    %211 = vst.msk [vmem:[#allocation2 + $0x81] sm:$0xff] %vm199, %v174
    %212 = vst.msk [vmem:[#allocation2 + $0x91] sm:$0xff] %vm199, %v176
    %213 = vst.msk [vmem:[#allocation2 + $0x99] sm:$0xff] %vm199, %v178
    %214 = vst.msk [vmem:[#allocation2 + $0xa9] sm:$0xff] %vm199, %v180
    %215 = vst.msk [vmem:[#allocation2 + $0xb1] sm:$0xff] %vm199, %v182
    %s216 = scalar_lea.vmem %s0, 64
    %v217 = vld [vmem:[%s216] sm:$0xff]
    %v218 = vld [vmem:[%s216 + $0x8] sm:$0xff]
    %v219 = vld [vmem:[%s216 + $0x10] sm:$0xff]
    %v220 = vld [vmem:[%s216 + $0x18] sm:$0xff]
    %v221 = vld [vmem:[%s216 + $0x20] sm:$0xff]
    %v222 = vld [vmem:[%s216 + $0x28] sm:$0xff]
    %v223 = vld [vmem:[%s216 + $0x30] sm:$0xff]
    %v224 = vld [vmem:[%s216 + $0x38] sm:$0xff]
    %v225 = vld [vmem:[%s216 + $0x80] sm:$0xff]
    %v226 = vld [vmem:[%s216 + $0x88] sm:$0xff]
    %v227 = vld [vmem:[%s216 + $0x90] sm:$0xff]
    %v228 = vld [vmem:[%s216 + $0x98] sm:$0xff]
    %v229 = vld [vmem:[%s216 + $0xa0] sm:$0xff]
    %v230 = vld [vmem:[%s216 + $0xa8] sm:$0xff]
    %v231 = vld [vmem:[%s216 + $0xb0] sm:$0xff]
    %v232 = vld [vmem:[%s216 + $0xb8] sm:$0xff]
    %249 = vrot.lane.b32.xlu0 %v217, 1
    %v250 = vpop.permute.xlu0 %249
    %251 = vrot.lane.b32.xlu0 %v218, 1
    %v252 = vpop.permute.xlu0 %251
    %253 = vrot.lane.b32.xlu0 %v219, 1
    %v254 = vpop.permute.xlu0 %253
    %255 = vrot.lane.b32.xlu0 %v220, 1
    %v256 = vpop.permute.xlu0 %255
    %257 = vrot.lane.b32.xlu0 %v221, 1
    %v258 = vpop.permute.xlu0 %257
    %259 = vrot.lane.b32.xlu0 %v222, 1
    %v260 = vpop.permute.xlu0 %259
    %261 = vrot.lane.b32.xlu0 %v223, 1
    %v262 = vpop.permute.xlu0 %261
    %263 = vrot.lane.b32.xlu0 %v224, 1
    %v264 = vpop.permute.xlu0 %263
    %265 = vrot.lane.b32.xlu0 %v225, 1
    %v266 = vpop.permute.xlu0 %265
    %267 = vrot.lane.b32.xlu0 %v226, 1
    %v268 = vpop.permute.xlu0 %267
    %269 = vrot.lane.b32.xlu0 %v227, 1
    %v270 = vpop.permute.xlu0 %269
    %271 = vrot.lane.b32.xlu0 %v228, 1
    %v272 = vpop.permute.xlu0 %271
    %273 = vrot.lane.b32.xlu0 %v229, 1
    %v274 = vpop.permute.xlu0 %273
    %275 = vrot.lane.b32.xlu0 %v230, 1
    %v276 = vpop.permute.xlu0 %275
    %277 = vrot.lane.b32.xlu0 %v231, 1
    %v278 = vpop.permute.xlu0 %277
    %279 = vrot.lane.b32.xlu0 %v232, 1
    %v280 = vpop.permute.xlu0 %279
    %s297 = scalar_lea.vmem [#allocation2], 192
    %298 = vst.msk [vmem:[%s297 + $0x1] sm:$0xff] %vm199, %v250
    %299 = vst.msk [vmem:[%s297 + $0x9] sm:$0xff] %vm199, %v252
    %300 = vst.msk [vmem:[%s297 + $0x19] sm:$0xff] %vm199, %v254
    %301 = vst.msk [vmem:[%s297 + $0x21] sm:$0xff] %vm199, %v256
    %302 = vst.msk [vmem:[%s297 + $0x31] sm:$0xff] %vm199, %v258
    %303 = vst.msk [vmem:[%s297 + $0x39] sm:$0xff] %vm199, %v260
    %304 = vst.msk [vmem:[%s297 + $0x49] sm:$0xff] %vm199, %v262
    %305 = vst.msk [vmem:[%s297 + $0x51] sm:$0xff] %vm199, %v264
    %306 = vst.msk [vmem:[%s297 + $0x61] sm:$0xff] %vm199, %v266
    %307 = vst.msk [vmem:[%s297 + $0x69] sm:$0xff] %vm199, %v268
    %308 = vst.msk [vmem:[%s297 + $0x79] sm:$0xff] %vm199, %v270
    %309 = vst.msk [vmem:[%s297 + $0x81] sm:$0xff] %vm199, %v272
    %310 = vst.msk [vmem:[%s297 + $0x91] sm:$0xff] %vm199, %v274
    %311 = vst.msk [vmem:[%s297 + $0x99] sm:$0xff] %vm199, %v276
    %312 = vst.msk [vmem:[%s297 + $0xa9] sm:$0xff] %vm199, %v278
    %313 = vst.msk [vmem:[%s297 + $0xb1] sm:$0xff] %vm199, %v280
    %s314 = sld [smem:[#allocation8]]
    %v315 = vstv %s314
    %s316 = sld [smem:[#allocation8 + $0x1]]
    %v317 = vstv %s316
    %v318 = vld [vmem:[#allocation2] sm:$0xff]
    %v319 = vld [vmem:[#allocation2 + $0x8] sm:$0xff]
    %v320 = vld [vmem:[#allocation2 + $0x10] sm:$0x3]
    %v321 = vld [vmem:[#allocation2 + $0x60] sm:$0xff]
    %v322 = vld [vmem:[#allocation2 + $0x68] sm:$0xff]
    %v323 = vld [vmem:[#allocation2 + $0x70] sm:$0x3]
    %v324 = vld [vmem:[#allocation2 + $0xc0] sm:$0xff]
    %v325 = vld [vmem:[#allocation2 + $0xc8] sm:$0xff]
    %v326 = vld [vmem:[#allocation2 + $0xd0] sm:$0x3]
    %v327 = vld [vmem:[#allocation2 + $0x120] sm:$0xff]
    %v328 = vld [vmem:[#allocation2 + $0x128] sm:$0xff]
    %v329 = vld [vmem:[#allocation2 + $0x130] sm:$0x3]
    %s330 = sld [smem:[#allocation4]]
    %v331 = vstv %s330
    %v332 = vmul.f32 %v331, %v318
    %v333 = vmul.f32 %v331, %v319
    %v334 = vmul.f32 %v331, %v321
    %v335 = vmul.f32 %v331, %v322
    %v336 = vmul.f32 %v331, %v324
    %v337 = vmul.f32 %v331, %v325
    %v338 = vmul.f32 %v331, %v327
    %v339 = vmul.f32 %v331, %v328
    %v340 = vadd.f32 %v315, %v332
    %v341 = vadd.f32 %v315, %v333
    %v342 = vadd.f32 %v315, %v334
    %v343 = vadd.f32 %v315, %v335
    %v344 = vadd.f32 %v315, %v336
    %v345 = vadd.f32 %v315, %v337
    %v346 = vadd.f32 %v315, %v338
    %v347 = vadd.f32 %v315, %v339
    %s348 = sld [smem:[#allocation4 + $0x1]]
    %v349 = vstv %s348
    %v350 = vmul.f32 %v349, %v318
    %v351 = vmul.f32 %v349, %v319
    %v352 = vmul.f32 %v349, %v321
    %v353 = vmul.f32 %v349, %v322
    %v354 = vmul.f32 %v349, %v324
    %v355 = vmul.f32 %v349, %v325
    %v356 = vmul.f32 %v349, %v327
    %v357 = vmul.f32 %v349, %v328
    %366 = vrot.lane.b32.xlu0 %v350, 127
    %v367 = vpop.permute.xlu0 %366
    %368 = vrot.lane.b32.xlu0 %v351, 127
    %v369 = vpop.permute.xlu0 %368
    %370 = vrot.lane.b32.xlu0 %v352, 127
    %v371 = vpop.permute.xlu0 %370
    %372 = vrot.lane.b32.xlu0 %v353, 127
    %v373 = vpop.permute.xlu0 %372
    %374 = vrot.lane.b32.xlu0 %v354, 127
    %v375 = vpop.permute.xlu0 %374
    %376 = vrot.lane.b32.xlu0 %v355, 127
    %v377 = vpop.permute.xlu0 %376
    %378 = vrot.lane.b32.xlu0 %v356, 127
    %v379 = vpop.permute.xlu0 %378
    %380 = vrot.lane.b32.xlu0 %v357, 127
    %v381 = vpop.permute.xlu0 %380
    %v390 = vadd.f32 %v340, %v367
    %v391 = vadd.f32 %v341, %v369
    %v392 = vadd.f32 %v342, %v371
    %v393 = vadd.f32 %v343, %v373
    %v394 = vadd.f32 %v344, %v375
    %v395 = vadd.f32 %v345, %v377
    %v396 = vadd.f32 %v346, %v379
    %v397 = vadd.f32 %v347, %v381
    %s398 = sld [smem:[#allocation4 + $0x2]]
    %v399 = vstv %s398
    %v400 = vmul.f32 %v399, %v318
    %v401 = vmul.f32 %v399, %v319
    %v402 = vmul.f32 %v399, %v321
    %v403 = vmul.f32 %v399, %v322
    %v404 = vmul.f32 %v399, %v324
    %v405 = vmul.f32 %v399, %v325
    %v406 = vmul.f32 %v399, %v327
    %v407 = vmul.f32 %v399, %v328
    %416 = vrot.lane.b32.xlu0 %v400, 126
    %v417 = vpop.permute.xlu0 %416
    %418 = vrot.lane.b32.xlu0 %v401, 126
    %v419 = vpop.permute.xlu0 %418
    %420 = vrot.lane.b32.xlu0 %v402, 126
    %v421 = vpop.permute.xlu0 %420
    %422 = vrot.lane.b32.xlu0 %v403, 126
    %v423 = vpop.permute.xlu0 %422
    %424 = vrot.lane.b32.xlu0 %v404, 126
    %v425 = vpop.permute.xlu0 %424
    %426 = vrot.lane.b32.xlu0 %v405, 126
    %v427 = vpop.permute.xlu0 %426
    %428 = vrot.lane.b32.xlu0 %v406, 126
    %v429 = vpop.permute.xlu0 %428
    %430 = vrot.lane.b32.xlu0 %v407, 126
    %v431 = vpop.permute.xlu0 %430
    %v440 = vadd.f32 %v390, %v417
    %v441 = vadd.f32 %v391, %v419
    %v442 = vadd.f32 %v392, %v421
    %v443 = vadd.f32 %v393, %v423
    %v444 = vadd.f32 %v394, %v425
    %v445 = vadd.f32 %v395, %v427
    %v446 = vadd.f32 %v396, %v429
    %v447 = vadd.f32 %v397, %v431
    %s448 = sld [smem:[#allocation4 + $0x3]]
    %v449 = vstv %s448
    %v450 = vmul.f32 %v449, %v318
    %v451 = vmul.f32 %v449, %v319
    %v452 = vmul.f32 %v449, %v320
    %v453 = vmul.f32 %v449, %v321
    %v454 = vmul.f32 %v449, %v322
    %v455 = vmul.f32 %v449, %v323
    %v456 = vmul.f32 %v449, %v324
    %v457 = vmul.f32 %v449, %v325
    %v458 = vmul.f32 %v449, %v326
    %v459 = vmul.f32 %v449, %v327
    %v460 = vmul.f32 %v449, %v328
    %v461 = vmul.f32 %v449, %v329
    %vm474 = vcmask 1046528
    %v475 = vrot.slane %v450, 1
    %v476 = vrot.slane %v451, 1
    %v477 = vsel %vm474, %v475, %v476
    %v478 = vrot.slane %v452, 1
    %v479 = vsel %vm474, %v476, %v478
    %v480 = vrot.slane %v453, 1
    %v481 = vrot.slane %v454, 1
    %v482 = vsel %vm474, %v480, %v481
    %v483 = vrot.slane %v455, 1
    %v484 = vsel %vm474, %v481, %v483
    %v485 = vrot.slane %v456, 1
    %v486 = vrot.slane %v457, 1
    %v487 = vsel %vm474, %v485, %v486
    %v488 = vrot.slane %v458, 1
    %v489 = vsel %vm474, %v486, %v488
    %v490 = vrot.slane %v459, 1
    %v491 = vrot.slane %v460, 1
    %v492 = vsel %vm474, %v490, %v491
    %v493 = vrot.slane %v461, 1
    %v494 = vsel %vm474, %v491, %v493
    %v503 = vadd.f32 %v440, %v477
    %v504 = vadd.f32 %v441, %v479
    %v505 = vadd.f32 %v442, %v482
    %v506 = vadd.f32 %v443, %v484
    %v507 = vadd.f32 %v444, %v487
    %v508 = vadd.f32 %v445, %v489
    %v509 = vadd.f32 %v446, %v492
    %v510 = vadd.f32 %v447, %v494
    %s511 = sld [smem:[#allocation4 + $0x4]]
    %v512 = vstv %s511
    %v513 = vmul.f32 %v512, %v318
    %v514 = vmul.f32 %v512, %v319
    %v515 = vmul.f32 %v512, %v320
    %v516 = vmul.f32 %v512, %v321
    %v517 = vmul.f32 %v512, %v322
    %v518 = vmul.f32 %v512, %v323
    %v519 = vmul.f32 %v512, %v324
    %v520 = vmul.f32 %v512, %v325
    %v521 = vmul.f32 %v512, %v326
    %v522 = vmul.f32 %v512, %v327
    %v523 = vmul.f32 %v512, %v328
    %v524 = vmul.f32 %v512, %v329
    %v537 = vrot.slane %v513, 1
    %v538 = vrot.slane %v514, 1
    %v539 = vsel %vm474, %v537, %v538
    %v540 = vrot.slane %v515, 1
    %v541 = vsel %vm474, %v538, %v540
    %v542 = vrot.slane %v516, 1
    %v543 = vrot.slane %v517, 1
    %v544 = vsel %vm474, %v542, %v543
    %v545 = vrot.slane %v518, 1
    %v546 = vsel %vm474, %v543, %v545
    %v547 = vrot.slane %v519, 1
    %v548 = vrot.slane %v520, 1
    %v549 = vsel %vm474, %v547, %v548
    %v550 = vrot.slane %v521, 1
    %v551 = vsel %vm474, %v548, %v550
    %v552 = vrot.slane %v522, 1
    %v553 = vrot.slane %v523, 1
    %v554 = vsel %vm474, %v552, %v553
    %v555 = vrot.slane %v524, 1
    %v556 = vsel %vm474, %v553, %v555
    %557 = vrot.lane.b32.xlu0 %v539, 127
    %v558 = vpop.permute.xlu0 %557
    %559 = vrot.lane.b32.xlu0 %v541, 127
    %v560 = vpop.permute.xlu0 %559
    %561 = vrot.lane.b32.xlu0 %v544, 127
    %v562 = vpop.permute.xlu0 %561
    %563 = vrot.lane.b32.xlu0 %v546, 127
    %v564 = vpop.permute.xlu0 %563
    %565 = vrot.lane.b32.xlu0 %v549, 127
    %v566 = vpop.permute.xlu0 %565
    %567 = vrot.lane.b32.xlu0 %v551, 127
    %v568 = vpop.permute.xlu0 %567
    %569 = vrot.lane.b32.xlu0 %v554, 127
    %v570 = vpop.permute.xlu0 %569
    %571 = vrot.lane.b32.xlu0 %v556, 127
    %v572 = vpop.permute.xlu0 %571
    %v581 = vadd.f32 %v503, %v558
    %v582 = vadd.f32 %v504, %v560
    %v583 = vadd.f32 %v505, %v562
    %v584 = vadd.f32 %v506, %v564
    %v585 = vadd.f32 %v507, %v566
    %v586 = vadd.f32 %v508, %v568
    %v587 = vadd.f32 %v509, %v570
    %v588 = vadd.f32 %v510, %v572
    %s589 = sld [smem:[#allocation4 + $0x5]]
    %v590 = vstv %s589
    %v591 = vmul.f32 %v590, %v318
    %v592 = vmul.f32 %v590, %v319
    %v593 = vmul.f32 %v590, %v320
    %v594 = vmul.f32 %v590, %v321
    %v595 = vmul.f32 %v590, %v322
    %v596 = vmul.f32 %v590, %v323
    %v597 = vmul.f32 %v590, %v324
    %v598 = vmul.f32 %v590, %v325
    %v599 = vmul.f32 %v590, %v326
    %v600 = vmul.f32 %v590, %v327
    %v601 = vmul.f32 %v590, %v328
    %v602 = vmul.f32 %v590, %v329
    %v615 = vrot.slane %v591, 1
    %v616 = vrot.slane %v592, 1
    %v617 = vsel %vm474, %v615, %v616
    %v618 = vrot.slane %v593, 1
    %v619 = vsel %vm474, %v616, %v618
    %v620 = vrot.slane %v594, 1
    %v621 = vrot.slane %v595, 1
    %v622 = vsel %vm474, %v620, %v621
    %v623 = vrot.slane %v596, 1
    %v624 = vsel %vm474, %v621, %v623
    %v625 = vrot.slane %v597, 1
    %v626 = vrot.slane %v598, 1
    %v627 = vsel %vm474, %v625, %v626
    %v628 = vrot.slane %v599, 1
    %v629 = vsel %vm474, %v626, %v628
    %v630 = vrot.slane %v600, 1
    %v631 = vrot.slane %v601, 1
    %v632 = vsel %vm474, %v630, %v631
    %v633 = vrot.slane %v602, 1
    %v634 = vsel %vm474, %v631, %v633
    %635 = vrot.lane.b32.xlu0 %v617, 126
    %v636 = vpop.permute.xlu0 %635
    %637 = vrot.lane.b32.xlu0 %v619, 126
    %v638 = vpop.permute.xlu0 %637
    %639 = vrot.lane.b32.xlu0 %v622, 126
    %v640 = vpop.permute.xlu0 %639
    %641 = vrot.lane.b32.xlu0 %v624, 126
    %v642 = vpop.permute.xlu0 %641
    %643 = vrot.lane.b32.xlu0 %v627, 126
    %v644 = vpop.permute.xlu0 %643
    %645 = vrot.lane.b32.xlu0 %v629, 126
    %v646 = vpop.permute.xlu0 %645
    %647 = vrot.lane.b32.xlu0 %v632, 126
    %v648 = vpop.permute.xlu0 %647
    %649 = vrot.lane.b32.xlu0 %v634, 126
    %v650 = vpop.permute.xlu0 %649
    %v659 = vadd.f32 %v581, %v636
    %v660 = vadd.f32 %v582, %v638
    %v661 = vadd.f32 %v583, %v640
    %v662 = vadd.f32 %v584, %v642
    %v663 = vadd.f32 %v585, %v644
    %v664 = vadd.f32 %v586, %v646
    %v665 = vadd.f32 %v587, %v648
    %v666 = vadd.f32 %v588, %v650
    %s667 = sld [smem:[#allocation4 + $0x6]]
    %v668 = vstv %s667
    %v669 = vmul.f32 %v668, %v318
    %v670 = vmul.f32 %v668, %v319
    %v671 = vmul.f32 %v668, %v320
    %v672 = vmul.f32 %v668, %v321
    %v673 = vmul.f32 %v668, %v322
    %v674 = vmul.f32 %v668, %v323
    %v675 = vmul.f32 %v668, %v324
    %v676 = vmul.f32 %v668, %v325
    %v677 = vmul.f32 %v668, %v326
    %v678 = vmul.f32 %v668, %v327
    %v679 = vmul.f32 %v668, %v328
    %v680 = vmul.f32 %v668, %v329
    %vm693 = vcmask 1045504
    %v694 = vrot.slane %v669, 2
    %v695 = vrot.slane %v670, 2
    %v696 = vsel %vm693, %v694, %v695
    %v697 = vrot.slane %v671, 2
    %v698 = vsel %vm693, %v695, %v697
    %v699 = vrot.slane %v672, 2
    %v700 = vrot.slane %v673, 2
    %v701 = vsel %vm693, %v699, %v700
    %v702 = vrot.slane %v674, 2
    %v703 = vsel %vm693, %v700, %v702
    %v704 = vrot.slane %v675, 2
    %v705 = vrot.slane %v676, 2
    %v706 = vsel %vm693, %v704, %v705
    %v707 = vrot.slane %v677, 2
    %v708 = vsel %vm693, %v705, %v707
    %v709 = vrot.slane %v678, 2
    %v710 = vrot.slane %v679, 2
    %v711 = vsel %vm693, %v709, %v710
    %v712 = vrot.slane %v680, 2
    %v713 = vsel %vm693, %v710, %v712
    %v722 = vadd.f32 %v659, %v696
    %v723 = vadd.f32 %v660, %v698
    %v724 = vadd.f32 %v661, %v701
    %v725 = vadd.f32 %v662, %v703
    %v726 = vadd.f32 %v663, %v706
    %v727 = vadd.f32 %v664, %v708
    %v728 = vadd.f32 %v665, %v711
    %v729 = vadd.f32 %v666, %v713
    %s730 = sld [smem:[#allocation4 + $0x7]]
    %v731 = vstv %s730
    %v732 = vmul.f32 %v731, %v318
    %v733 = vmul.f32 %v731, %v319
    %v734 = vmul.f32 %v731, %v320
    %v735 = vmul.f32 %v731, %v321
    %v736 = vmul.f32 %v731, %v322
    %v737 = vmul.f32 %v731, %v323
    %v738 = vmul.f32 %v731, %v324
    %v739 = vmul.f32 %v731, %v325
    %v740 = vmul.f32 %v731, %v326
    %v741 = vmul.f32 %v731, %v327
    %v742 = vmul.f32 %v731, %v328
    %v743 = vmul.f32 %v731, %v329
    %v756 = vrot.slane %v732, 2
    %v757 = vrot.slane %v733, 2
    %v758 = vsel %vm693, %v756, %v757
    %v759 = vrot.slane %v734, 2
    %v760 = vsel %vm693, %v757, %v759
    %v761 = vrot.slane %v735, 2
    %v762 = vrot.slane %v736, 2
    %v763 = vsel %vm693, %v761, %v762
    %v764 = vrot.slane %v737, 2
    %v765 = vsel %vm693, %v762, %v764
    %v766 = vrot.slane %v738, 2
    %v767 = vrot.slane %v739, 2
    %v768 = vsel %vm693, %v766, %v767
    %v769 = vrot.slane %v740, 2
    %v770 = vsel %vm693, %v767, %v769
    %v771 = vrot.slane %v741, 2
    %v772 = vrot.slane %v742, 2
    %v773 = vsel %vm693, %v771, %v772
    %v774 = vrot.slane %v743, 2
    %v775 = vsel %vm693, %v772, %v774
    %776 = vrot.lane.b32.xlu0 %v758, 127
    %v777 = vpop.permute.xlu0 %776
    %778 = vrot.lane.b32.xlu0 %v760, 127
    %v779 = vpop.permute.xlu0 %778
    %780 = vrot.lane.b32.xlu0 %v763, 127
    %v781 = vpop.permute.xlu0 %780
    %782 = vrot.lane.b32.xlu0 %v765, 127
    %v783 = vpop.permute.xlu0 %782
    %784 = vrot.lane.b32.xlu0 %v768, 127
    %v785 = vpop.permute.xlu0 %784
    %786 = vrot.lane.b32.xlu0 %v770, 127
    %v787 = vpop.permute.xlu0 %786
    %788 = vrot.lane.b32.xlu0 %v773, 127
    %v789 = vpop.permute.xlu0 %788
    %790 = vrot.lane.b32.xlu0 %v775, 127
    %v791 = vpop.permute.xlu0 %790
    %v800 = vadd.f32 %v722, %v777
    %v801 = vadd.f32 %v723, %v779
    %v802 = vadd.f32 %v724, %v781
    %v803 = vadd.f32 %v725, %v783
    %v804 = vadd.f32 %v726, %v785
    %v805 = vadd.f32 %v727, %v787
    %v806 = vadd.f32 %v728, %v789
    %v807 = vadd.f32 %v729, %v791
    %s808 = sld [smem:[#allocation4 + $0x8]]
    %v809 = vstv %s808
    %v810 = vmul.f32 %v809, %v318
    %v811 = vmul.f32 %v809, %v319
    %v812 = vmul.f32 %v809, %v320
    %v813 = vmul.f32 %v809, %v321
    %v814 = vmul.f32 %v809, %v322
    %v815 = vmul.f32 %v809, %v323
    %v816 = vmul.f32 %v809, %v324
    %v817 = vmul.f32 %v809, %v325
    %v818 = vmul.f32 %v809, %v326
    %v819 = vmul.f32 %v809, %v327
    %v820 = vmul.f32 %v809, %v328
    %v821 = vmul.f32 %v809, %v329
    %v834 = vrot.slane %v810, 2
    %v835 = vrot.slane %v811, 2
    %v836 = vsel %vm693, %v834, %v835
    %v837 = vrot.slane %v812, 2
    %v838 = vsel %vm693, %v835, %v837
    %v839 = vrot.slane %v813, 2
    %v840 = vrot.slane %v814, 2
    %v841 = vsel %vm693, %v839, %v840
    %v842 = vrot.slane %v815, 2
    %v843 = vsel %vm693, %v840, %v842
    %v844 = vrot.slane %v816, 2
    %v845 = vrot.slane %v817, 2
    %v846 = vsel %vm693, %v844, %v845
    %v847 = vrot.slane %v818, 2
    %v848 = vsel %vm693, %v845, %v847
    %v849 = vrot.slane %v819, 2
    %v850 = vrot.slane %v820, 2
    %v851 = vsel %vm693, %v849, %v850
    %v852 = vrot.slane %v821, 2
    %v853 = vsel %vm693, %v850, %v852
    %854 = vrot.lane.b32.xlu0 %v836, 126
    %v855 = vpop.permute.xlu0 %854
    %856 = vrot.lane.b32.xlu0 %v838, 126
    %v857 = vpop.permute.xlu0 %856
    %858 = vrot.lane.b32.xlu0 %v841, 126
    %v859 = vpop.permute.xlu0 %858
    %860 = vrot.lane.b32.xlu0 %v843, 126
    %v861 = vpop.permute.xlu0 %860
    %862 = vrot.lane.b32.xlu0 %v846, 126
    %v863 = vpop.permute.xlu0 %862
    %864 = vrot.lane.b32.xlu0 %v848, 126
    %v865 = vpop.permute.xlu0 %864
    %866 = vrot.lane.b32.xlu0 %v851, 126
    %v867 = vpop.permute.xlu0 %866
    %868 = vrot.lane.b32.xlu0 %v853, 126
    %v869 = vpop.permute.xlu0 %868
    %v878 = vadd.f32 %v800, %v855
    %v879 = vadd.f32 %v801, %v857
    %v880 = vadd.f32 %v802, %v859
    %v881 = vadd.f32 %v803, %v861
    %v882 = vadd.f32 %v804, %v863
    %v883 = vadd.f32 %v805, %v865
    %v884 = vadd.f32 %v806, %v867
    %v885 = vadd.f32 %v807, %v869
    %s886 = sld [smem:[#allocation4 + $0x24]]
    %v887 = vstv %s886
    %v888 = vmul.f32 %v887, %v318
    %v889 = vmul.f32 %v887, %v319
    %v890 = vmul.f32 %v887, %v321
    %v891 = vmul.f32 %v887, %v322
    %v892 = vmul.f32 %v887, %v324
    %v893 = vmul.f32 %v887, %v325
    %v894 = vmul.f32 %v887, %v327
    %v895 = vmul.f32 %v887, %v328
    %v896 = vadd.f32 %v317, %v888
    %v897 = vadd.f32 %v317, %v889
    %v898 = vadd.f32 %v317, %v890
    %v899 = vadd.f32 %v317, %v891
    %v900 = vadd.f32 %v317, %v892
    %v901 = vadd.f32 %v317, %v893
    %v902 = vadd.f32 %v317, %v894
    %v903 = vadd.f32 %v317, %v895
    %s904 = sld [smem:[#allocation4 + $0x25]]
    %v905 = vstv %s904
    %v906 = vmul.f32 %v905, %v318
    %v907 = vmul.f32 %v905, %v319
    %v908 = vmul.f32 %v905, %v321
    %v909 = vmul.f32 %v905, %v322
    %v910 = vmul.f32 %v905, %v324
    %v911 = vmul.f32 %v905, %v325
    %v912 = vmul.f32 %v905, %v327
    %v913 = vmul.f32 %v905, %v328
    %922 = vrot.lane.b32.xlu0 %v906, 127
    %v923 = vpop.permute.xlu0 %922
    %924 = vrot.lane.b32.xlu0 %v907, 127
    %v925 = vpop.permute.xlu0 %924
    %926 = vrot.lane.b32.xlu0 %v908, 127
    %v927 = vpop.permute.xlu0 %926
    %928 = vrot.lane.b32.xlu0 %v909, 127
    %v929 = vpop.permute.xlu0 %928
    %930 = vrot.lane.b32.xlu0 %v910, 127
    %v931 = vpop.permute.xlu0 %930
    %932 = vrot.lane.b32.xlu0 %v911, 127
    %v933 = vpop.permute.xlu0 %932
    %934 = vrot.lane.b32.xlu0 %v912, 127
    %v935 = vpop.permute.xlu0 %934
    %936 = vrot.lane.b32.xlu0 %v913, 127
    %v937 = vpop.permute.xlu0 %936
    %v946 = vadd.f32 %v896, %v923
    %v947 = vadd.f32 %v897, %v925
    %v948 = vadd.f32 %v898, %v927
    %v949 = vadd.f32 %v899, %v929
    %v950 = vadd.f32 %v900, %v931
    %v951 = vadd.f32 %v901, %v933
    %v952 = vadd.f32 %v902, %v935
    %v953 = vadd.f32 %v903, %v937
    %s954 = sld [smem:[#allocation4 + $0x26]]
    %v955 = vstv %s954
    %v956 = vmul.f32 %v955, %v318
    %v957 = vmul.f32 %v955, %v319
    %v958 = vmul.f32 %v955, %v321
    %v959 = vmul.f32 %v955, %v322
    %v960 = vmul.f32 %v955, %v324
    %v961 = vmul.f32 %v955, %v325
    %v962 = vmul.f32 %v955, %v327
    %v963 = vmul.f32 %v955, %v328
    %972 = vrot.lane.b32.xlu0 %v956, 126
    %v973 = vpop.permute.xlu0 %972
    %974 = vrot.lane.b32.xlu0 %v957, 126
    %v975 = vpop.permute.xlu0 %974
    %976 = vrot.lane.b32.xlu0 %v958, 126
    %v977 = vpop.permute.xlu0 %976
    %978 = vrot.lane.b32.xlu0 %v959, 126
    %v979 = vpop.permute.xlu0 %978
    %980 = vrot.lane.b32.xlu0 %v960, 126
    %v981 = vpop.permute.xlu0 %980
    %982 = vrot.lane.b32.xlu0 %v961, 126
    %v983 = vpop.permute.xlu0 %982
    %984 = vrot.lane.b32.xlu0 %v962, 126
    %v985 = vpop.permute.xlu0 %984
    %986 = vrot.lane.b32.xlu0 %v963, 126
    %v987 = vpop.permute.xlu0 %986
    %v996 = vadd.f32 %v946, %v973
    %v997 = vadd.f32 %v947, %v975
    %v998 = vadd.f32 %v948, %v977
    %v999 = vadd.f32 %v949, %v979
    %v1000 = vadd.f32 %v950, %v981
    %v1001 = vadd.f32 %v951, %v983
    %v1002 = vadd.f32 %v952, %v985
    %v1003 = vadd.f32 %v953, %v987
    %s1004 = sld [smem:[#allocation4 + $0x27]]
    %v1005 = vstv %s1004
    %v1006 = vmul.f32 %v1005, %v318
    %v1007 = vmul.f32 %v1005, %v319
    %v1008 = vmul.f32 %v1005, %v320
    %v1009 = vmul.f32 %v1005, %v321
    %v1010 = vmul.f32 %v1005, %v322
    %v1011 = vmul.f32 %v1005, %v323
    %v1012 = vmul.f32 %v1005, %v324
    %v1013 = vmul.f32 %v1005, %v325
    %v1014 = vmul.f32 %v1005, %v326
    %v1015 = vmul.f32 %v1005, %v327
    %v1016 = vmul.f32 %v1005, %v328
    %v1017 = vmul.f32 %v1005, %v329
    %v1030 = vrot.slane %v1006, 1
    %v1031 = vrot.slane %v1007, 1
    %v1032 = vsel %vm474, %v1030, %v1031
    %v1033 = vrot.slane %v1008, 1
    %v1034 = vsel %vm474, %v1031, %v1033
    %v1035 = vrot.slane %v1009, 1
    %v1036 = vrot.slane %v1010, 1
    %v1037 = vsel %vm474, %v1035, %v1036
    %v1038 = vrot.slane %v1011, 1
    %v1039 = vsel %vm474, %v1036, %v1038
    %v1040 = vrot.slane %v1012, 1
    %v1041 = vrot.slane %v1013, 1
    %v1042 = vsel %vm474, %v1040, %v1041
    %v1043 = vrot.slane %v1014, 1
    %v1044 = vsel %vm474, %v1041, %v1043
    %v1045 = vrot.slane %v1015, 1
    %v1046 = vrot.slane %v1016, 1
    %v1047 = vsel %vm474, %v1045, %v1046
    %v1048 = vrot.slane %v1017, 1
    %v1049 = vsel %vm474, %v1046, %v1048
    %v1058 = vadd.f32 %v996, %v1032
    %v1059 = vadd.f32 %v997, %v1034
    %v1060 = vadd.f32 %v998, %v1037
    %v1061 = vadd.f32 %v999, %v1039
    %v1062 = vadd.f32 %v1000, %v1042
    %v1063 = vadd.f32 %v1001, %v1044
    %v1064 = vadd.f32 %v1002, %v1047
    %v1065 = vadd.f32 %v1003, %v1049
    %s1066 = sld [smem:[#allocation4 + $0x28]]
    %v1067 = vstv %s1066
    %v1068 = vmul.f32 %v1067, %v318
    %v1069 = vmul.f32 %v1067, %v319
    %v1070 = vmul.f32 %v1067, %v320
    %v1071 = vmul.f32 %v1067, %v321
    %v1072 = vmul.f32 %v1067, %v322
    %v1073 = vmul.f32 %v1067, %v323
    %v1074 = vmul.f32 %v1067, %v324
    %v1075 = vmul.f32 %v1067, %v325
    %v1076 = vmul.f32 %v1067, %v326
    %v1077 = vmul.f32 %v1067, %v327
    %v1078 = vmul.f32 %v1067, %v328
    %v1079 = vmul.f32 %v1067, %v329
    %v1092 = vrot.slane %v1068, 1
    %v1093 = vrot.slane %v1069, 1
    %v1094 = vsel %vm474, %v1092, %v1093
    %v1095 = vrot.slane %v1070, 1
    %v1096 = vsel %vm474, %v1093, %v1095
    %v1097 = vrot.slane %v1071, 1
    %v1098 = vrot.slane %v1072, 1
    %v1099 = vsel %vm474, %v1097, %v1098
    %v1100 = vrot.slane %v1073, 1
    %v1101 = vsel %vm474, %v1098, %v1100
    %v1102 = vrot.slane %v1074, 1
    %v1103 = vrot.slane %v1075, 1
    %v1104 = vsel %vm474, %v1102, %v1103
    %v1105 = vrot.slane %v1076, 1
    %v1106 = vsel %vm474, %v1103, %v1105
    %v1107 = vrot.slane %v1077, 1
    %v1108 = vrot.slane %v1078, 1
    %v1109 = vsel %vm474, %v1107, %v1108
    %v1110 = vrot.slane %v1079, 1
    %v1111 = vsel %vm474, %v1108, %v1110
    %1112 = vrot.lane.b32.xlu0 %v1094, 127
    %v1113 = vpop.permute.xlu0 %1112
    %1114 = vrot.lane.b32.xlu0 %v1096, 127
    %v1115 = vpop.permute.xlu0 %1114
    %1116 = vrot.lane.b32.xlu0 %v1099, 127
    %v1117 = vpop.permute.xlu0 %1116
    %1118 = vrot.lane.b32.xlu0 %v1101, 127
    %v1119 = vpop.permute.xlu0 %1118
    %1120 = vrot.lane.b32.xlu0 %v1104, 127
    %v1121 = vpop.permute.xlu0 %1120
    %1122 = vrot.lane.b32.xlu0 %v1106, 127
    %v1123 = vpop.permute.xlu0 %1122
    %1124 = vrot.lane.b32.xlu0 %v1109, 127
    %v1125 = vpop.permute.xlu0 %1124
    %1126 = vrot.lane.b32.xlu0 %v1111, 127
    %v1127 = vpop.permute.xlu0 %1126
    %v1136 = vadd.f32 %v1058, %v1113
    %v1137 = vadd.f32 %v1059, %v1115
    %v1138 = vadd.f32 %v1060, %v1117
    %v1139 = vadd.f32 %v1061, %v1119
    %v1140 = vadd.f32 %v1062, %v1121
    %v1141 = vadd.f32 %v1063, %v1123
    %v1142 = vadd.f32 %v1064, %v1125
    %v1143 = vadd.f32 %v1065, %v1127
    %s1144 = sld [smem:[#allocation4 + $0x29]]
    %v1145 = vstv %s1144
    %v1146 = vmul.f32 %v1145, %v318
    %v1147 = vmul.f32 %v1145, %v319
    %v1148 = vmul.f32 %v1145, %v320
    %v1149 = vmul.f32 %v1145, %v321
    %v1150 = vmul.f32 %v1145, %v322
    %v1151 = vmul.f32 %v1145, %v323
    %v1152 = vmul.f32 %v1145, %v324
    %v1153 = vmul.f32 %v1145, %v325
    %v1154 = vmul.f32 %v1145, %v326
    %v1155 = vmul.f32 %v1145, %v327
    %v1156 = vmul.f32 %v1145, %v328
    %v1157 = vmul.f32 %v1145, %v329
    %v1170 = vrot.slane %v1146, 1
    %v1171 = vrot.slane %v1147, 1
    %v1172 = vsel %vm474, %v1170, %v1171
    %v1173 = vrot.slane %v1148, 1
    %v1174 = vsel %vm474, %v1171, %v1173
    %v1175 = vrot.slane %v1149, 1
    %v1176 = vrot.slane %v1150, 1
    %v1177 = vsel %vm474, %v1175, %v1176
    %v1178 = vrot.slane %v1151, 1
    %v1179 = vsel %vm474, %v1176, %v1178
    %v1180 = vrot.slane %v1152, 1
    %v1181 = vrot.slane %v1153, 1
    %v1182 = vsel %vm474, %v1180, %v1181
    %v1183 = vrot.slane %v1154, 1
    %v1184 = vsel %vm474, %v1181, %v1183
    %v1185 = vrot.slane %v1155, 1
    %v1186 = vrot.slane %v1156, 1
    %v1187 = vsel %vm474, %v1185, %v1186
    %v1188 = vrot.slane %v1157, 1
    %v1189 = vsel %vm474, %v1186, %v1188
    %1190 = vrot.lane.b32.xlu0 %v1172, 126
    %v1191 = vpop.permute.xlu0 %1190
    %1192 = vrot.lane.b32.xlu0 %v1174, 126
    %v1193 = vpop.permute.xlu0 %1192
    %1194 = vrot.lane.b32.xlu0 %v1177, 126
    %v1195 = vpop.permute.xlu0 %1194
    %1196 = vrot.lane.b32.xlu0 %v1179, 126
    %v1197 = vpop.permute.xlu0 %1196
    %1198 = vrot.lane.b32.xlu0 %v1182, 126
    %v1199 = vpop.permute.xlu0 %1198
    %1200 = vrot.lane.b32.xlu0 %v1184, 126
    %v1201 = vpop.permute.xlu0 %1200
    %1202 = vrot.lane.b32.xlu0 %v1187, 126
    %v1203 = vpop.permute.xlu0 %1202
    %1204 = vrot.lane.b32.xlu0 %v1189, 126
    %v1205 = vpop.permute.xlu0 %1204
    %v1214 = vadd.f32 %v1136, %v1191
    %v1215 = vadd.f32 %v1137, %v1193
    %v1216 = vadd.f32 %v1138, %v1195
    %v1217 = vadd.f32 %v1139, %v1197
    %v1218 = vadd.f32 %v1140, %v1199
    %v1219 = vadd.f32 %v1141, %v1201
    %v1220 = vadd.f32 %v1142, %v1203
    %v1221 = vadd.f32 %v1143, %v1205
    %s1222 = sld [smem:[#allocation4 + $0x2a]]
    %v1223 = vstv %s1222
    %v1224 = vmul.f32 %v1223, %v318
    %v1225 = vmul.f32 %v1223, %v319
    %v1226 = vmul.f32 %v1223, %v320
    %v1227 = vmul.f32 %v1223, %v321
    %v1228 = vmul.f32 %v1223, %v322
    %v1229 = vmul.f32 %v1223, %v323
    %v1230 = vmul.f32 %v1223, %v324
    %v1231 = vmul.f32 %v1223, %v325
    %v1232 = vmul.f32 %v1223, %v326
    %v1233 = vmul.f32 %v1223, %v327
    %v1234 = vmul.f32 %v1223, %v328
    %v1235 = vmul.f32 %v1223, %v329
    %v1248 = vrot.slane %v1224, 2
    %v1249 = vrot.slane %v1225, 2
    %v1250 = vsel %vm693, %v1248, %v1249
    %v1251 = vrot.slane %v1226, 2
    %v1252 = vsel %vm693, %v1249, %v1251
    %v1253 = vrot.slane %v1227, 2
    %v1254 = vrot.slane %v1228, 2
    %v1255 = vsel %vm693, %v1253, %v1254
    %v1256 = vrot.slane %v1229, 2
    %v1257 = vsel %vm693, %v1254, %v1256
    %v1258 = vrot.slane %v1230, 2
    %v1259 = vrot.slane %v1231, 2
    %v1260 = vsel %vm693, %v1258, %v1259
    %v1261 = vrot.slane %v1232, 2
    %v1262 = vsel %vm693, %v1259, %v1261
    %v1263 = vrot.slane %v1233, 2
    %v1264 = vrot.slane %v1234, 2
    %v1265 = vsel %vm693, %v1263, %v1264
    %v1266 = vrot.slane %v1235, 2
    %v1267 = vsel %vm693, %v1264, %v1266
    %v1276 = vadd.f32 %v1214, %v1250
    %v1277 = vadd.f32 %v1215, %v1252
    %v1278 = vadd.f32 %v1216, %v1255
    %v1279 = vadd.f32 %v1217, %v1257
    %v1280 = vadd.f32 %v1218, %v1260
    %v1281 = vadd.f32 %v1219, %v1262
    %v1282 = vadd.f32 %v1220, %v1265
    %v1283 = vadd.f32 %v1221, %v1267
    %s1284 = sld [smem:[#allocation4 + $0x2b]]
    %v1285 = vstv %s1284
    %v1286 = vmul.f32 %v1285, %v318
    %v1287 = vmul.f32 %v1285, %v319
    %v1288 = vmul.f32 %v1285, %v320
    %v1289 = vmul.f32 %v1285, %v321
    %v1290 = vmul.f32 %v1285, %v322
    %v1291 = vmul.f32 %v1285, %v323
    %v1292 = vmul.f32 %v1285, %v324
    %v1293 = vmul.f32 %v1285, %v325
    %v1294 = vmul.f32 %v1285, %v326
    %v1295 = vmul.f32 %v1285, %v327
    %v1296 = vmul.f32 %v1285, %v328
    %v1297 = vmul.f32 %v1285, %v329
    %v1310 = vrot.slane %v1286, 2
    %v1311 = vrot.slane %v1287, 2
    %v1312 = vsel %vm693, %v1310, %v1311
    %v1313 = vrot.slane %v1288, 2
    %v1314 = vsel %vm693, %v1311, %v1313
    %v1315 = vrot.slane %v1289, 2
    %v1316 = vrot.slane %v1290, 2
    %v1317 = vsel %vm693, %v1315, %v1316
    %v1318 = vrot.slane %v1291, 2
    %v1319 = vsel %vm693, %v1316, %v1318
    %v1320 = vrot.slane %v1292, 2
    %v1321 = vrot.slane %v1293, 2
    %v1322 = vsel %vm693, %v1320, %v1321
    %v1323 = vrot.slane %v1294, 2
    %v1324 = vsel %vm693, %v1321, %v1323
    %v1325 = vrot.slane %v1295, 2
    %v1326 = vrot.slane %v1296, 2
    %v1327 = vsel %vm693, %v1325, %v1326
    %v1328 = vrot.slane %v1297, 2
    %v1329 = vsel %vm693, %v1326, %v1328
    %1330 = vrot.lane.b32.xlu0 %v1312, 127
    %v1331 = vpop.permute.xlu0 %1330
    %1332 = vrot.lane.b32.xlu0 %v1314, 127
    %v1333 = vpop.permute.xlu0 %1332
    %1334 = vrot.lane.b32.xlu0 %v1317, 127
    %v1335 = vpop.permute.xlu0 %1334
    %1336 = vrot.lane.b32.xlu0 %v1319, 127
    %v1337 = vpop.permute.xlu0 %1336
    %1338 = vrot.lane.b32.xlu0 %v1322, 127
    %v1339 = vpop.permute.xlu0 %1338
    %1340 = vrot.lane.b32.xlu0 %v1324, 127
    %v1341 = vpop.permute.xlu0 %1340
    %1342 = vrot.lane.b32.xlu0 %v1327, 127
    %v1343 = vpop.permute.xlu0 %1342
    %1344 = vrot.lane.b32.xlu0 %v1329, 127
    %v1345 = vpop.permute.xlu0 %1344
    %v1354 = vadd.f32 %v1276, %v1331
    %v1355 = vadd.f32 %v1277, %v1333
    %v1356 = vadd.f32 %v1278, %v1335
    %v1357 = vadd.f32 %v1279, %v1337
    %v1358 = vadd.f32 %v1280, %v1339
    %v1359 = vadd.f32 %v1281, %v1341
    %v1360 = vadd.f32 %v1282, %v1343
    %v1361 = vadd.f32 %v1283, %v1345
    %s1362 = sld [smem:[#allocation4 + $0x2c]]
    %v1363 = vstv %s1362
    %v1364 = vmul.f32 %v1363, %v318
    %v1365 = vmul.f32 %v1363, %v319
    %v1366 = vmul.f32 %v1363, %v320
    %v1367 = vmul.f32 %v1363, %v321
    %v1368 = vmul.f32 %v1363, %v322
    %v1369 = vmul.f32 %v1363, %v323
    %v1370 = vmul.f32 %v1363, %v324
    %v1371 = vmul.f32 %v1363, %v325
    %v1372 = vmul.f32 %v1363, %v326
    %v1373 = vmul.f32 %v1363, %v327
    %v1374 = vmul.f32 %v1363, %v328
    %v1375 = vmul.f32 %v1363, %v329
    %v1388 = vrot.slane %v1364, 2
    %v1389 = vrot.slane %v1365, 2
    %v1390 = vsel %vm693, %v1388, %v1389
    %v1391 = vrot.slane %v1366, 2
    %v1392 = vsel %vm693, %v1389, %v1391
    %v1393 = vrot.slane %v1367, 2
    %v1394 = vrot.slane %v1368, 2
    %v1395 = vsel %vm693, %v1393, %v1394
    %v1396 = vrot.slane %v1369, 2
    %v1397 = vsel %vm693, %v1394, %v1396
    %v1398 = vrot.slane %v1370, 2
    %v1399 = vrot.slane %v1371, 2
    %v1400 = vsel %vm693, %v1398, %v1399
    %v1401 = vrot.slane %v1372, 2
    %v1402 = vsel %vm693, %v1399, %v1401
    %v1403 = vrot.slane %v1373, 2
    %v1404 = vrot.slane %v1374, 2
    %v1405 = vsel %vm693, %v1403, %v1404
    %v1406 = vrot.slane %v1375, 2
    %v1407 = vsel %vm693, %v1404, %v1406
    %1408 = vrot.lane.b32.xlu0 %v1390, 126
    %v1409 = vpop.permute.xlu0 %1408
    %1410 = vrot.lane.b32.xlu0 %v1392, 126
    %v1411 = vpop.permute.xlu0 %1410
    %1412 = vrot.lane.b32.xlu0 %v1395, 126
    %v1413 = vpop.permute.xlu0 %1412
    %1414 = vrot.lane.b32.xlu0 %v1397, 126
    %v1415 = vpop.permute.xlu0 %1414
    %1416 = vrot.lane.b32.xlu0 %v1400, 126
    %v1417 = vpop.permute.xlu0 %1416
    %1418 = vrot.lane.b32.xlu0 %v1402, 126
    %v1419 = vpop.permute.xlu0 %1418
    %1420 = vrot.lane.b32.xlu0 %v1405, 126
    %v1421 = vpop.permute.xlu0 %1420
    %1422 = vrot.lane.b32.xlu0 %v1407, 126
    %v1423 = vpop.permute.xlu0 %1422
    %v1432 = vadd.f32 %v1354, %v1409
    %v1433 = vadd.f32 %v1355, %v1411
    %v1434 = vadd.f32 %v1356, %v1413
    %v1435 = vadd.f32 %v1357, %v1415
    %v1436 = vadd.f32 %v1358, %v1417
    %v1437 = vadd.f32 %v1359, %v1419
    %v1438 = vadd.f32 %v1360, %v1421
    %v1439 = vadd.f32 %v1361, %v1423
    %s1440 = scalar_lea.vmem [#allocation2], 24
    %v1441 = vld [vmem:[%s1440] sm:$0xff]
    %v1442 = vld [vmem:[%s1440 + $0x8] sm:$0xff]
    %v1443 = vld [vmem:[%s1440 + $0x10] sm:$0x3]
    %v1444 = vld [vmem:[%s1440 + $0x60] sm:$0xff]
    %v1445 = vld [vmem:[%s1440 + $0x68] sm:$0xff]
    %v1446 = vld [vmem:[%s1440 + $0x70] sm:$0x3]
    %v1447 = vld [vmem:[%s1440 + $0xc0] sm:$0xff]
    %v1448 = vld [vmem:[%s1440 + $0xc8] sm:$0xff]
    %v1449 = vld [vmem:[%s1440 + $0xd0] sm:$0x3]
    %v1450 = vld [vmem:[%s1440 + $0x120] sm:$0xff]
    %v1451 = vld [vmem:[%s1440 + $0x128] sm:$0xff]
    %v1452 = vld [vmem:[%s1440 + $0x130] sm:$0x3]
    %s1453 = sld [smem:[#allocation4 + $0x9]]
    %v1454 = vstv %s1453
    %v1455 = vmul.f32 %v1454, %v1441
    %v1456 = vmul.f32 %v1454, %v1442
    %v1457 = vmul.f32 %v1454, %v1444
    %v1458 = vmul.f32 %v1454, %v1445
    %v1459 = vmul.f32 %v1454, %v1447
    %v1460 = vmul.f32 %v1454, %v1448
    %v1461 = vmul.f32 %v1454, %v1450
    %v1462 = vmul.f32 %v1454, %v1451
    %v1463 = vadd.f32 %v878, %v1455
    %v1464 = vadd.f32 %v879, %v1456
    %v1465 = vadd.f32 %v880, %v1457
    %v1466 = vadd.f32 %v881, %v1458
    %v1467 = vadd.f32 %v882, %v1459
    %v1468 = vadd.f32 %v883, %v1460
    %v1469 = vadd.f32 %v884, %v1461
    %v1470 = vadd.f32 %v885, %v1462
    %s1471 = sld [smem:[#allocation4 + $0xa]]
    %v1472 = vstv %s1471
    %v1473 = vmul.f32 %v1472, %v1441
    %v1474 = vmul.f32 %v1472, %v1442
    %v1475 = vmul.f32 %v1472, %v1444
    %v1476 = vmul.f32 %v1472, %v1445
    %v1477 = vmul.f32 %v1472, %v1447
    %v1478 = vmul.f32 %v1472, %v1448
    %v1479 = vmul.f32 %v1472, %v1450
    %v1480 = vmul.f32 %v1472, %v1451
    %1489 = vrot.lane.b32.xlu0 %v1473, 127
    %v1490 = vpop.permute.xlu0 %1489
    %1491 = vrot.lane.b32.xlu0 %v1474, 127
    %v1492 = vpop.permute.xlu0 %1491
    %1493 = vrot.lane.b32.xlu0 %v1475, 127
    %v1494 = vpop.permute.xlu0 %1493
    %1495 = vrot.lane.b32.xlu0 %v1476, 127
    %v1496 = vpop.permute.xlu0 %1495
    %1497 = vrot.lane.b32.xlu0 %v1477, 127
    %v1498 = vpop.permute.xlu0 %1497
    %1499 = vrot.lane.b32.xlu0 %v1478, 127
    %v1500 = vpop.permute.xlu0 %1499
    %1501 = vrot.lane.b32.xlu0 %v1479, 127
    %v1502 = vpop.permute.xlu0 %1501
    %1503 = vrot.lane.b32.xlu0 %v1480, 127
    %v1504 = vpop.permute.xlu0 %1503
    %v1513 = vadd.f32 %v1463, %v1490
    %v1514 = vadd.f32 %v1464, %v1492
    %v1515 = vadd.f32 %v1465, %v1494
    %v1516 = vadd.f32 %v1466, %v1496
    %v1517 = vadd.f32 %v1467, %v1498
    %v1518 = vadd.f32 %v1468, %v1500
    %v1519 = vadd.f32 %v1469, %v1502
    %v1520 = vadd.f32 %v1470, %v1504
    %s1521 = sld [smem:[#allocation4 + $0xb]]
    %v1522 = vstv %s1521
    %v1523 = vmul.f32 %v1522, %v1441
    %v1524 = vmul.f32 %v1522, %v1442
    %v1525 = vmul.f32 %v1522, %v1444
    %v1526 = vmul.f32 %v1522, %v1445
    %v1527 = vmul.f32 %v1522, %v1447
    %v1528 = vmul.f32 %v1522, %v1448
    %v1529 = vmul.f32 %v1522, %v1450
    %v1530 = vmul.f32 %v1522, %v1451
    %1539 = vrot.lane.b32.xlu0 %v1523, 126
    %v1540 = vpop.permute.xlu0 %1539
    %1541 = vrot.lane.b32.xlu0 %v1524, 126
    %v1542 = vpop.permute.xlu0 %1541
    %1543 = vrot.lane.b32.xlu0 %v1525, 126
    %v1544 = vpop.permute.xlu0 %1543
    %1545 = vrot.lane.b32.xlu0 %v1526, 126
    %v1546 = vpop.permute.xlu0 %1545
    %1547 = vrot.lane.b32.xlu0 %v1527, 126
    %v1548 = vpop.permute.xlu0 %1547
    %1549 = vrot.lane.b32.xlu0 %v1528, 126
    %v1550 = vpop.permute.xlu0 %1549
    %1551 = vrot.lane.b32.xlu0 %v1529, 126
    %v1552 = vpop.permute.xlu0 %1551
    %1553 = vrot.lane.b32.xlu0 %v1530, 126
    %v1554 = vpop.permute.xlu0 %1553
    %v1563 = vadd.f32 %v1513, %v1540
    %v1564 = vadd.f32 %v1514, %v1542
    %v1565 = vadd.f32 %v1515, %v1544
    %v1566 = vadd.f32 %v1516, %v1546
    %v1567 = vadd.f32 %v1517, %v1548
    %v1568 = vadd.f32 %v1518, %v1550
    %v1569 = vadd.f32 %v1519, %v1552
    %v1570 = vadd.f32 %v1520, %v1554
    %s1571 = sld [smem:[#allocation4 + $0xc]]
    %v1572 = vstv %s1571
    %v1573 = vmul.f32 %v1572, %v1441
    %v1574 = vmul.f32 %v1572, %v1442
    %v1575 = vmul.f32 %v1572, %v1443
    %v1576 = vmul.f32 %v1572, %v1444
    %v1577 = vmul.f32 %v1572, %v1445
    %v1578 = vmul.f32 %v1572, %v1446
    %v1579 = vmul.f32 %v1572, %v1447
    %v1580 = vmul.f32 %v1572, %v1448
    %v1581 = vmul.f32 %v1572, %v1449
    %v1582 = vmul.f32 %v1572, %v1450
    %v1583 = vmul.f32 %v1572, %v1451
    %v1584 = vmul.f32 %v1572, %v1452
    %v1597 = vrot.slane %v1573, 1
    %v1598 = vrot.slane %v1574, 1
    %v1599 = vsel %vm474, %v1597, %v1598
    %v1600 = vrot.slane %v1575, 1
    %v1601 = vsel %vm474, %v1598, %v1600
    %v1602 = vrot.slane %v1576, 1
    %v1603 = vrot.slane %v1577, 1
    %v1604 = vsel %vm474, %v1602, %v1603
    %v1605 = vrot.slane %v1578, 1
    %v1606 = vsel %vm474, %v1603, %v1605
    %v1607 = vrot.slane %v1579, 1
    %v1608 = vrot.slane %v1580, 1
    %v1609 = vsel %vm474, %v1607, %v1608
    %v1610 = vrot.slane %v1581, 1
    %v1611 = vsel %vm474, %v1608, %v1610
    %v1612 = vrot.slane %v1582, 1
    %v1613 = vrot.slane %v1583, 1
    %v1614 = vsel %vm474, %v1612, %v1613
    %v1615 = vrot.slane %v1584, 1
    %v1616 = vsel %vm474, %v1613, %v1615
    %v1625 = vadd.f32 %v1563, %v1599
    %v1626 = vadd.f32 %v1564, %v1601
    %v1627 = vadd.f32 %v1565, %v1604
    %v1628 = vadd.f32 %v1566, %v1606
    %v1629 = vadd.f32 %v1567, %v1609
    %v1630 = vadd.f32 %v1568, %v1611
    %v1631 = vadd.f32 %v1569, %v1614
    %v1632 = vadd.f32 %v1570, %v1616
    %s1633 = sld [smem:[#allocation4 + $0xd]]
    %v1634 = vstv %s1633
    %v1635 = vmul.f32 %v1634, %v1441
    %v1636 = vmul.f32 %v1634, %v1442
    %v1637 = vmul.f32 %v1634, %v1443
    %v1638 = vmul.f32 %v1634, %v1444
    %v1639 = vmul.f32 %v1634, %v1445
    %v1640 = vmul.f32 %v1634, %v1446
    %v1641 = vmul.f32 %v1634, %v1447
    %v1642 = vmul.f32 %v1634, %v1448
    %v1643 = vmul.f32 %v1634, %v1449
    %v1644 = vmul.f32 %v1634, %v1450
    %v1645 = vmul.f32 %v1634, %v1451
    %v1646 = vmul.f32 %v1634, %v1452
    %v1659 = vrot.slane %v1635, 1
    %v1660 = vrot.slane %v1636, 1
    %v1661 = vsel %vm474, %v1659, %v1660
    %v1662 = vrot.slane %v1637, 1
    %v1663 = vsel %vm474, %v1660, %v1662
    %v1664 = vrot.slane %v1638, 1
    %v1665 = vrot.slane %v1639, 1
    %v1666 = vsel %vm474, %v1664, %v1665
    %v1667 = vrot.slane %v1640, 1
    %v1668 = vsel %vm474, %v1665, %v1667
    %v1669 = vrot.slane %v1641, 1
    %v1670 = vrot.slane %v1642, 1
    %v1671 = vsel %vm474, %v1669, %v1670
    %v1672 = vrot.slane %v1643, 1
    %v1673 = vsel %vm474, %v1670, %v1672
    %v1674 = vrot.slane %v1644, 1
    %v1675 = vrot.slane %v1645, 1
    %v1676 = vsel %vm474, %v1674, %v1675
    %v1677 = vrot.slane %v1646, 1
    %v1678 = vsel %vm474, %v1675, %v1677
    %1679 = vrot.lane.b32.xlu0 %v1661, 127
    %v1680 = vpop.permute.xlu0 %1679
    %1681 = vrot.lane.b32.xlu0 %v1663, 127
    %v1682 = vpop.permute.xlu0 %1681
    %1683 = vrot.lane.b32.xlu0 %v1666, 127
    %v1684 = vpop.permute.xlu0 %1683
    %1685 = vrot.lane.b32.xlu0 %v1668, 127
    %v1686 = vpop.permute.xlu0 %1685
    %1687 = vrot.lane.b32.xlu0 %v1671, 127
    %v1688 = vpop.permute.xlu0 %1687
    %1689 = vrot.lane.b32.xlu0 %v1673, 127
    %v1690 = vpop.permute.xlu0 %1689
    %1691 = vrot.lane.b32.xlu0 %v1676, 127
    %v1692 = vpop.permute.xlu0 %1691
    %1693 = vrot.lane.b32.xlu0 %v1678, 127
    %v1694 = vpop.permute.xlu0 %1693
    %v1703 = vadd.f32 %v1625, %v1680
    %v1704 = vadd.f32 %v1626, %v1682
    %v1705 = vadd.f32 %v1627, %v1684
    %v1706 = vadd.f32 %v1628, %v1686
    %v1707 = vadd.f32 %v1629, %v1688
    %v1708 = vadd.f32 %v1630, %v1690
    %v1709 = vadd.f32 %v1631, %v1692
    %v1710 = vadd.f32 %v1632, %v1694
    %s1711 = sld [smem:[#allocation4 + $0xe]]
    %v1712 = vstv %s1711
    %v1713 = vmul.f32 %v1712, %v1441
    %v1714 = vmul.f32 %v1712, %v1442
    %v1715 = vmul.f32 %v1712, %v1443
    %v1716 = vmul.f32 %v1712, %v1444
    %v1717 = vmul.f32 %v1712, %v1445
    %v1718 = vmul.f32 %v1712, %v1446
    %v1719 = vmul.f32 %v1712, %v1447
    %v1720 = vmul.f32 %v1712, %v1448
    %v1721 = vmul.f32 %v1712, %v1449
    %v1722 = vmul.f32 %v1712, %v1450
    %v1723 = vmul.f32 %v1712, %v1451
    %v1724 = vmul.f32 %v1712, %v1452
    %v1737 = vrot.slane %v1713, 1
    %v1738 = vrot.slane %v1714, 1
    %v1739 = vsel %vm474, %v1737, %v1738
    %v1740 = vrot.slane %v1715, 1
    %v1741 = vsel %vm474, %v1738, %v1740
    %v1742 = vrot.slane %v1716, 1
    %v1743 = vrot.slane %v1717, 1
    %v1744 = vsel %vm474, %v1742, %v1743
    %v1745 = vrot.slane %v1718, 1
    %v1746 = vsel %vm474, %v1743, %v1745
    %v1747 = vrot.slane %v1719, 1
    %v1748 = vrot.slane %v1720, 1
    %v1749 = vsel %vm474, %v1747, %v1748
    %v1750 = vrot.slane %v1721, 1
    %v1751 = vsel %vm474, %v1748, %v1750
    %v1752 = vrot.slane %v1722, 1
    %v1753 = vrot.slane %v1723, 1
    %v1754 = vsel %vm474, %v1752, %v1753
    %v1755 = vrot.slane %v1724, 1
    %v1756 = vsel %vm474, %v1753, %v1755
    %1757 = vrot.lane.b32.xlu0 %v1739, 126
    %v1758 = vpop.permute.xlu0 %1757
    %1759 = vrot.lane.b32.xlu0 %v1741, 126
    %v1760 = vpop.permute.xlu0 %1759
    %1761 = vrot.lane.b32.xlu0 %v1744, 126
    %v1762 = vpop.permute.xlu0 %1761
    %1763 = vrot.lane.b32.xlu0 %v1746, 126
    %v1764 = vpop.permute.xlu0 %1763
    %1765 = vrot.lane.b32.xlu0 %v1749, 126
    %v1766 = vpop.permute.xlu0 %1765
    %1767 = vrot.lane.b32.xlu0 %v1751, 126
    %v1768 = vpop.permute.xlu0 %1767
    %1769 = vrot.lane.b32.xlu0 %v1754, 126
    %v1770 = vpop.permute.xlu0 %1769
    %1771 = vrot.lane.b32.xlu0 %v1756, 126
    %v1772 = vpop.permute.xlu0 %1771
    %v1781 = vadd.f32 %v1703, %v1758
    %v1782 = vadd.f32 %v1704, %v1760
    %v1783 = vadd.f32 %v1705, %v1762
    %v1784 = vadd.f32 %v1706, %v1764
    %v1785 = vadd.f32 %v1707, %v1766
    %v1786 = vadd.f32 %v1708, %v1768
    %v1787 = vadd.f32 %v1709, %v1770
    %v1788 = vadd.f32 %v1710, %v1772
    %s1789 = sld [smem:[#allocation4 + $0xf]]
    %v1790 = vstv %s1789
    %v1791 = vmul.f32 %v1790, %v1441
    %v1792 = vmul.f32 %v1790, %v1442
    %v1793 = vmul.f32 %v1790, %v1443
    %v1794 = vmul.f32 %v1790, %v1444
    %v1795 = vmul.f32 %v1790, %v1445
    %v1796 = vmul.f32 %v1790, %v1446
    %v1797 = vmul.f32 %v1790, %v1447
    %v1798 = vmul.f32 %v1790, %v1448
    %v1799 = vmul.f32 %v1790, %v1449
    %v1800 = vmul.f32 %v1790, %v1450
    %v1801 = vmul.f32 %v1790, %v1451
    %v1802 = vmul.f32 %v1790, %v1452
    %v1815 = vrot.slane %v1791, 2
    %v1816 = vrot.slane %v1792, 2
    %v1817 = vsel %vm693, %v1815, %v1816
    %v1818 = vrot.slane %v1793, 2
    %v1819 = vsel %vm693, %v1816, %v1818
    %v1820 = vrot.slane %v1794, 2
    %v1821 = vrot.slane %v1795, 2
    %v1822 = vsel %vm693, %v1820, %v1821
    %v1823 = vrot.slane %v1796, 2
    %v1824 = vsel %vm693, %v1821, %v1823
    %v1825 = vrot.slane %v1797, 2
    %v1826 = vrot.slane %v1798, 2
    %v1827 = vsel %vm693, %v1825, %v1826
    %v1828 = vrot.slane %v1799, 2
    %v1829 = vsel %vm693, %v1826, %v1828
    %v1830 = vrot.slane %v1800, 2
    %v1831 = vrot.slane %v1801, 2
    %v1832 = vsel %vm693, %v1830, %v1831
    %v1833 = vrot.slane %v1802, 2
    %v1834 = vsel %vm693, %v1831, %v1833
    %v1843 = vadd.f32 %v1781, %v1817
    %v1844 = vadd.f32 %v1782, %v1819
    %v1845 = vadd.f32 %v1783, %v1822
    %v1846 = vadd.f32 %v1784, %v1824
    %v1847 = vadd.f32 %v1785, %v1827
    %v1848 = vadd.f32 %v1786, %v1829
    %v1849 = vadd.f32 %v1787, %v1832
    %v1850 = vadd.f32 %v1788, %v1834
    %s1851 = sld [smem:[#allocation4 + $0x10]]
    %v1852 = vstv %s1851
    %v1853 = vmul.f32 %v1852, %v1441
    %v1854 = vmul.f32 %v1852, %v1442
    %v1855 = vmul.f32 %v1852, %v1443
    %v1856 = vmul.f32 %v1852, %v1444
    %v1857 = vmul.f32 %v1852, %v1445
    %v1858 = vmul.f32 %v1852, %v1446
    %v1859 = vmul.f32 %v1852, %v1447
    %v1860 = vmul.f32 %v1852, %v1448
    %v1861 = vmul.f32 %v1852, %v1449
    %v1862 = vmul.f32 %v1852, %v1450
    %v1863 = vmul.f32 %v1852, %v1451
    %v1864 = vmul.f32 %v1852, %v1452
    %v1877 = vrot.slane %v1853, 2
    %v1878 = vrot.slane %v1854, 2
    %v1879 = vsel %vm693, %v1877, %v1878
    %v1880 = vrot.slane %v1855, 2
    %v1881 = vsel %vm693, %v1878, %v1880
    %v1882 = vrot.slane %v1856, 2
    %v1883 = vrot.slane %v1857, 2
    %v1884 = vsel %vm693, %v1882, %v1883
    %v1885 = vrot.slane %v1858, 2
    %v1886 = vsel %vm693, %v1883, %v1885
    %v1887 = vrot.slane %v1859, 2
    %v1888 = vrot.slane %v1860, 2
    %v1889 = vsel %vm693, %v1887, %v1888
    %v1890 = vrot.slane %v1861, 2
    %v1891 = vsel %vm693, %v1888, %v1890
    %v1892 = vrot.slane %v1862, 2
    %v1893 = vrot.slane %v1863, 2
    %v1894 = vsel %vm693, %v1892, %v1893
    %v1895 = vrot.slane %v1864, 2
    %v1896 = vsel %vm693, %v1893, %v1895
    %1897 = vrot.lane.b32.xlu0 %v1879, 127
    %v1898 = vpop.permute.xlu0 %1897
    %1899 = vrot.lane.b32.xlu0 %v1881, 127
    %v1900 = vpop.permute.xlu0 %1899
    %1901 = vrot.lane.b32.xlu0 %v1884, 127
    %v1902 = vpop.permute.xlu0 %1901
    %1903 = vrot.lane.b32.xlu0 %v1886, 127
    %v1904 = vpop.permute.xlu0 %1903
    %1905 = vrot.lane.b32.xlu0 %v1889, 127
    %v1906 = vpop.permute.xlu0 %1905
    %1907 = vrot.lane.b32.xlu0 %v1891, 127
    %v1908 = vpop.permute.xlu0 %1907
    %1909 = vrot.lane.b32.xlu0 %v1894, 127
    %v1910 = vpop.permute.xlu0 %1909
    %1911 = vrot.lane.b32.xlu0 %v1896, 127
    %v1912 = vpop.permute.xlu0 %1911
    %v1921 = vadd.f32 %v1843, %v1898
    %v1922 = vadd.f32 %v1844, %v1900
    %v1923 = vadd.f32 %v1845, %v1902
    %v1924 = vadd.f32 %v1846, %v1904
    %v1925 = vadd.f32 %v1847, %v1906
    %v1926 = vadd.f32 %v1848, %v1908
    %v1927 = vadd.f32 %v1849, %v1910
    %v1928 = vadd.f32 %v1850, %v1912
    %s1929 = sld [smem:[#allocation4 + $0x11]]
    %v1930 = vstv %s1929
    %v1931 = vmul.f32 %v1930, %v1441
    %v1932 = vmul.f32 %v1930, %v1442
    %v1933 = vmul.f32 %v1930, %v1443
    %v1934 = vmul.f32 %v1930, %v1444
    %v1935 = vmul.f32 %v1930, %v1445
    %v1936 = vmul.f32 %v1930, %v1446
    %v1937 = vmul.f32 %v1930, %v1447
    %v1938 = vmul.f32 %v1930, %v1448
    %v1939 = vmul.f32 %v1930, %v1449
    %v1940 = vmul.f32 %v1930, %v1450
    %v1941 = vmul.f32 %v1930, %v1451
    %v1942 = vmul.f32 %v1930, %v1452
    %v1955 = vrot.slane %v1931, 2
    %v1956 = vrot.slane %v1932, 2
    %v1957 = vsel %vm693, %v1955, %v1956
    %v1958 = vrot.slane %v1933, 2
    %v1959 = vsel %vm693, %v1956, %v1958
    %v1960 = vrot.slane %v1934, 2
    %v1961 = vrot.slane %v1935, 2
    %v1962 = vsel %vm693, %v1960, %v1961
    %v1963 = vrot.slane %v1936, 2
    %v1964 = vsel %vm693, %v1961, %v1963
    %v1965 = vrot.slane %v1937, 2
    %v1966 = vrot.slane %v1938, 2
    %v1967 = vsel %vm693, %v1965, %v1966
    %v1968 = vrot.slane %v1939, 2
    %v1969 = vsel %vm693, %v1966, %v1968
    %v1970 = vrot.slane %v1940, 2
    %v1971 = vrot.slane %v1941, 2
    %v1972 = vsel %vm693, %v1970, %v1971
    %v1973 = vrot.slane %v1942, 2
    %v1974 = vsel %vm693, %v1971, %v1973
    %1975 = vrot.lane.b32.xlu0 %v1957, 126
    %v1976 = vpop.permute.xlu0 %1975
    %1977 = vrot.lane.b32.xlu0 %v1959, 126
    %v1978 = vpop.permute.xlu0 %1977
    %1979 = vrot.lane.b32.xlu0 %v1962, 126
    %v1980 = vpop.permute.xlu0 %1979
    %1981 = vrot.lane.b32.xlu0 %v1964, 126
    %v1982 = vpop.permute.xlu0 %1981
    %1983 = vrot.lane.b32.xlu0 %v1967, 126
    %v1984 = vpop.permute.xlu0 %1983
    %1985 = vrot.lane.b32.xlu0 %v1969, 126
    %v1986 = vpop.permute.xlu0 %1985
    %1987 = vrot.lane.b32.xlu0 %v1972, 126
    %v1988 = vpop.permute.xlu0 %1987
    %1989 = vrot.lane.b32.xlu0 %v1974, 126
    %v1990 = vpop.permute.xlu0 %1989
    %v1999 = vadd.f32 %v1921, %v1976
    %v2000 = vadd.f32 %v1922, %v1978
    %v2001 = vadd.f32 %v1923, %v1980
    %v2002 = vadd.f32 %v1924, %v1982
    %v2003 = vadd.f32 %v1925, %v1984
    %v2004 = vadd.f32 %v1926, %v1986
    %v2005 = vadd.f32 %v1927, %v1988
    %v2006 = vadd.f32 %v1928, %v1990
    %s2007 = sld [smem:[#allocation4 + $0x2d]]
    %v2008 = vstv %s2007
    %v2009 = vmul.f32 %v2008, %v1441
    %v2010 = vmul.f32 %v2008, %v1442
    %v2011 = vmul.f32 %v2008, %v1444
    %v2012 = vmul.f32 %v2008, %v1445
    %v2013 = vmul.f32 %v2008, %v1447
    %v2014 = vmul.f32 %v2008, %v1448
    %v2015 = vmul.f32 %v2008, %v1450
    %v2016 = vmul.f32 %v2008, %v1451
    %v2017 = vadd.f32 %v1432, %v2009
    %v2018 = vadd.f32 %v1433, %v2010
    %v2019 = vadd.f32 %v1434, %v2011
    %v2020 = vadd.f32 %v1435, %v2012
    %v2021 = vadd.f32 %v1436, %v2013
    %v2022 = vadd.f32 %v1437, %v2014
    %v2023 = vadd.f32 %v1438, %v2015
    %v2024 = vadd.f32 %v1439, %v2016
    %s2025 = sld [smem:[#allocation4 + $0x2e]]
    %v2026 = vstv %s2025
    %v2027 = vmul.f32 %v2026, %v1441
    %v2028 = vmul.f32 %v2026, %v1442
    %v2029 = vmul.f32 %v2026, %v1444
    %v2030 = vmul.f32 %v2026, %v1445
    %v2031 = vmul.f32 %v2026, %v1447
    %v2032 = vmul.f32 %v2026, %v1448
    %v2033 = vmul.f32 %v2026, %v1450
    %v2034 = vmul.f32 %v2026, %v1451
    %2043 = vrot.lane.b32.xlu0 %v2027, 127
    %v2044 = vpop.permute.xlu0 %2043
    %2045 = vrot.lane.b32.xlu0 %v2028, 127
    %v2046 = vpop.permute.xlu0 %2045
    %2047 = vrot.lane.b32.xlu0 %v2029, 127
    %v2048 = vpop.permute.xlu0 %2047
    %2049 = vrot.lane.b32.xlu0 %v2030, 127
    %v2050 = vpop.permute.xlu0 %2049
    %2051 = vrot.lane.b32.xlu0 %v2031, 127
    %v2052 = vpop.permute.xlu0 %2051
    %2053 = vrot.lane.b32.xlu0 %v2032, 127
    %v2054 = vpop.permute.xlu0 %2053
    %2055 = vrot.lane.b32.xlu0 %v2033, 127
    %v2056 = vpop.permute.xlu0 %2055
    %2057 = vrot.lane.b32.xlu0 %v2034, 127
    %v2058 = vpop.permute.xlu0 %2057
    %v2067 = vadd.f32 %v2017, %v2044
    %v2068 = vadd.f32 %v2018, %v2046
    %v2069 = vadd.f32 %v2019, %v2048
    %v2070 = vadd.f32 %v2020, %v2050
    %v2071 = vadd.f32 %v2021, %v2052
    %v2072 = vadd.f32 %v2022, %v2054
    %v2073 = vadd.f32 %v2023, %v2056
    %v2074 = vadd.f32 %v2024, %v2058
    %s2075 = sld [smem:[#allocation4 + $0x2f]]
    %v2076 = vstv %s2075
    %v2077 = vmul.f32 %v2076, %v1441
    %v2078 = vmul.f32 %v2076, %v1442
    %v2079 = vmul.f32 %v2076, %v1444
    %v2080 = vmul.f32 %v2076, %v1445
    %v2081 = vmul.f32 %v2076, %v1447
    %v2082 = vmul.f32 %v2076, %v1448
    %v2083 = vmul.f32 %v2076, %v1450
    %v2084 = vmul.f32 %v2076, %v1451
    %2093 = vrot.lane.b32.xlu0 %v2077, 126
    %v2094 = vpop.permute.xlu0 %2093
    %2095 = vrot.lane.b32.xlu0 %v2078, 126
    %v2096 = vpop.permute.xlu0 %2095
    %2097 = vrot.lane.b32.xlu0 %v2079, 126
    %v2098 = vpop.permute.xlu0 %2097
    %2099 = vrot.lane.b32.xlu0 %v2080, 126
    %v2100 = vpop.permute.xlu0 %2099
    %2101 = vrot.lane.b32.xlu0 %v2081, 126
    %v2102 = vpop.permute.xlu0 %2101
    %2103 = vrot.lane.b32.xlu0 %v2082, 126
    %v2104 = vpop.permute.xlu0 %2103
    %2105 = vrot.lane.b32.xlu0 %v2083, 126
    %v2106 = vpop.permute.xlu0 %2105
    %2107 = vrot.lane.b32.xlu0 %v2084, 126
    %v2108 = vpop.permute.xlu0 %2107
    %v2117 = vadd.f32 %v2067, %v2094
    %v2118 = vadd.f32 %v2068, %v2096
    %v2119 = vadd.f32 %v2069, %v2098
    %v2120 = vadd.f32 %v2070, %v2100
    %v2121 = vadd.f32 %v2071, %v2102
    %v2122 = vadd.f32 %v2072, %v2104
    %v2123 = vadd.f32 %v2073, %v2106
    %v2124 = vadd.f32 %v2074, %v2108
    %s2125 = sld [smem:[#allocation4 + $0x30]]
    %v2126 = vstv %s2125
    %v2127 = vmul.f32 %v2126, %v1441
    %v2128 = vmul.f32 %v2126, %v1442
    %v2129 = vmul.f32 %v2126, %v1443
    %v2130 = vmul.f32 %v2126, %v1444
    %v2131 = vmul.f32 %v2126, %v1445
    %v2132 = vmul.f32 %v2126, %v1446
    %v2133 = vmul.f32 %v2126, %v1447
    %v2134 = vmul.f32 %v2126, %v1448
    %v2135 = vmul.f32 %v2126, %v1449
    %v2136 = vmul.f32 %v2126, %v1450
    %v2137 = vmul.f32 %v2126, %v1451
    %v2138 = vmul.f32 %v2126, %v1452
    %v2151 = vrot.slane %v2127, 1
    %v2152 = vrot.slane %v2128, 1
    %v2153 = vsel %vm474, %v2151, %v2152
    %v2154 = vrot.slane %v2129, 1
    %v2155 = vsel %vm474, %v2152, %v2154
    %v2156 = vrot.slane %v2130, 1
    %v2157 = vrot.slane %v2131, 1
    %v2158 = vsel %vm474, %v2156, %v2157
    %v2159 = vrot.slane %v2132, 1
    %v2160 = vsel %vm474, %v2157, %v2159
    %v2161 = vrot.slane %v2133, 1
    %v2162 = vrot.slane %v2134, 1
    %v2163 = vsel %vm474, %v2161, %v2162
    %v2164 = vrot.slane %v2135, 1
    %v2165 = vsel %vm474, %v2162, %v2164
    %v2166 = vrot.slane %v2136, 1
    %v2167 = vrot.slane %v2137, 1
    %v2168 = vsel %vm474, %v2166, %v2167
    %v2169 = vrot.slane %v2138, 1
    %v2170 = vsel %vm474, %v2167, %v2169
    %v2179 = vadd.f32 %v2117, %v2153
    %v2180 = vadd.f32 %v2118, %v2155
    %v2181 = vadd.f32 %v2119, %v2158
    %v2182 = vadd.f32 %v2120, %v2160
    %v2183 = vadd.f32 %v2121, %v2163
    %v2184 = vadd.f32 %v2122, %v2165
    %v2185 = vadd.f32 %v2123, %v2168
    %v2186 = vadd.f32 %v2124, %v2170
    %s2187 = sld [smem:[#allocation4 + $0x31]]
    %v2188 = vstv %s2187
    %v2189 = vmul.f32 %v2188, %v1441
    %v2190 = vmul.f32 %v2188, %v1442
    %v2191 = vmul.f32 %v2188, %v1443
    %v2192 = vmul.f32 %v2188, %v1444
    %v2193 = vmul.f32 %v2188, %v1445
    %v2194 = vmul.f32 %v2188, %v1446
    %v2195 = vmul.f32 %v2188, %v1447
    %v2196 = vmul.f32 %v2188, %v1448
    %v2197 = vmul.f32 %v2188, %v1449
    %v2198 = vmul.f32 %v2188, %v1450
    %v2199 = vmul.f32 %v2188, %v1451
    %v2200 = vmul.f32 %v2188, %v1452
    %v2213 = vrot.slane %v2189, 1
    %v2214 = vrot.slane %v2190, 1
    %v2215 = vsel %vm474, %v2213, %v2214
    %v2216 = vrot.slane %v2191, 1
    %v2217 = vsel %vm474, %v2214, %v2216
    %v2218 = vrot.slane %v2192, 1
    %v2219 = vrot.slane %v2193, 1
    %v2220 = vsel %vm474, %v2218, %v2219
    %v2221 = vrot.slane %v2194, 1
    %v2222 = vsel %vm474, %v2219, %v2221
    %v2223 = vrot.slane %v2195, 1
    %v2224 = vrot.slane %v2196, 1
    %v2225 = vsel %vm474, %v2223, %v2224
    %v2226 = vrot.slane %v2197, 1
    %v2227 = vsel %vm474, %v2224, %v2226
    %v2228 = vrot.slane %v2198, 1
    %v2229 = vrot.slane %v2199, 1
    %v2230 = vsel %vm474, %v2228, %v2229
    %v2231 = vrot.slane %v2200, 1
    %v2232 = vsel %vm474, %v2229, %v2231
    %2233 = vrot.lane.b32.xlu0 %v2215, 127
    %v2234 = vpop.permute.xlu0 %2233
    %2235 = vrot.lane.b32.xlu0 %v2217, 127
    %v2236 = vpop.permute.xlu0 %2235
    %2237 = vrot.lane.b32.xlu0 %v2220, 127
    %v2238 = vpop.permute.xlu0 %2237
    %2239 = vrot.lane.b32.xlu0 %v2222, 127
    %v2240 = vpop.permute.xlu0 %2239
    %2241 = vrot.lane.b32.xlu0 %v2225, 127
    %v2242 = vpop.permute.xlu0 %2241
    %2243 = vrot.lane.b32.xlu0 %v2227, 127
    %v2244 = vpop.permute.xlu0 %2243
    %2245 = vrot.lane.b32.xlu0 %v2230, 127
    %v2246 = vpop.permute.xlu0 %2245
    %2247 = vrot.lane.b32.xlu0 %v2232, 127
    %v2248 = vpop.permute.xlu0 %2247
    %v2257 = vadd.f32 %v2179, %v2234
    %v2258 = vadd.f32 %v2180, %v2236
    %v2259 = vadd.f32 %v2181, %v2238
    %v2260 = vadd.f32 %v2182, %v2240
    %v2261 = vadd.f32 %v2183, %v2242
    %v2262 = vadd.f32 %v2184, %v2244
    %v2263 = vadd.f32 %v2185, %v2246
    %v2264 = vadd.f32 %v2186, %v2248
    %s2265 = sld [smem:[#allocation4 + $0x32]]
    %v2266 = vstv %s2265
    %v2267 = vmul.f32 %v2266, %v1441
    %v2268 = vmul.f32 %v2266, %v1442
    %v2269 = vmul.f32 %v2266, %v1443
    %v2270 = vmul.f32 %v2266, %v1444
    %v2271 = vmul.f32 %v2266, %v1445
    %v2272 = vmul.f32 %v2266, %v1446
    %v2273 = vmul.f32 %v2266, %v1447
    %v2274 = vmul.f32 %v2266, %v1448
    %v2275 = vmul.f32 %v2266, %v1449
    %v2276 = vmul.f32 %v2266, %v1450
    %v2277 = vmul.f32 %v2266, %v1451
    %v2278 = vmul.f32 %v2266, %v1452
    %v2291 = vrot.slane %v2267, 1
    %v2292 = vrot.slane %v2268, 1
    %v2293 = vsel %vm474, %v2291, %v2292
    %v2294 = vrot.slane %v2269, 1
    %v2295 = vsel %vm474, %v2292, %v2294
    %v2296 = vrot.slane %v2270, 1
    %v2297 = vrot.slane %v2271, 1
    %v2298 = vsel %vm474, %v2296, %v2297
    %v2299 = vrot.slane %v2272, 1
    %v2300 = vsel %vm474, %v2297, %v2299
    %v2301 = vrot.slane %v2273, 1
    %v2302 = vrot.slane %v2274, 1
    %v2303 = vsel %vm474, %v2301, %v2302
    %v2304 = vrot.slane %v2275, 1
    %v2305 = vsel %vm474, %v2302, %v2304
    %v2306 = vrot.slane %v2276, 1
    %v2307 = vrot.slane %v2277, 1
    %v2308 = vsel %vm474, %v2306, %v2307
    %v2309 = vrot.slane %v2278, 1
    %v2310 = vsel %vm474, %v2307, %v2309
    %2311 = vrot.lane.b32.xlu0 %v2293, 126
    %v2312 = vpop.permute.xlu0 %2311
    %2313 = vrot.lane.b32.xlu0 %v2295, 126
    %v2314 = vpop.permute.xlu0 %2313
    %2315 = vrot.lane.b32.xlu0 %v2298, 126
    %v2316 = vpop.permute.xlu0 %2315
    %2317 = vrot.lane.b32.xlu0 %v2300, 126
    %v2318 = vpop.permute.xlu0 %2317
    %2319 = vrot.lane.b32.xlu0 %v2303, 126
    %v2320 = vpop.permute.xlu0 %2319
    %2321 = vrot.lane.b32.xlu0 %v2305, 126
    %v2322 = vpop.permute.xlu0 %2321
    %2323 = vrot.lane.b32.xlu0 %v2308, 126
    %v2324 = vpop.permute.xlu0 %2323
    %2325 = vrot.lane.b32.xlu0 %v2310, 126
    %v2326 = vpop.permute.xlu0 %2325
    %v2335 = vadd.f32 %v2257, %v2312
    %v2336 = vadd.f32 %v2258, %v2314
    %v2337 = vadd.f32 %v2259, %v2316
    %v2338 = vadd.f32 %v2260, %v2318
    %v2339 = vadd.f32 %v2261, %v2320
    %v2340 = vadd.f32 %v2262, %v2322
    %v2341 = vadd.f32 %v2263, %v2324
    %v2342 = vadd.f32 %v2264, %v2326
    %s2343 = sld [smem:[#allocation4 + $0x33]]
    %v2344 = vstv %s2343
    %v2345 = vmul.f32 %v2344, %v1441
    %v2346 = vmul.f32 %v2344, %v1442
    %v2347 = vmul.f32 %v2344, %v1443
    %v2348 = vmul.f32 %v2344, %v1444
    %v2349 = vmul.f32 %v2344, %v1445
    %v2350 = vmul.f32 %v2344, %v1446
    %v2351 = vmul.f32 %v2344, %v1447
    %v2352 = vmul.f32 %v2344, %v1448
    %v2353 = vmul.f32 %v2344, %v1449
    %v2354 = vmul.f32 %v2344, %v1450
    %v2355 = vmul.f32 %v2344, %v1451
    %v2356 = vmul.f32 %v2344, %v1452
    %v2369 = vrot.slane %v2345, 2
    %v2370 = vrot.slane %v2346, 2
    %v2371 = vsel %vm693, %v2369, %v2370
    %v2372 = vrot.slane %v2347, 2
    %v2373 = vsel %vm693, %v2370, %v2372
    %v2374 = vrot.slane %v2348, 2
    %v2375 = vrot.slane %v2349, 2
    %v2376 = vsel %vm693, %v2374, %v2375
    %v2377 = vrot.slane %v2350, 2
    %v2378 = vsel %vm693, %v2375, %v2377
    %v2379 = vrot.slane %v2351, 2
    %v2380 = vrot.slane %v2352, 2
    %v2381 = vsel %vm693, %v2379, %v2380
    %v2382 = vrot.slane %v2353, 2
    %v2383 = vsel %vm693, %v2380, %v2382
    %v2384 = vrot.slane %v2354, 2
    %v2385 = vrot.slane %v2355, 2
    %v2386 = vsel %vm693, %v2384, %v2385
    %v2387 = vrot.slane %v2356, 2
    %v2388 = vsel %vm693, %v2385, %v2387
    %v2397 = vadd.f32 %v2335, %v2371
    %v2398 = vadd.f32 %v2336, %v2373
    %v2399 = vadd.f32 %v2337, %v2376
    %v2400 = vadd.f32 %v2338, %v2378
    %v2401 = vadd.f32 %v2339, %v2381
    %v2402 = vadd.f32 %v2340, %v2383
    %v2403 = vadd.f32 %v2341, %v2386
    %v2404 = vadd.f32 %v2342, %v2388
    %s2405 = sld [smem:[#allocation4 + $0x34]]
    %v2406 = vstv %s2405
    %v2407 = vmul.f32 %v2406, %v1441
    %v2408 = vmul.f32 %v2406, %v1442
    %v2409 = vmul.f32 %v2406, %v1443
    %v2410 = vmul.f32 %v2406, %v1444
    %v2411 = vmul.f32 %v2406, %v1445
    %v2412 = vmul.f32 %v2406, %v1446
    %v2413 = vmul.f32 %v2406, %v1447
    %v2414 = vmul.f32 %v2406, %v1448
    %v2415 = vmul.f32 %v2406, %v1449
    %v2416 = vmul.f32 %v2406, %v1450
    %v2417 = vmul.f32 %v2406, %v1451
    %v2418 = vmul.f32 %v2406, %v1452
    %v2431 = vrot.slane %v2407, 2
    %v2432 = vrot.slane %v2408, 2
    %v2433 = vsel %vm693, %v2431, %v2432
    %v2434 = vrot.slane %v2409, 2
    %v2435 = vsel %vm693, %v2432, %v2434
    %v2436 = vrot.slane %v2410, 2
    %v2437 = vrot.slane %v2411, 2
    %v2438 = vsel %vm693, %v2436, %v2437
    %v2439 = vrot.slane %v2412, 2
    %v2440 = vsel %vm693, %v2437, %v2439
    %v2441 = vrot.slane %v2413, 2
    %v2442 = vrot.slane %v2414, 2
    %v2443 = vsel %vm693, %v2441, %v2442
    %v2444 = vrot.slane %v2415, 2
    %v2445 = vsel %vm693, %v2442, %v2444
    %v2446 = vrot.slane %v2416, 2
    %v2447 = vrot.slane %v2417, 2
    %v2448 = vsel %vm693, %v2446, %v2447
    %v2449 = vrot.slane %v2418, 2
    %v2450 = vsel %vm693, %v2447, %v2449
    %2451 = vrot.lane.b32.xlu0 %v2433, 127
    %v2452 = vpop.permute.xlu0 %2451
    %2453 = vrot.lane.b32.xlu0 %v2435, 127
    %v2454 = vpop.permute.xlu0 %2453
    %2455 = vrot.lane.b32.xlu0 %v2438, 127
    %v2456 = vpop.permute.xlu0 %2455
    %2457 = vrot.lane.b32.xlu0 %v2440, 127
    %v2458 = vpop.permute.xlu0 %2457
    %2459 = vrot.lane.b32.xlu0 %v2443, 127
    %v2460 = vpop.permute.xlu0 %2459
    %2461 = vrot.lane.b32.xlu0 %v2445, 127
    %v2462 = vpop.permute.xlu0 %2461
    %2463 = vrot.lane.b32.xlu0 %v2448, 127
    %v2464 = vpop.permute.xlu0 %2463
    %2465 = vrot.lane.b32.xlu0 %v2450, 127
    %v2466 = vpop.permute.xlu0 %2465
    %v2475 = vadd.f32 %v2397, %v2452
    %v2476 = vadd.f32 %v2398, %v2454
    %v2477 = vadd.f32 %v2399, %v2456
    %v2478 = vadd.f32 %v2400, %v2458
    %v2479 = vadd.f32 %v2401, %v2460
    %v2480 = vadd.f32 %v2402, %v2462
    %v2481 = vadd.f32 %v2403, %v2464
    %v2482 = vadd.f32 %v2404, %v2466
    %s2483 = sld [smem:[#allocation4 + $0x35]]
    %v2484 = vstv %s2483
    %v2485 = vmul.f32 %v2484, %v1441
    %v2486 = vmul.f32 %v2484, %v1442
    %v2487 = vmul.f32 %v2484, %v1443
    %v2488 = vmul.f32 %v2484, %v1444
    %v2489 = vmul.f32 %v2484, %v1445
    %v2490 = vmul.f32 %v2484, %v1446
    %v2491 = vmul.f32 %v2484, %v1447
    %v2492 = vmul.f32 %v2484, %v1448
    %v2493 = vmul.f32 %v2484, %v1449
    %v2494 = vmul.f32 %v2484, %v1450
    %v2495 = vmul.f32 %v2484, %v1451
    %v2496 = vmul.f32 %v2484, %v1452
    %v2509 = vrot.slane %v2485, 2
    %v2510 = vrot.slane %v2486, 2
    %v2511 = vsel %vm693, %v2509, %v2510
    %v2512 = vrot.slane %v2487, 2
    %v2513 = vsel %vm693, %v2510, %v2512
    %v2514 = vrot.slane %v2488, 2
    %v2515 = vrot.slane %v2489, 2
    %v2516 = vsel %vm693, %v2514, %v2515
    %v2517 = vrot.slane %v2490, 2
    %v2518 = vsel %vm693, %v2515, %v2517
    %v2519 = vrot.slane %v2491, 2
    %v2520 = vrot.slane %v2492, 2
    %v2521 = vsel %vm693, %v2519, %v2520
    %v2522 = vrot.slane %v2493, 2
    %v2523 = vsel %vm693, %v2520, %v2522
    %v2524 = vrot.slane %v2494, 2
    %v2525 = vrot.slane %v2495, 2
    %v2526 = vsel %vm693, %v2524, %v2525
    %v2527 = vrot.slane %v2496, 2
    %v2528 = vsel %vm693, %v2525, %v2527
    %2529 = vrot.lane.b32.xlu0 %v2511, 126
    %v2530 = vpop.permute.xlu0 %2529
    %2531 = vrot.lane.b32.xlu0 %v2513, 126
    %v2532 = vpop.permute.xlu0 %2531
    %2533 = vrot.lane.b32.xlu0 %v2516, 126
    %v2534 = vpop.permute.xlu0 %2533
    %2535 = vrot.lane.b32.xlu0 %v2518, 126
    %v2536 = vpop.permute.xlu0 %2535
    %2537 = vrot.lane.b32.xlu0 %v2521, 126
    %v2538 = vpop.permute.xlu0 %2537
    %2539 = vrot.lane.b32.xlu0 %v2523, 126
    %v2540 = vpop.permute.xlu0 %2539
    %2541 = vrot.lane.b32.xlu0 %v2526, 126
    %v2542 = vpop.permute.xlu0 %2541
    %2543 = vrot.lane.b32.xlu0 %v2528, 126
    %v2544 = vpop.permute.xlu0 %2543
    %v2553 = vadd.f32 %v2475, %v2530
    %v2554 = vadd.f32 %v2476, %v2532
    %v2555 = vadd.f32 %v2477, %v2534
    %v2556 = vadd.f32 %v2478, %v2536
    %v2557 = vadd.f32 %v2479, %v2538
    %v2558 = vadd.f32 %v2480, %v2540
    %v2559 = vadd.f32 %v2481, %v2542
    %v2560 = vadd.f32 %v2482, %v2544
    %s2561 = scalar_lea.vmem [#allocation2], 48
    %v2562 = vld [vmem:[%s2561] sm:$0xff]
    %v2563 = vld [vmem:[%s2561 + $0x8] sm:$0xff]
    %v2564 = vld [vmem:[%s2561 + $0x10] sm:$0x3]
    %v2565 = vld [vmem:[%s2561 + $0x60] sm:$0xff]
    %v2566 = vld [vmem:[%s2561 + $0x68] sm:$0xff]
    %v2567 = vld [vmem:[%s2561 + $0x70] sm:$0x3]
    %v2568 = vld [vmem:[%s2561 + $0xc0] sm:$0xff]
    %v2569 = vld [vmem:[%s2561 + $0xc8] sm:$0xff]
    %v2570 = vld [vmem:[%s2561 + $0xd0] sm:$0x3]
    %v2571 = vld [vmem:[%s2561 + $0x120] sm:$0xff]
    %v2572 = vld [vmem:[%s2561 + $0x128] sm:$0xff]
    %v2573 = vld [vmem:[%s2561 + $0x130] sm:$0x3]
    %s2574 = sld [smem:[#allocation4 + $0x12]]
    %v2575 = vstv %s2574
    %v2576 = vmul.f32 %v2575, %v2562
    %v2577 = vmul.f32 %v2575, %v2563
    %v2578 = vmul.f32 %v2575, %v2565
    %v2579 = vmul.f32 %v2575, %v2566
    %v2580 = vmul.f32 %v2575, %v2568
    %v2581 = vmul.f32 %v2575, %v2569
    %v2582 = vmul.f32 %v2575, %v2571
    %v2583 = vmul.f32 %v2575, %v2572
    %v2584 = vadd.f32 %v1999, %v2576
    %v2585 = vadd.f32 %v2000, %v2577
    %v2586 = vadd.f32 %v2001, %v2578
    %v2587 = vadd.f32 %v2002, %v2579
    %v2588 = vadd.f32 %v2003, %v2580
    %v2589 = vadd.f32 %v2004, %v2581
    %v2590 = vadd.f32 %v2005, %v2582
    %v2591 = vadd.f32 %v2006, %v2583
    %s2592 = sld [smem:[#allocation4 + $0x13]]
    %v2593 = vstv %s2592
    %v2594 = vmul.f32 %v2593, %v2562
    %v2595 = vmul.f32 %v2593, %v2563
    %v2596 = vmul.f32 %v2593, %v2565
    %v2597 = vmul.f32 %v2593, %v2566
    %v2598 = vmul.f32 %v2593, %v2568
    %v2599 = vmul.f32 %v2593, %v2569
    %v2600 = vmul.f32 %v2593, %v2571
    %v2601 = vmul.f32 %v2593, %v2572
    %2610 = vrot.lane.b32.xlu0 %v2594, 127
    %v2611 = vpop.permute.xlu0 %2610
    %2612 = vrot.lane.b32.xlu0 %v2595, 127
    %v2613 = vpop.permute.xlu0 %2612
    %2614 = vrot.lane.b32.xlu0 %v2596, 127
    %v2615 = vpop.permute.xlu0 %2614
    %2616 = vrot.lane.b32.xlu0 %v2597, 127
    %v2617 = vpop.permute.xlu0 %2616
    %2618 = vrot.lane.b32.xlu0 %v2598, 127
    %v2619 = vpop.permute.xlu0 %2618
    %2620 = vrot.lane.b32.xlu0 %v2599, 127
    %v2621 = vpop.permute.xlu0 %2620
    %2622 = vrot.lane.b32.xlu0 %v2600, 127
    %v2623 = vpop.permute.xlu0 %2622
    %2624 = vrot.lane.b32.xlu0 %v2601, 127
    %v2625 = vpop.permute.xlu0 %2624
    %v2634 = vadd.f32 %v2584, %v2611
    %v2635 = vadd.f32 %v2585, %v2613
    %v2636 = vadd.f32 %v2586, %v2615
    %v2637 = vadd.f32 %v2587, %v2617
    %v2638 = vadd.f32 %v2588, %v2619
    %v2639 = vadd.f32 %v2589, %v2621
    %v2640 = vadd.f32 %v2590, %v2623
    %v2641 = vadd.f32 %v2591, %v2625
    %s2642 = sld [smem:[#allocation4 + $0x14]]
    %v2643 = vstv %s2642
    %v2644 = vmul.f32 %v2643, %v2562
    %v2645 = vmul.f32 %v2643, %v2563
    %v2646 = vmul.f32 %v2643, %v2565
    %v2647 = vmul.f32 %v2643, %v2566
    %v2648 = vmul.f32 %v2643, %v2568
    %v2649 = vmul.f32 %v2643, %v2569
    %v2650 = vmul.f32 %v2643, %v2571
    %v2651 = vmul.f32 %v2643, %v2572
    %2660 = vrot.lane.b32.xlu0 %v2644, 126
    %v2661 = vpop.permute.xlu0 %2660
    %2662 = vrot.lane.b32.xlu0 %v2645, 126
    %v2663 = vpop.permute.xlu0 %2662
    %2664 = vrot.lane.b32.xlu0 %v2646, 126
    %v2665 = vpop.permute.xlu0 %2664
    %2666 = vrot.lane.b32.xlu0 %v2647, 126
    %v2667 = vpop.permute.xlu0 %2666
    %2668 = vrot.lane.b32.xlu0 %v2648, 126
    %v2669 = vpop.permute.xlu0 %2668
    %2670 = vrot.lane.b32.xlu0 %v2649, 126
    %v2671 = vpop.permute.xlu0 %2670
    %2672 = vrot.lane.b32.xlu0 %v2650, 126
    %v2673 = vpop.permute.xlu0 %2672
    %2674 = vrot.lane.b32.xlu0 %v2651, 126
    %v2675 = vpop.permute.xlu0 %2674
    %v2684 = vadd.f32 %v2634, %v2661
    %v2685 = vadd.f32 %v2635, %v2663
    %v2686 = vadd.f32 %v2636, %v2665
    %v2687 = vadd.f32 %v2637, %v2667
    %v2688 = vadd.f32 %v2638, %v2669
    %v2689 = vadd.f32 %v2639, %v2671
    %v2690 = vadd.f32 %v2640, %v2673
    %v2691 = vadd.f32 %v2641, %v2675
    %s2692 = sld [smem:[#allocation4 + $0x15]]
    %v2693 = vstv %s2692
    %v2694 = vmul.f32 %v2693, %v2562
    %v2695 = vmul.f32 %v2693, %v2563
    %v2696 = vmul.f32 %v2693, %v2564
    %v2697 = vmul.f32 %v2693, %v2565
    %v2698 = vmul.f32 %v2693, %v2566
    %v2699 = vmul.f32 %v2693, %v2567
    %v2700 = vmul.f32 %v2693, %v2568
    %v2701 = vmul.f32 %v2693, %v2569
    %v2702 = vmul.f32 %v2693, %v2570
    %v2703 = vmul.f32 %v2693, %v2571
    %v2704 = vmul.f32 %v2693, %v2572
    %v2705 = vmul.f32 %v2693, %v2573
    %v2718 = vrot.slane %v2694, 1
    %v2719 = vrot.slane %v2695, 1
    %v2720 = vsel %vm474, %v2718, %v2719
    %v2721 = vrot.slane %v2696, 1
    %v2722 = vsel %vm474, %v2719, %v2721
    %v2723 = vrot.slane %v2697, 1
    %v2724 = vrot.slane %v2698, 1
    %v2725 = vsel %vm474, %v2723, %v2724
    %v2726 = vrot.slane %v2699, 1
    %v2727 = vsel %vm474, %v2724, %v2726
    %v2728 = vrot.slane %v2700, 1
    %v2729 = vrot.slane %v2701, 1
    %v2730 = vsel %vm474, %v2728, %v2729
    %v2731 = vrot.slane %v2702, 1
    %v2732 = vsel %vm474, %v2729, %v2731
    %v2733 = vrot.slane %v2703, 1
    %v2734 = vrot.slane %v2704, 1
    %v2735 = vsel %vm474, %v2733, %v2734
    %v2736 = vrot.slane %v2705, 1
    %v2737 = vsel %vm474, %v2734, %v2736
    %v2746 = vadd.f32 %v2684, %v2720
    %v2747 = vadd.f32 %v2685, %v2722
    %v2748 = vadd.f32 %v2686, %v2725
    %v2749 = vadd.f32 %v2687, %v2727
    %v2750 = vadd.f32 %v2688, %v2730
    %v2751 = vadd.f32 %v2689, %v2732
    %v2752 = vadd.f32 %v2690, %v2735
    %v2753 = vadd.f32 %v2691, %v2737
    %s2754 = sld [smem:[#allocation4 + $0x16]]
    %v2755 = vstv %s2754
    %v2756 = vmul.f32 %v2755, %v2562
    %v2757 = vmul.f32 %v2755, %v2563
    %v2758 = vmul.f32 %v2755, %v2564
    %v2759 = vmul.f32 %v2755, %v2565
    %v2760 = vmul.f32 %v2755, %v2566
    %v2761 = vmul.f32 %v2755, %v2567
    %v2762 = vmul.f32 %v2755, %v2568
    %v2763 = vmul.f32 %v2755, %v2569
    %v2764 = vmul.f32 %v2755, %v2570
    %v2765 = vmul.f32 %v2755, %v2571
    %v2766 = vmul.f32 %v2755, %v2572
    %v2767 = vmul.f32 %v2755, %v2573
    %v2780 = vrot.slane %v2756, 1
    %v2781 = vrot.slane %v2757, 1
    %v2782 = vsel %vm474, %v2780, %v2781
    %v2783 = vrot.slane %v2758, 1
    %v2784 = vsel %vm474, %v2781, %v2783
    %v2785 = vrot.slane %v2759, 1
    %v2786 = vrot.slane %v2760, 1
    %v2787 = vsel %vm474, %v2785, %v2786
    %v2788 = vrot.slane %v2761, 1
    %v2789 = vsel %vm474, %v2786, %v2788
    %v2790 = vrot.slane %v2762, 1
    %v2791 = vrot.slane %v2763, 1
    %v2792 = vsel %vm474, %v2790, %v2791
    %v2793 = vrot.slane %v2764, 1
    %v2794 = vsel %vm474, %v2791, %v2793
    %v2795 = vrot.slane %v2765, 1
    %v2796 = vrot.slane %v2766, 1
    %v2797 = vsel %vm474, %v2795, %v2796
    %v2798 = vrot.slane %v2767, 1
    %v2799 = vsel %vm474, %v2796, %v2798
    %2800 = vrot.lane.b32.xlu0 %v2782, 127
    %v2801 = vpop.permute.xlu0 %2800
    %2802 = vrot.lane.b32.xlu0 %v2784, 127
    %v2803 = vpop.permute.xlu0 %2802
    %2804 = vrot.lane.b32.xlu0 %v2787, 127
    %v2805 = vpop.permute.xlu0 %2804
    %2806 = vrot.lane.b32.xlu0 %v2789, 127
    %v2807 = vpop.permute.xlu0 %2806
    %2808 = vrot.lane.b32.xlu0 %v2792, 127
    %v2809 = vpop.permute.xlu0 %2808
    %2810 = vrot.lane.b32.xlu0 %v2794, 127
    %v2811 = vpop.permute.xlu0 %2810
    %2812 = vrot.lane.b32.xlu0 %v2797, 127
    %v2813 = vpop.permute.xlu0 %2812
    %2814 = vrot.lane.b32.xlu0 %v2799, 127
    %v2815 = vpop.permute.xlu0 %2814
    %v2824 = vadd.f32 %v2746, %v2801
    %v2825 = vadd.f32 %v2747, %v2803
    %v2826 = vadd.f32 %v2748, %v2805
    %v2827 = vadd.f32 %v2749, %v2807
    %v2828 = vadd.f32 %v2750, %v2809
    %v2829 = vadd.f32 %v2751, %v2811
    %v2830 = vadd.f32 %v2752, %v2813
    %v2831 = vadd.f32 %v2753, %v2815
    %s2832 = sld [smem:[#allocation4 + $0x17]]
    %v2833 = vstv %s2832
    %v2834 = vmul.f32 %v2833, %v2562
    %v2835 = vmul.f32 %v2833, %v2563
    %v2836 = vmul.f32 %v2833, %v2564
    %v2837 = vmul.f32 %v2833, %v2565
    %v2838 = vmul.f32 %v2833, %v2566
    %v2839 = vmul.f32 %v2833, %v2567
    %v2840 = vmul.f32 %v2833, %v2568
    %v2841 = vmul.f32 %v2833, %v2569
    %v2842 = vmul.f32 %v2833, %v2570
    %v2843 = vmul.f32 %v2833, %v2571
    %v2844 = vmul.f32 %v2833, %v2572
    %v2845 = vmul.f32 %v2833, %v2573
    %v2858 = vrot.slane %v2834, 1
    %v2859 = vrot.slane %v2835, 1
    %v2860 = vsel %vm474, %v2858, %v2859
    %v2861 = vrot.slane %v2836, 1
    %v2862 = vsel %vm474, %v2859, %v2861
    %v2863 = vrot.slane %v2837, 1
    %v2864 = vrot.slane %v2838, 1
    %v2865 = vsel %vm474, %v2863, %v2864
    %v2866 = vrot.slane %v2839, 1
    %v2867 = vsel %vm474, %v2864, %v2866
    %v2868 = vrot.slane %v2840, 1
    %v2869 = vrot.slane %v2841, 1
    %v2870 = vsel %vm474, %v2868, %v2869
    %v2871 = vrot.slane %v2842, 1
    %v2872 = vsel %vm474, %v2869, %v2871
    %v2873 = vrot.slane %v2843, 1
    %v2874 = vrot.slane %v2844, 1
    %v2875 = vsel %vm474, %v2873, %v2874
    %v2876 = vrot.slane %v2845, 1
    %v2877 = vsel %vm474, %v2874, %v2876
    %2878 = vrot.lane.b32.xlu0 %v2860, 126
    %v2879 = vpop.permute.xlu0 %2878
    %2880 = vrot.lane.b32.xlu0 %v2862, 126
    %v2881 = vpop.permute.xlu0 %2880
    %2882 = vrot.lane.b32.xlu0 %v2865, 126
    %v2883 = vpop.permute.xlu0 %2882
    %2884 = vrot.lane.b32.xlu0 %v2867, 126
    %v2885 = vpop.permute.xlu0 %2884
    %2886 = vrot.lane.b32.xlu0 %v2870, 126
    %v2887 = vpop.permute.xlu0 %2886
    %2888 = vrot.lane.b32.xlu0 %v2872, 126
    %v2889 = vpop.permute.xlu0 %2888
    %2890 = vrot.lane.b32.xlu0 %v2875, 126
    %v2891 = vpop.permute.xlu0 %2890
    %2892 = vrot.lane.b32.xlu0 %v2877, 126
    %v2893 = vpop.permute.xlu0 %2892
    %v2902 = vadd.f32 %v2824, %v2879
    %v2903 = vadd.f32 %v2825, %v2881
    %v2904 = vadd.f32 %v2826, %v2883
    %v2905 = vadd.f32 %v2827, %v2885
    %v2906 = vadd.f32 %v2828, %v2887
    %v2907 = vadd.f32 %v2829, %v2889
    %v2908 = vadd.f32 %v2830, %v2891
    %v2909 = vadd.f32 %v2831, %v2893
    %s2910 = sld [smem:[#allocation4 + $0x18]]
    %v2911 = vstv %s2910
    %v2912 = vmul.f32 %v2911, %v2562
    %v2913 = vmul.f32 %v2911, %v2563
    %v2914 = vmul.f32 %v2911, %v2564
    %v2915 = vmul.f32 %v2911, %v2565
    %v2916 = vmul.f32 %v2911, %v2566
    %v2917 = vmul.f32 %v2911, %v2567
    %v2918 = vmul.f32 %v2911, %v2568
    %v2919 = vmul.f32 %v2911, %v2569
    %v2920 = vmul.f32 %v2911, %v2570
    %v2921 = vmul.f32 %v2911, %v2571
    %v2922 = vmul.f32 %v2911, %v2572
    %v2923 = vmul.f32 %v2911, %v2573
    %v2936 = vrot.slane %v2912, 2
    %v2937 = vrot.slane %v2913, 2
    %v2938 = vsel %vm693, %v2936, %v2937
    %v2939 = vrot.slane %v2914, 2
    %v2940 = vsel %vm693, %v2937, %v2939
    %v2941 = vrot.slane %v2915, 2
    %v2942 = vrot.slane %v2916, 2
    %v2943 = vsel %vm693, %v2941, %v2942
    %v2944 = vrot.slane %v2917, 2
    %v2945 = vsel %vm693, %v2942, %v2944
    %v2946 = vrot.slane %v2918, 2
    %v2947 = vrot.slane %v2919, 2
    %v2948 = vsel %vm693, %v2946, %v2947
    %v2949 = vrot.slane %v2920, 2
    %v2950 = vsel %vm693, %v2947, %v2949
    %v2951 = vrot.slane %v2921, 2
    %v2952 = vrot.slane %v2922, 2
    %v2953 = vsel %vm693, %v2951, %v2952
    %v2954 = vrot.slane %v2923, 2
    %v2955 = vsel %vm693, %v2952, %v2954
    %v2964 = vadd.f32 %v2902, %v2938
    %v2965 = vadd.f32 %v2903, %v2940
    %v2966 = vadd.f32 %v2904, %v2943
    %v2967 = vadd.f32 %v2905, %v2945
    %v2968 = vadd.f32 %v2906, %v2948
    %v2969 = vadd.f32 %v2907, %v2950
    %v2970 = vadd.f32 %v2908, %v2953
    %v2971 = vadd.f32 %v2909, %v2955
    %s2972 = sld [smem:[#allocation4 + $0x19]]
    %v2973 = vstv %s2972
    %v2974 = vmul.f32 %v2973, %v2562
    %v2975 = vmul.f32 %v2973, %v2563
    %v2976 = vmul.f32 %v2973, %v2564
    %v2977 = vmul.f32 %v2973, %v2565
    %v2978 = vmul.f32 %v2973, %v2566
    %v2979 = vmul.f32 %v2973, %v2567
    %v2980 = vmul.f32 %v2973, %v2568
    %v2981 = vmul.f32 %v2973, %v2569
    %v2982 = vmul.f32 %v2973, %v2570
    %v2983 = vmul.f32 %v2973, %v2571
    %v2984 = vmul.f32 %v2973, %v2572
    %v2985 = vmul.f32 %v2973, %v2573
    %v2998 = vrot.slane %v2974, 2
    %v2999 = vrot.slane %v2975, 2
    %v3000 = vsel %vm693, %v2998, %v2999
    %v3001 = vrot.slane %v2976, 2
    %v3002 = vsel %vm693, %v2999, %v3001
    %v3003 = vrot.slane %v2977, 2
    %v3004 = vrot.slane %v2978, 2
    %v3005 = vsel %vm693, %v3003, %v3004
    %v3006 = vrot.slane %v2979, 2
    %v3007 = vsel %vm693, %v3004, %v3006
    %v3008 = vrot.slane %v2980, 2
    %v3009 = vrot.slane %v2981, 2
    %v3010 = vsel %vm693, %v3008, %v3009
    %v3011 = vrot.slane %v2982, 2
    %v3012 = vsel %vm693, %v3009, %v3011
    %v3013 = vrot.slane %v2983, 2
    %v3014 = vrot.slane %v2984, 2
    %v3015 = vsel %vm693, %v3013, %v3014
    %v3016 = vrot.slane %v2985, 2
    %v3017 = vsel %vm693, %v3014, %v3016
    %3018 = vrot.lane.b32.xlu0 %v3000, 127
    %v3019 = vpop.permute.xlu0 %3018
    %3020 = vrot.lane.b32.xlu0 %v3002, 127
    %v3021 = vpop.permute.xlu0 %3020
    %3022 = vrot.lane.b32.xlu0 %v3005, 127
    %v3023 = vpop.permute.xlu0 %3022
    %3024 = vrot.lane.b32.xlu0 %v3007, 127
    %v3025 = vpop.permute.xlu0 %3024
    %3026 = vrot.lane.b32.xlu0 %v3010, 127
    %v3027 = vpop.permute.xlu0 %3026
    %3028 = vrot.lane.b32.xlu0 %v3012, 127
    %v3029 = vpop.permute.xlu0 %3028
    %3030 = vrot.lane.b32.xlu0 %v3015, 127
    %v3031 = vpop.permute.xlu0 %3030
    %3032 = vrot.lane.b32.xlu0 %v3017, 127
    %v3033 = vpop.permute.xlu0 %3032
    %v3042 = vadd.f32 %v2964, %v3019
    %v3043 = vadd.f32 %v2965, %v3021
    %v3044 = vadd.f32 %v2966, %v3023
    %v3045 = vadd.f32 %v2967, %v3025
    %v3046 = vadd.f32 %v2968, %v3027
    %v3047 = vadd.f32 %v2969, %v3029
    %v3048 = vadd.f32 %v2970, %v3031
    %v3049 = vadd.f32 %v2971, %v3033
    %s3050 = sld [smem:[#allocation4 + $0x1a]]
    %v3051 = vstv %s3050
    %v3052 = vmul.f32 %v3051, %v2562
    %v3053 = vmul.f32 %v3051, %v2563
    %v3054 = vmul.f32 %v3051, %v2564
    %v3055 = vmul.f32 %v3051, %v2565
    %v3056 = vmul.f32 %v3051, %v2566
    %v3057 = vmul.f32 %v3051, %v2567
    %v3058 = vmul.f32 %v3051, %v2568
    %v3059 = vmul.f32 %v3051, %v2569
    %v3060 = vmul.f32 %v3051, %v2570
    %v3061 = vmul.f32 %v3051, %v2571
    %v3062 = vmul.f32 %v3051, %v2572
    %v3063 = vmul.f32 %v3051, %v2573
    %v3076 = vrot.slane %v3052, 2
    %v3077 = vrot.slane %v3053, 2
    %v3078 = vsel %vm693, %v3076, %v3077
    %v3079 = vrot.slane %v3054, 2
    %v3080 = vsel %vm693, %v3077, %v3079
    %v3081 = vrot.slane %v3055, 2
    %v3082 = vrot.slane %v3056, 2
    %v3083 = vsel %vm693, %v3081, %v3082
    %v3084 = vrot.slane %v3057, 2
    %v3085 = vsel %vm693, %v3082, %v3084
    %v3086 = vrot.slane %v3058, 2
    %v3087 = vrot.slane %v3059, 2
    %v3088 = vsel %vm693, %v3086, %v3087
    %v3089 = vrot.slane %v3060, 2
    %v3090 = vsel %vm693, %v3087, %v3089
    %v3091 = vrot.slane %v3061, 2
    %v3092 = vrot.slane %v3062, 2
    %v3093 = vsel %vm693, %v3091, %v3092
    %v3094 = vrot.slane %v3063, 2
    %v3095 = vsel %vm693, %v3092, %v3094
    %3096 = vrot.lane.b32.xlu0 %v3078, 126
    %v3097 = vpop.permute.xlu0 %3096
    %3098 = vrot.lane.b32.xlu0 %v3080, 126
    %v3099 = vpop.permute.xlu0 %3098
    %3100 = vrot.lane.b32.xlu0 %v3083, 126
    %v3101 = vpop.permute.xlu0 %3100
    %3102 = vrot.lane.b32.xlu0 %v3085, 126
    %v3103 = vpop.permute.xlu0 %3102
    %3104 = vrot.lane.b32.xlu0 %v3088, 126
    %v3105 = vpop.permute.xlu0 %3104
    %3106 = vrot.lane.b32.xlu0 %v3090, 126
    %v3107 = vpop.permute.xlu0 %3106
    %3108 = vrot.lane.b32.xlu0 %v3093, 126
    %v3109 = vpop.permute.xlu0 %3108
    %3110 = vrot.lane.b32.xlu0 %v3095, 126
    %v3111 = vpop.permute.xlu0 %3110
    %v3120 = vadd.f32 %v3042, %v3097
    %v3121 = vadd.f32 %v3043, %v3099
    %v3122 = vadd.f32 %v3044, %v3101
    %v3123 = vadd.f32 %v3045, %v3103
    %v3124 = vadd.f32 %v3046, %v3105
    %v3125 = vadd.f32 %v3047, %v3107
    %v3126 = vadd.f32 %v3048, %v3109
    %v3127 = vadd.f32 %v3049, %v3111
    %s3128 = sld [smem:[#allocation4 + $0x36]]
    %v3129 = vstv %s3128
    %v3130 = vmul.f32 %v3129, %v2562
    %v3131 = vmul.f32 %v3129, %v2563
    %v3132 = vmul.f32 %v3129, %v2565
    %v3133 = vmul.f32 %v3129, %v2566
    %v3134 = vmul.f32 %v3129, %v2568
    %v3135 = vmul.f32 %v3129, %v2569
    %v3136 = vmul.f32 %v3129, %v2571
    %v3137 = vmul.f32 %v3129, %v2572
    %v3138 = vadd.f32 %v2553, %v3130
    %v3139 = vadd.f32 %v2554, %v3131
    %v3140 = vadd.f32 %v2555, %v3132
    %v3141 = vadd.f32 %v2556, %v3133
    %v3142 = vadd.f32 %v2557, %v3134
    %v3143 = vadd.f32 %v2558, %v3135
    %v3144 = vadd.f32 %v2559, %v3136
    %v3145 = vadd.f32 %v2560, %v3137
    %s3146 = sld [smem:[#allocation4 + $0x37]]
    %v3147 = vstv %s3146
    %v3148 = vmul.f32 %v3147, %v2562
    %v3149 = vmul.f32 %v3147, %v2563
    %v3150 = vmul.f32 %v3147, %v2565
    %v3151 = vmul.f32 %v3147, %v2566
    %v3152 = vmul.f32 %v3147, %v2568
    %v3153 = vmul.f32 %v3147, %v2569
    %v3154 = vmul.f32 %v3147, %v2571
    %v3155 = vmul.f32 %v3147, %v2572
    %3164 = vrot.lane.b32.xlu0 %v3148, 127
    %v3165 = vpop.permute.xlu0 %3164
    %3166 = vrot.lane.b32.xlu0 %v3149, 127
    %v3167 = vpop.permute.xlu0 %3166
    %3168 = vrot.lane.b32.xlu0 %v3150, 127
    %v3169 = vpop.permute.xlu0 %3168
    %3170 = vrot.lane.b32.xlu0 %v3151, 127
    %v3171 = vpop.permute.xlu0 %3170
    %3172 = vrot.lane.b32.xlu0 %v3152, 127
    %v3173 = vpop.permute.xlu0 %3172
    %3174 = vrot.lane.b32.xlu0 %v3153, 127
    %v3175 = vpop.permute.xlu0 %3174
    %3176 = vrot.lane.b32.xlu0 %v3154, 127
    %v3177 = vpop.permute.xlu0 %3176
    %3178 = vrot.lane.b32.xlu0 %v3155, 127
    %v3179 = vpop.permute.xlu0 %3178
    %v3188 = vadd.f32 %v3138, %v3165
    %v3189 = vadd.f32 %v3139, %v3167
    %v3190 = vadd.f32 %v3140, %v3169
    %v3191 = vadd.f32 %v3141, %v3171
    %v3192 = vadd.f32 %v3142, %v3173
    %v3193 = vadd.f32 %v3143, %v3175
    %v3194 = vadd.f32 %v3144, %v3177
    %v3195 = vadd.f32 %v3145, %v3179
    %s3196 = sld [smem:[#allocation4 + $0x38]]
    %v3197 = vstv %s3196
    %v3198 = vmul.f32 %v3197, %v2562
    %v3199 = vmul.f32 %v3197, %v2563
    %v3200 = vmul.f32 %v3197, %v2565
    %v3201 = vmul.f32 %v3197, %v2566
    %v3202 = vmul.f32 %v3197, %v2568
    %v3203 = vmul.f32 %v3197, %v2569
    %v3204 = vmul.f32 %v3197, %v2571
    %v3205 = vmul.f32 %v3197, %v2572
    %3214 = vrot.lane.b32.xlu0 %v3198, 126
    %v3215 = vpop.permute.xlu0 %3214
    %3216 = vrot.lane.b32.xlu0 %v3199, 126
    %v3217 = vpop.permute.xlu0 %3216
    %3218 = vrot.lane.b32.xlu0 %v3200, 126
    %v3219 = vpop.permute.xlu0 %3218
    %3220 = vrot.lane.b32.xlu0 %v3201, 126
    %v3221 = vpop.permute.xlu0 %3220
    %3222 = vrot.lane.b32.xlu0 %v3202, 126
    %v3223 = vpop.permute.xlu0 %3222
    %3224 = vrot.lane.b32.xlu0 %v3203, 126
    %v3225 = vpop.permute.xlu0 %3224
    %3226 = vrot.lane.b32.xlu0 %v3204, 126
    %v3227 = vpop.permute.xlu0 %3226
    %3228 = vrot.lane.b32.xlu0 %v3205, 126
    %v3229 = vpop.permute.xlu0 %3228
    %v3238 = vadd.f32 %v3188, %v3215
    %v3239 = vadd.f32 %v3189, %v3217
    %v3240 = vadd.f32 %v3190, %v3219
    %v3241 = vadd.f32 %v3191, %v3221
    %v3242 = vadd.f32 %v3192, %v3223
    %v3243 = vadd.f32 %v3193, %v3225
    %v3244 = vadd.f32 %v3194, %v3227
    %v3245 = vadd.f32 %v3195, %v3229
    %s3246 = sld [smem:[#allocation4 + $0x39]]
    %v3247 = vstv %s3246
    %v3248 = vmul.f32 %v3247, %v2562
    %v3249 = vmul.f32 %v3247, %v2563
    %v3250 = vmul.f32 %v3247, %v2564
    %v3251 = vmul.f32 %v3247, %v2565
    %v3252 = vmul.f32 %v3247, %v2566
    %v3253 = vmul.f32 %v3247, %v2567
    %v3254 = vmul.f32 %v3247, %v2568
    %v3255 = vmul.f32 %v3247, %v2569
    %v3256 = vmul.f32 %v3247, %v2570
    %v3257 = vmul.f32 %v3247, %v2571
    %v3258 = vmul.f32 %v3247, %v2572
    %v3259 = vmul.f32 %v3247, %v2573
    %v3272 = vrot.slane %v3248, 1
    %v3273 = vrot.slane %v3249, 1
    %v3274 = vsel %vm474, %v3272, %v3273
    %v3275 = vrot.slane %v3250, 1
    %v3276 = vsel %vm474, %v3273, %v3275
    %v3277 = vrot.slane %v3251, 1
    %v3278 = vrot.slane %v3252, 1
    %v3279 = vsel %vm474, %v3277, %v3278
    %v3280 = vrot.slane %v3253, 1
    %v3281 = vsel %vm474, %v3278, %v3280
    %v3282 = vrot.slane %v3254, 1
    %v3283 = vrot.slane %v3255, 1
    %v3284 = vsel %vm474, %v3282, %v3283
    %v3285 = vrot.slane %v3256, 1
    %v3286 = vsel %vm474, %v3283, %v3285
    %v3287 = vrot.slane %v3257, 1
    %v3288 = vrot.slane %v3258, 1
    %v3289 = vsel %vm474, %v3287, %v3288
    %v3290 = vrot.slane %v3259, 1
    %v3291 = vsel %vm474, %v3288, %v3290
    %v3300 = vadd.f32 %v3238, %v3274
    %v3301 = vadd.f32 %v3239, %v3276
    %v3302 = vadd.f32 %v3240, %v3279
    %v3303 = vadd.f32 %v3241, %v3281
    %v3304 = vadd.f32 %v3242, %v3284
    %v3305 = vadd.f32 %v3243, %v3286
    %v3306 = vadd.f32 %v3244, %v3289
    %v3307 = vadd.f32 %v3245, %v3291
    %s3308 = sld [smem:[#allocation4 + $0x3a]]
    %v3309 = vstv %s3308
    %v3310 = vmul.f32 %v3309, %v2562
    %v3311 = vmul.f32 %v3309, %v2563
    %v3312 = vmul.f32 %v3309, %v2564
    %v3313 = vmul.f32 %v3309, %v2565
    %v3314 = vmul.f32 %v3309, %v2566
    %v3315 = vmul.f32 %v3309, %v2567
    %v3316 = vmul.f32 %v3309, %v2568
    %v3317 = vmul.f32 %v3309, %v2569
    %v3318 = vmul.f32 %v3309, %v2570
    %v3319 = vmul.f32 %v3309, %v2571
    %v3320 = vmul.f32 %v3309, %v2572
    %v3321 = vmul.f32 %v3309, %v2573
    %v3334 = vrot.slane %v3310, 1
    %v3335 = vrot.slane %v3311, 1
    %v3336 = vsel %vm474, %v3334, %v3335
    %v3337 = vrot.slane %v3312, 1
    %v3338 = vsel %vm474, %v3335, %v3337
    %v3339 = vrot.slane %v3313, 1
    %v3340 = vrot.slane %v3314, 1
    %v3341 = vsel %vm474, %v3339, %v3340
    %v3342 = vrot.slane %v3315, 1
    %v3343 = vsel %vm474, %v3340, %v3342
    %v3344 = vrot.slane %v3316, 1
    %v3345 = vrot.slane %v3317, 1
    %v3346 = vsel %vm474, %v3344, %v3345
    %v3347 = vrot.slane %v3318, 1
    %v3348 = vsel %vm474, %v3345, %v3347
    %v3349 = vrot.slane %v3319, 1
    %v3350 = vrot.slane %v3320, 1
    %v3351 = vsel %vm474, %v3349, %v3350
    %v3352 = vrot.slane %v3321, 1
    %v3353 = vsel %vm474, %v3350, %v3352
    %3354 = vrot.lane.b32.xlu0 %v3336, 127
    %v3355 = vpop.permute.xlu0 %3354
    %3356 = vrot.lane.b32.xlu0 %v3338, 127
    %v3357 = vpop.permute.xlu0 %3356
    %3358 = vrot.lane.b32.xlu0 %v3341, 127
    %v3359 = vpop.permute.xlu0 %3358
    %3360 = vrot.lane.b32.xlu0 %v3343, 127
    %v3361 = vpop.permute.xlu0 %3360
    %3362 = vrot.lane.b32.xlu0 %v3346, 127
    %v3363 = vpop.permute.xlu0 %3362
    %3364 = vrot.lane.b32.xlu0 %v3348, 127
    %v3365 = vpop.permute.xlu0 %3364
    %3366 = vrot.lane.b32.xlu0 %v3351, 127
    %v3367 = vpop.permute.xlu0 %3366
    %3368 = vrot.lane.b32.xlu0 %v3353, 127
    %v3369 = vpop.permute.xlu0 %3368
    %v3378 = vadd.f32 %v3300, %v3355
    %v3379 = vadd.f32 %v3301, %v3357
    %v3380 = vadd.f32 %v3302, %v3359
    %v3381 = vadd.f32 %v3303, %v3361
    %v3382 = vadd.f32 %v3304, %v3363
    %v3383 = vadd.f32 %v3305, %v3365
    %v3384 = vadd.f32 %v3306, %v3367
    %v3385 = vadd.f32 %v3307, %v3369
    %s3386 = sld [smem:[#allocation4 + $0x3b]]
    %v3387 = vstv %s3386
    %v3388 = vmul.f32 %v3387, %v2562
    %v3389 = vmul.f32 %v3387, %v2563
    %v3390 = vmul.f32 %v3387, %v2564
    %v3391 = vmul.f32 %v3387, %v2565
    %v3392 = vmul.f32 %v3387, %v2566
    %v3393 = vmul.f32 %v3387, %v2567
    %v3394 = vmul.f32 %v3387, %v2568
    %v3395 = vmul.f32 %v3387, %v2569
    %v3396 = vmul.f32 %v3387, %v2570
    %v3397 = vmul.f32 %v3387, %v2571
    %v3398 = vmul.f32 %v3387, %v2572
    %v3399 = vmul.f32 %v3387, %v2573
    %v3412 = vrot.slane %v3388, 1
    %v3413 = vrot.slane %v3389, 1
    %v3414 = vsel %vm474, %v3412, %v3413
    %v3415 = vrot.slane %v3390, 1
    %v3416 = vsel %vm474, %v3413, %v3415
    %v3417 = vrot.slane %v3391, 1
    %v3418 = vrot.slane %v3392, 1
    %v3419 = vsel %vm474, %v3417, %v3418
    %v3420 = vrot.slane %v3393, 1
    %v3421 = vsel %vm474, %v3418, %v3420
    %v3422 = vrot.slane %v3394, 1
    %v3423 = vrot.slane %v3395, 1
    %v3424 = vsel %vm474, %v3422, %v3423
    %v3425 = vrot.slane %v3396, 1
    %v3426 = vsel %vm474, %v3423, %v3425
    %v3427 = vrot.slane %v3397, 1
    %v3428 = vrot.slane %v3398, 1
    %v3429 = vsel %vm474, %v3427, %v3428
    %v3430 = vrot.slane %v3399, 1
    %v3431 = vsel %vm474, %v3428, %v3430
    %3432 = vrot.lane.b32.xlu0 %v3414, 126
    %v3433 = vpop.permute.xlu0 %3432
    %3434 = vrot.lane.b32.xlu0 %v3416, 126
    %v3435 = vpop.permute.xlu0 %3434
    %3436 = vrot.lane.b32.xlu0 %v3419, 126
    %v3437 = vpop.permute.xlu0 %3436
    %3438 = vrot.lane.b32.xlu0 %v3421, 126
    %v3439 = vpop.permute.xlu0 %3438
    %3440 = vrot.lane.b32.xlu0 %v3424, 126
    %v3441 = vpop.permute.xlu0 %3440
    %3442 = vrot.lane.b32.xlu0 %v3426, 126
    %v3443 = vpop.permute.xlu0 %3442
    %3444 = vrot.lane.b32.xlu0 %v3429, 126
    %v3445 = vpop.permute.xlu0 %3444
    %3446 = vrot.lane.b32.xlu0 %v3431, 126
    %v3447 = vpop.permute.xlu0 %3446
    %v3456 = vadd.f32 %v3378, %v3433
    %v3457 = vadd.f32 %v3379, %v3435
    %v3458 = vadd.f32 %v3380, %v3437
    %v3459 = vadd.f32 %v3381, %v3439
    %v3460 = vadd.f32 %v3382, %v3441
    %v3461 = vadd.f32 %v3383, %v3443
    %v3462 = vadd.f32 %v3384, %v3445
    %v3463 = vadd.f32 %v3385, %v3447
    %s3464 = sld [smem:[#allocation4 + $0x3c]]
    %v3465 = vstv %s3464
    %v3466 = vmul.f32 %v3465, %v2562
    %v3467 = vmul.f32 %v3465, %v2563
    %v3468 = vmul.f32 %v3465, %v2564
    %v3469 = vmul.f32 %v3465, %v2565
    %v3470 = vmul.f32 %v3465, %v2566
    %v3471 = vmul.f32 %v3465, %v2567
    %v3472 = vmul.f32 %v3465, %v2568
    %v3473 = vmul.f32 %v3465, %v2569
    %v3474 = vmul.f32 %v3465, %v2570
    %v3475 = vmul.f32 %v3465, %v2571
    %v3476 = vmul.f32 %v3465, %v2572
    %v3477 = vmul.f32 %v3465, %v2573
    %v3490 = vrot.slane %v3466, 2
    %v3491 = vrot.slane %v3467, 2
    %v3492 = vsel %vm693, %v3490, %v3491
    %v3493 = vrot.slane %v3468, 2
    %v3494 = vsel %vm693, %v3491, %v3493
    %v3495 = vrot.slane %v3469, 2
    %v3496 = vrot.slane %v3470, 2
    %v3497 = vsel %vm693, %v3495, %v3496
    %v3498 = vrot.slane %v3471, 2
    %v3499 = vsel %vm693, %v3496, %v3498
    %v3500 = vrot.slane %v3472, 2
    %v3501 = vrot.slane %v3473, 2
    %v3502 = vsel %vm693, %v3500, %v3501
    %v3503 = vrot.slane %v3474, 2
    %v3504 = vsel %vm693, %v3501, %v3503
    %v3505 = vrot.slane %v3475, 2
    %v3506 = vrot.slane %v3476, 2
    %v3507 = vsel %vm693, %v3505, %v3506
    %v3508 = vrot.slane %v3477, 2
    %v3509 = vsel %vm693, %v3506, %v3508
    %v3518 = vadd.f32 %v3456, %v3492
    %v3519 = vadd.f32 %v3457, %v3494
    %v3520 = vadd.f32 %v3458, %v3497
    %v3521 = vadd.f32 %v3459, %v3499
    %v3522 = vadd.f32 %v3460, %v3502
    %v3523 = vadd.f32 %v3461, %v3504
    %v3524 = vadd.f32 %v3462, %v3507
    %v3525 = vadd.f32 %v3463, %v3509
    %s3526 = sld [smem:[#allocation4 + $0x3d]]
    %v3527 = vstv %s3526
    %v3528 = vmul.f32 %v3527, %v2562
    %v3529 = vmul.f32 %v3527, %v2563
    %v3530 = vmul.f32 %v3527, %v2564
    %v3531 = vmul.f32 %v3527, %v2565
    %v3532 = vmul.f32 %v3527, %v2566
    %v3533 = vmul.f32 %v3527, %v2567
    %v3534 = vmul.f32 %v3527, %v2568
    %v3535 = vmul.f32 %v3527, %v2569
    %v3536 = vmul.f32 %v3527, %v2570
    %v3537 = vmul.f32 %v3527, %v2571
    %v3538 = vmul.f32 %v3527, %v2572
    %v3539 = vmul.f32 %v3527, %v2573
    %v3552 = vrot.slane %v3528, 2
    %v3553 = vrot.slane %v3529, 2
    %v3554 = vsel %vm693, %v3552, %v3553
    %v3555 = vrot.slane %v3530, 2
    %v3556 = vsel %vm693, %v3553, %v3555
    %v3557 = vrot.slane %v3531, 2
    %v3558 = vrot.slane %v3532, 2
    %v3559 = vsel %vm693, %v3557, %v3558
    %v3560 = vrot.slane %v3533, 2
    %v3561 = vsel %vm693, %v3558, %v3560
    %v3562 = vrot.slane %v3534, 2
    %v3563 = vrot.slane %v3535, 2
    %v3564 = vsel %vm693, %v3562, %v3563
    %v3565 = vrot.slane %v3536, 2
    %v3566 = vsel %vm693, %v3563, %v3565
    %v3567 = vrot.slane %v3537, 2
    %v3568 = vrot.slane %v3538, 2
    %v3569 = vsel %vm693, %v3567, %v3568
    %v3570 = vrot.slane %v3539, 2
    %v3571 = vsel %vm693, %v3568, %v3570
    %3572 = vrot.lane.b32.xlu0 %v3554, 127
    %v3573 = vpop.permute.xlu0 %3572
    %3574 = vrot.lane.b32.xlu0 %v3556, 127
    %v3575 = vpop.permute.xlu0 %3574
    %3576 = vrot.lane.b32.xlu0 %v3559, 127
    %v3577 = vpop.permute.xlu0 %3576
    %3578 = vrot.lane.b32.xlu0 %v3561, 127
    %v3579 = vpop.permute.xlu0 %3578
    %3580 = vrot.lane.b32.xlu0 %v3564, 127
    %v3581 = vpop.permute.xlu0 %3580
    %3582 = vrot.lane.b32.xlu0 %v3566, 127
    %v3583 = vpop.permute.xlu0 %3582
    %3584 = vrot.lane.b32.xlu0 %v3569, 127
    %v3585 = vpop.permute.xlu0 %3584
    %3586 = vrot.lane.b32.xlu0 %v3571, 127
    %v3587 = vpop.permute.xlu0 %3586
    %v3596 = vadd.f32 %v3518, %v3573
    %v3597 = vadd.f32 %v3519, %v3575
    %v3598 = vadd.f32 %v3520, %v3577
    %v3599 = vadd.f32 %v3521, %v3579
    %v3600 = vadd.f32 %v3522, %v3581
    %v3601 = vadd.f32 %v3523, %v3583
    %v3602 = vadd.f32 %v3524, %v3585
    %v3603 = vadd.f32 %v3525, %v3587
    %s3604 = sld [smem:[#allocation4 + $0x3e]]
    %v3605 = vstv %s3604
    %v3606 = vmul.f32 %v3605, %v2562
    %v3607 = vmul.f32 %v3605, %v2563
    %v3608 = vmul.f32 %v3605, %v2564
    %v3609 = vmul.f32 %v3605, %v2565
    %v3610 = vmul.f32 %v3605, %v2566
    %v3611 = vmul.f32 %v3605, %v2567
    %v3612 = vmul.f32 %v3605, %v2568
    %v3613 = vmul.f32 %v3605, %v2569
    %v3614 = vmul.f32 %v3605, %v2570
    %v3615 = vmul.f32 %v3605, %v2571
    %v3616 = vmul.f32 %v3605, %v2572
    %v3617 = vmul.f32 %v3605, %v2573
    %v3630 = vrot.slane %v3606, 2
    %v3631 = vrot.slane %v3607, 2
    %v3632 = vsel %vm693, %v3630, %v3631
    %v3633 = vrot.slane %v3608, 2
    %v3634 = vsel %vm693, %v3631, %v3633
    %v3635 = vrot.slane %v3609, 2
    %v3636 = vrot.slane %v3610, 2
    %v3637 = vsel %vm693, %v3635, %v3636
    %v3638 = vrot.slane %v3611, 2
    %v3639 = vsel %vm693, %v3636, %v3638
    %v3640 = vrot.slane %v3612, 2
    %v3641 = vrot.slane %v3613, 2
    %v3642 = vsel %vm693, %v3640, %v3641
    %v3643 = vrot.slane %v3614, 2
    %v3644 = vsel %vm693, %v3641, %v3643
    %v3645 = vrot.slane %v3615, 2
    %v3646 = vrot.slane %v3616, 2
    %v3647 = vsel %vm693, %v3645, %v3646
    %v3648 = vrot.slane %v3617, 2
    %v3649 = vsel %vm693, %v3646, %v3648
    %3650 = vrot.lane.b32.xlu0 %v3632, 126
    %v3651 = vpop.permute.xlu0 %3650
    %3652 = vrot.lane.b32.xlu0 %v3634, 126
    %v3653 = vpop.permute.xlu0 %3652
    %3654 = vrot.lane.b32.xlu0 %v3637, 126
    %v3655 = vpop.permute.xlu0 %3654
    %3656 = vrot.lane.b32.xlu0 %v3639, 126
    %v3657 = vpop.permute.xlu0 %3656
    %3658 = vrot.lane.b32.xlu0 %v3642, 126
    %v3659 = vpop.permute.xlu0 %3658
    %3660 = vrot.lane.b32.xlu0 %v3644, 126
    %v3661 = vpop.permute.xlu0 %3660
    %3662 = vrot.lane.b32.xlu0 %v3647, 126
    %v3663 = vpop.permute.xlu0 %3662
    %3664 = vrot.lane.b32.xlu0 %v3649, 126
    %v3665 = vpop.permute.xlu0 %3664
    %v3674 = vadd.f32 %v3596, %v3651
    %v3675 = vadd.f32 %v3597, %v3653
    %v3676 = vadd.f32 %v3598, %v3655
    %v3677 = vadd.f32 %v3599, %v3657
    %v3678 = vadd.f32 %v3600, %v3659
    %v3679 = vadd.f32 %v3601, %v3661
    %v3680 = vadd.f32 %v3602, %v3663
    %v3681 = vadd.f32 %v3603, %v3665
    %s3682 = scalar_lea.vmem [#allocation2], 72
    %v3683 = vld [vmem:[%s3682] sm:$0xff]
    %v3684 = vld [vmem:[%s3682 + $0x8] sm:$0xff]
    %v3685 = vld [vmem:[%s3682 + $0x10] sm:$0x3]
    %v3686 = vld [vmem:[%s3682 + $0x60] sm:$0xff]
    %v3687 = vld [vmem:[%s3682 + $0x68] sm:$0xff]
    %v3688 = vld [vmem:[%s3682 + $0x70] sm:$0x3]
    %v3689 = vld [vmem:[%s3682 + $0xc0] sm:$0xff]
    %v3690 = vld [vmem:[%s3682 + $0xc8] sm:$0xff]
    %v3691 = vld [vmem:[%s3682 + $0xd0] sm:$0x3]
    %v3692 = vld [vmem:[%s3682 + $0x120] sm:$0xff]
    %v3693 = vld [vmem:[%s3682 + $0x128] sm:$0xff]
    %v3694 = vld [vmem:[%s3682 + $0x130] sm:$0x3]
    %s3695 = sld [smem:[#allocation4 + $0x1b]]
    %v3696 = vstv %s3695
    %v3697 = vmul.f32 %v3696, %v3683
    %v3698 = vmul.f32 %v3696, %v3684
    %v3699 = vmul.f32 %v3696, %v3686
    %v3700 = vmul.f32 %v3696, %v3687
    %v3701 = vmul.f32 %v3696, %v3689
    %v3702 = vmul.f32 %v3696, %v3690
    %v3703 = vmul.f32 %v3696, %v3692
    %v3704 = vmul.f32 %v3696, %v3693
    %v3705 = vadd.f32 %v3120, %v3697
    %v3706 = vadd.f32 %v3121, %v3698
    %v3707 = vadd.f32 %v3122, %v3699
    %v3708 = vadd.f32 %v3123, %v3700
    %v3709 = vadd.f32 %v3124, %v3701
    %v3710 = vadd.f32 %v3125, %v3702
    %v3711 = vadd.f32 %v3126, %v3703
    %v3712 = vadd.f32 %v3127, %v3704
    %s3713 = sld [smem:[#allocation4 + $0x1c]]
    %v3714 = vstv %s3713
    %v3715 = vmul.f32 %v3714, %v3683
    %v3716 = vmul.f32 %v3714, %v3684
    %v3717 = vmul.f32 %v3714, %v3686
    %v3718 = vmul.f32 %v3714, %v3687
    %v3719 = vmul.f32 %v3714, %v3689
    %v3720 = vmul.f32 %v3714, %v3690
    %v3721 = vmul.f32 %v3714, %v3692
    %v3722 = vmul.f32 %v3714, %v3693
    %3731 = vrot.lane.b32.xlu0 %v3715, 127
    %v3732 = vpop.permute.xlu0 %3731
    %3733 = vrot.lane.b32.xlu0 %v3716, 127
    %v3734 = vpop.permute.xlu0 %3733
    %3735 = vrot.lane.b32.xlu0 %v3717, 127
    %v3736 = vpop.permute.xlu0 %3735
    %3737 = vrot.lane.b32.xlu0 %v3718, 127
    %v3738 = vpop.permute.xlu0 %3737
    %3739 = vrot.lane.b32.xlu0 %v3719, 127
    %v3740 = vpop.permute.xlu0 %3739
    %3741 = vrot.lane.b32.xlu0 %v3720, 127
    %v3742 = vpop.permute.xlu0 %3741
    %3743 = vrot.lane.b32.xlu0 %v3721, 127
    %v3744 = vpop.permute.xlu0 %3743
    %3745 = vrot.lane.b32.xlu0 %v3722, 127
    %v3746 = vpop.permute.xlu0 %3745
    %v3755 = vadd.f32 %v3705, %v3732
    %v3756 = vadd.f32 %v3706, %v3734
    %v3757 = vadd.f32 %v3707, %v3736
    %v3758 = vadd.f32 %v3708, %v3738
    %v3759 = vadd.f32 %v3709, %v3740
    %v3760 = vadd.f32 %v3710, %v3742
    %v3761 = vadd.f32 %v3711, %v3744
    %v3762 = vadd.f32 %v3712, %v3746
    %s3763 = sld [smem:[#allocation4 + $0x1d]]
    %v3764 = vstv %s3763
    %v3765 = vmul.f32 %v3764, %v3683
    %v3766 = vmul.f32 %v3764, %v3684
    %v3767 = vmul.f32 %v3764, %v3686
    %v3768 = vmul.f32 %v3764, %v3687
    %v3769 = vmul.f32 %v3764, %v3689
    %v3770 = vmul.f32 %v3764, %v3690
    %v3771 = vmul.f32 %v3764, %v3692
    %v3772 = vmul.f32 %v3764, %v3693
    %3781 = vrot.lane.b32.xlu0 %v3765, 126
    %v3782 = vpop.permute.xlu0 %3781
    %3783 = vrot.lane.b32.xlu0 %v3766, 126
    %v3784 = vpop.permute.xlu0 %3783
    %3785 = vrot.lane.b32.xlu0 %v3767, 126
    %v3786 = vpop.permute.xlu0 %3785
    %3787 = vrot.lane.b32.xlu0 %v3768, 126
    %v3788 = vpop.permute.xlu0 %3787
    %3789 = vrot.lane.b32.xlu0 %v3769, 126
    %v3790 = vpop.permute.xlu0 %3789
    %3791 = vrot.lane.b32.xlu0 %v3770, 126
    %v3792 = vpop.permute.xlu0 %3791
    %3793 = vrot.lane.b32.xlu0 %v3771, 126
    %v3794 = vpop.permute.xlu0 %3793
    %3795 = vrot.lane.b32.xlu0 %v3772, 126
    %v3796 = vpop.permute.xlu0 %3795
    %v3805 = vadd.f32 %v3755, %v3782
    %v3806 = vadd.f32 %v3756, %v3784
    %v3807 = vadd.f32 %v3757, %v3786
    %v3808 = vadd.f32 %v3758, %v3788
    %v3809 = vadd.f32 %v3759, %v3790
    %v3810 = vadd.f32 %v3760, %v3792
    %v3811 = vadd.f32 %v3761, %v3794
    %v3812 = vadd.f32 %v3762, %v3796
    %s3813 = sld [smem:[#allocation4 + $0x1e]]
    %v3814 = vstv %s3813
    %v3815 = vmul.f32 %v3814, %v3683
    %v3816 = vmul.f32 %v3814, %v3684
    %v3817 = vmul.f32 %v3814, %v3685
    %v3818 = vmul.f32 %v3814, %v3686
    %v3819 = vmul.f32 %v3814, %v3687
    %v3820 = vmul.f32 %v3814, %v3688
    %v3821 = vmul.f32 %v3814, %v3689
    %v3822 = vmul.f32 %v3814, %v3690
    %v3823 = vmul.f32 %v3814, %v3691
    %v3824 = vmul.f32 %v3814, %v3692
    %v3825 = vmul.f32 %v3814, %v3693
    %v3826 = vmul.f32 %v3814, %v3694
    %v3839 = vrot.slane %v3815, 1
    %v3840 = vrot.slane %v3816, 1
    %v3841 = vsel %vm474, %v3839, %v3840
    %v3842 = vrot.slane %v3817, 1
    %v3843 = vsel %vm474, %v3840, %v3842
    %v3844 = vrot.slane %v3818, 1
    %v3845 = vrot.slane %v3819, 1
    %v3846 = vsel %vm474, %v3844, %v3845
    %v3847 = vrot.slane %v3820, 1
    %v3848 = vsel %vm474, %v3845, %v3847
    %v3849 = vrot.slane %v3821, 1
    %v3850 = vrot.slane %v3822, 1
    %v3851 = vsel %vm474, %v3849, %v3850
    %v3852 = vrot.slane %v3823, 1
    %v3853 = vsel %vm474, %v3850, %v3852
    %v3854 = vrot.slane %v3824, 1
    %v3855 = vrot.slane %v3825, 1
    %v3856 = vsel %vm474, %v3854, %v3855
    %v3857 = vrot.slane %v3826, 1
    %v3858 = vsel %vm474, %v3855, %v3857
    %v3867 = vadd.f32 %v3805, %v3841
    %v3868 = vadd.f32 %v3806, %v3843
    %v3869 = vadd.f32 %v3807, %v3846
    %v3870 = vadd.f32 %v3808, %v3848
    %v3871 = vadd.f32 %v3809, %v3851
    %v3872 = vadd.f32 %v3810, %v3853
    %v3873 = vadd.f32 %v3811, %v3856
    %v3874 = vadd.f32 %v3812, %v3858
    %s3875 = sld [smem:[#allocation4 + $0x1f]]
    %v3876 = vstv %s3875
    %v3877 = vmul.f32 %v3876, %v3683
    %v3878 = vmul.f32 %v3876, %v3684
    %v3879 = vmul.f32 %v3876, %v3685
    %v3880 = vmul.f32 %v3876, %v3686
    %v3881 = vmul.f32 %v3876, %v3687
    %v3882 = vmul.f32 %v3876, %v3688
    %v3883 = vmul.f32 %v3876, %v3689
    %v3884 = vmul.f32 %v3876, %v3690
    %v3885 = vmul.f32 %v3876, %v3691
    %v3886 = vmul.f32 %v3876, %v3692
    %v3887 = vmul.f32 %v3876, %v3693
    %v3888 = vmul.f32 %v3876, %v3694
    %v3901 = vrot.slane %v3877, 1
    %v3902 = vrot.slane %v3878, 1
    %v3903 = vsel %vm474, %v3901, %v3902
    %v3904 = vrot.slane %v3879, 1
    %v3905 = vsel %vm474, %v3902, %v3904
    %v3906 = vrot.slane %v3880, 1
    %v3907 = vrot.slane %v3881, 1
    %v3908 = vsel %vm474, %v3906, %v3907
    %v3909 = vrot.slane %v3882, 1
    %v3910 = vsel %vm474, %v3907, %v3909
    %v3911 = vrot.slane %v3883, 1
    %v3912 = vrot.slane %v3884, 1
    %v3913 = vsel %vm474, %v3911, %v3912
    %v3914 = vrot.slane %v3885, 1
    %v3915 = vsel %vm474, %v3912, %v3914
    %v3916 = vrot.slane %v3886, 1
    %v3917 = vrot.slane %v3887, 1
    %v3918 = vsel %vm474, %v3916, %v3917
    %v3919 = vrot.slane %v3888, 1
    %v3920 = vsel %vm474, %v3917, %v3919
    %3921 = vrot.lane.b32.xlu0 %v3903, 127
    %v3922 = vpop.permute.xlu0 %3921
    %3923 = vrot.lane.b32.xlu0 %v3905, 127
    %v3924 = vpop.permute.xlu0 %3923
    %3925 = vrot.lane.b32.xlu0 %v3908, 127
    %v3926 = vpop.permute.xlu0 %3925
    %3927 = vrot.lane.b32.xlu0 %v3910, 127
    %v3928 = vpop.permute.xlu0 %3927
    %3929 = vrot.lane.b32.xlu0 %v3913, 127
    %v3930 = vpop.permute.xlu0 %3929
    %3931 = vrot.lane.b32.xlu0 %v3915, 127
    %v3932 = vpop.permute.xlu0 %3931
    %3933 = vrot.lane.b32.xlu0 %v3918, 127
    %v3934 = vpop.permute.xlu0 %3933
    %3935 = vrot.lane.b32.xlu0 %v3920, 127
    %v3936 = vpop.permute.xlu0 %3935
    %v3945 = vadd.f32 %v3867, %v3922
    %v3946 = vadd.f32 %v3868, %v3924
    %v3947 = vadd.f32 %v3869, %v3926
    %v3948 = vadd.f32 %v3870, %v3928
    %v3949 = vadd.f32 %v3871, %v3930
    %v3950 = vadd.f32 %v3872, %v3932
    %v3951 = vadd.f32 %v3873, %v3934
    %v3952 = vadd.f32 %v3874, %v3936
    %s3953 = sld [smem:[#allocation4 + $0x20]]
    %v3954 = vstv %s3953
    %v3955 = vmul.f32 %v3954, %v3683
    %v3956 = vmul.f32 %v3954, %v3684
    %v3957 = vmul.f32 %v3954, %v3685
    %v3958 = vmul.f32 %v3954, %v3686
    %v3959 = vmul.f32 %v3954, %v3687
    %v3960 = vmul.f32 %v3954, %v3688
    %v3961 = vmul.f32 %v3954, %v3689
    %v3962 = vmul.f32 %v3954, %v3690
    %v3963 = vmul.f32 %v3954, %v3691
    %v3964 = vmul.f32 %v3954, %v3692
    %v3965 = vmul.f32 %v3954, %v3693
    %v3966 = vmul.f32 %v3954, %v3694
    %v3979 = vrot.slane %v3955, 1
    %v3980 = vrot.slane %v3956, 1
    %v3981 = vsel %vm474, %v3979, %v3980
    %v3982 = vrot.slane %v3957, 1
    %v3983 = vsel %vm474, %v3980, %v3982
    %v3984 = vrot.slane %v3958, 1
    %v3985 = vrot.slane %v3959, 1
    %v3986 = vsel %vm474, %v3984, %v3985
    %v3987 = vrot.slane %v3960, 1
    %v3988 = vsel %vm474, %v3985, %v3987
    %v3989 = vrot.slane %v3961, 1
    %v3990 = vrot.slane %v3962, 1
    %v3991 = vsel %vm474, %v3989, %v3990
    %v3992 = vrot.slane %v3963, 1
    %v3993 = vsel %vm474, %v3990, %v3992
    %v3994 = vrot.slane %v3964, 1
    %v3995 = vrot.slane %v3965, 1
    %v3996 = vsel %vm474, %v3994, %v3995
    %v3997 = vrot.slane %v3966, 1
    %v3998 = vsel %vm474, %v3995, %v3997
    %3999 = vrot.lane.b32.xlu0 %v3981, 126
    %v4000 = vpop.permute.xlu0 %3999
    %4001 = vrot.lane.b32.xlu0 %v3983, 126
    %v4002 = vpop.permute.xlu0 %4001
    %4003 = vrot.lane.b32.xlu0 %v3986, 126
    %v4004 = vpop.permute.xlu0 %4003
    %4005 = vrot.lane.b32.xlu0 %v3988, 126
    %v4006 = vpop.permute.xlu0 %4005
    %4007 = vrot.lane.b32.xlu0 %v3991, 126
    %v4008 = vpop.permute.xlu0 %4007
    %4009 = vrot.lane.b32.xlu0 %v3993, 126
    %v4010 = vpop.permute.xlu0 %4009
    %4011 = vrot.lane.b32.xlu0 %v3996, 126
    %v4012 = vpop.permute.xlu0 %4011
    %4013 = vrot.lane.b32.xlu0 %v3998, 126
    %v4014 = vpop.permute.xlu0 %4013
    %v4023 = vadd.f32 %v3945, %v4000
    %v4024 = vadd.f32 %v3946, %v4002
    %v4025 = vadd.f32 %v3947, %v4004
    %v4026 = vadd.f32 %v3948, %v4006
    %v4027 = vadd.f32 %v3949, %v4008
    %v4028 = vadd.f32 %v3950, %v4010
    %v4029 = vadd.f32 %v3951, %v4012
    %v4030 = vadd.f32 %v3952, %v4014
    %s4031 = sld [smem:[#allocation4 + $0x21]]
    %v4032 = vstv %s4031
    %v4033 = vmul.f32 %v4032, %v3683
    %v4034 = vmul.f32 %v4032, %v3684
    %v4035 = vmul.f32 %v4032, %v3685
    %v4036 = vmul.f32 %v4032, %v3686
    %v4037 = vmul.f32 %v4032, %v3687
    %v4038 = vmul.f32 %v4032, %v3688
    %v4039 = vmul.f32 %v4032, %v3689
    %v4040 = vmul.f32 %v4032, %v3690
    %v4041 = vmul.f32 %v4032, %v3691
    %v4042 = vmul.f32 %v4032, %v3692
    %v4043 = vmul.f32 %v4032, %v3693
    %v4044 = vmul.f32 %v4032, %v3694
    %v4057 = vrot.slane %v4033, 2
    %v4058 = vrot.slane %v4034, 2
    %v4059 = vsel %vm693, %v4057, %v4058
    %v4060 = vrot.slane %v4035, 2
    %v4061 = vsel %vm693, %v4058, %v4060
    %v4062 = vrot.slane %v4036, 2
    %v4063 = vrot.slane %v4037, 2
    %v4064 = vsel %vm693, %v4062, %v4063
    %v4065 = vrot.slane %v4038, 2
    %v4066 = vsel %vm693, %v4063, %v4065
    %v4067 = vrot.slane %v4039, 2
    %v4068 = vrot.slane %v4040, 2
    %v4069 = vsel %vm693, %v4067, %v4068
    %v4070 = vrot.slane %v4041, 2
    %v4071 = vsel %vm693, %v4068, %v4070
    %v4072 = vrot.slane %v4042, 2
    %v4073 = vrot.slane %v4043, 2
    %v4074 = vsel %vm693, %v4072, %v4073
    %v4075 = vrot.slane %v4044, 2
    %v4076 = vsel %vm693, %v4073, %v4075
    %v4085 = vadd.f32 %v4023, %v4059
    %v4086 = vadd.f32 %v4024, %v4061
    %v4087 = vadd.f32 %v4025, %v4064
    %v4088 = vadd.f32 %v4026, %v4066
    %v4089 = vadd.f32 %v4027, %v4069
    %v4090 = vadd.f32 %v4028, %v4071
    %v4091 = vadd.f32 %v4029, %v4074
    %v4092 = vadd.f32 %v4030, %v4076
    %s4093 = sld [smem:[#allocation4 + $0x22]]
    %v4094 = vstv %s4093
    %v4095 = vmul.f32 %v4094, %v3683
    %v4096 = vmul.f32 %v4094, %v3684
    %v4097 = vmul.f32 %v4094, %v3685
    %v4098 = vmul.f32 %v4094, %v3686
    %v4099 = vmul.f32 %v4094, %v3687
    %v4100 = vmul.f32 %v4094, %v3688
    %v4101 = vmul.f32 %v4094, %v3689
    %v4102 = vmul.f32 %v4094, %v3690
    %v4103 = vmul.f32 %v4094, %v3691
    %v4104 = vmul.f32 %v4094, %v3692
    %v4105 = vmul.f32 %v4094, %v3693
    %v4106 = vmul.f32 %v4094, %v3694
    %v4119 = vrot.slane %v4095, 2
    %v4120 = vrot.slane %v4096, 2
    %v4121 = vsel %vm693, %v4119, %v4120
    %v4122 = vrot.slane %v4097, 2
    %v4123 = vsel %vm693, %v4120, %v4122
    %v4124 = vrot.slane %v4098, 2
    %v4125 = vrot.slane %v4099, 2
    %v4126 = vsel %vm693, %v4124, %v4125
    %v4127 = vrot.slane %v4100, 2
    %v4128 = vsel %vm693, %v4125, %v4127
    %v4129 = vrot.slane %v4101, 2
    %v4130 = vrot.slane %v4102, 2
    %v4131 = vsel %vm693, %v4129, %v4130
    %v4132 = vrot.slane %v4103, 2
    %v4133 = vsel %vm693, %v4130, %v4132
    %v4134 = vrot.slane %v4104, 2
    %v4135 = vrot.slane %v4105, 2
    %v4136 = vsel %vm693, %v4134, %v4135
    %v4137 = vrot.slane %v4106, 2
    %v4138 = vsel %vm693, %v4135, %v4137
    %4139 = vrot.lane.b32.xlu0 %v4121, 127
    %v4140 = vpop.permute.xlu0 %4139
    %4141 = vrot.lane.b32.xlu0 %v4123, 127
    %v4142 = vpop.permute.xlu0 %4141
    %4143 = vrot.lane.b32.xlu0 %v4126, 127
    %v4144 = vpop.permute.xlu0 %4143
    %4145 = vrot.lane.b32.xlu0 %v4128, 127
    %v4146 = vpop.permute.xlu0 %4145
    %4147 = vrot.lane.b32.xlu0 %v4131, 127
    %v4148 = vpop.permute.xlu0 %4147
    %4149 = vrot.lane.b32.xlu0 %v4133, 127
    %v4150 = vpop.permute.xlu0 %4149
    %4151 = vrot.lane.b32.xlu0 %v4136, 127
    %v4152 = vpop.permute.xlu0 %4151
    %4153 = vrot.lane.b32.xlu0 %v4138, 127
    %v4154 = vpop.permute.xlu0 %4153
    %v4163 = vadd.f32 %v4085, %v4140
    %v4164 = vadd.f32 %v4086, %v4142
    %v4165 = vadd.f32 %v4087, %v4144
    %v4166 = vadd.f32 %v4088, %v4146
    %v4167 = vadd.f32 %v4089, %v4148
    %v4168 = vadd.f32 %v4090, %v4150
    %v4169 = vadd.f32 %v4091, %v4152
    %v4170 = vadd.f32 %v4092, %v4154
    %s4171 = sld [smem:[#allocation4 + $0x23]]
    %v4172 = vstv %s4171
    %v4173 = vmul.f32 %v4172, %v3683
    %v4174 = vmul.f32 %v4172, %v3684
    %v4175 = vmul.f32 %v4172, %v3685
    %v4176 = vmul.f32 %v4172, %v3686
    %v4177 = vmul.f32 %v4172, %v3687
    %v4178 = vmul.f32 %v4172, %v3688
    %v4179 = vmul.f32 %v4172, %v3689
    %v4180 = vmul.f32 %v4172, %v3690
    %v4181 = vmul.f32 %v4172, %v3691
    %v4182 = vmul.f32 %v4172, %v3692
    %v4183 = vmul.f32 %v4172, %v3693
    %v4184 = vmul.f32 %v4172, %v3694
    %v4197 = vrot.slane %v4173, 2
    %v4198 = vrot.slane %v4174, 2
    %v4199 = vsel %vm693, %v4197, %v4198
    %v4200 = vrot.slane %v4175, 2
    %v4201 = vsel %vm693, %v4198, %v4200
    %v4202 = vrot.slane %v4176, 2
    %v4203 = vrot.slane %v4177, 2
    %v4204 = vsel %vm693, %v4202, %v4203
    %v4205 = vrot.slane %v4178, 2
    %v4206 = vsel %vm693, %v4203, %v4205
    %v4207 = vrot.slane %v4179, 2
    %v4208 = vrot.slane %v4180, 2
    %v4209 = vsel %vm693, %v4207, %v4208
    %v4210 = vrot.slane %v4181, 2
    %v4211 = vsel %vm693, %v4208, %v4210
    %v4212 = vrot.slane %v4182, 2
    %v4213 = vrot.slane %v4183, 2
    %v4214 = vsel %vm693, %v4212, %v4213
    %v4215 = vrot.slane %v4184, 2
    %v4216 = vsel %vm693, %v4213, %v4215
    %4217 = vrot.lane.b32.xlu0 %v4199, 126
    %v4218 = vpop.permute.xlu0 %4217
    %4219 = vrot.lane.b32.xlu0 %v4201, 126
    %v4220 = vpop.permute.xlu0 %4219
    %4221 = vrot.lane.b32.xlu0 %v4204, 126
    %v4222 = vpop.permute.xlu0 %4221
    %4223 = vrot.lane.b32.xlu0 %v4206, 126
    %v4224 = vpop.permute.xlu0 %4223
    %4225 = vrot.lane.b32.xlu0 %v4209, 126
    %v4226 = vpop.permute.xlu0 %4225
    %4227 = vrot.lane.b32.xlu0 %v4211, 126
    %v4228 = vpop.permute.xlu0 %4227
    %4229 = vrot.lane.b32.xlu0 %v4214, 126
    %v4230 = vpop.permute.xlu0 %4229
    %4231 = vrot.lane.b32.xlu0 %v4216, 126
    %v4232 = vpop.permute.xlu0 %4231
    %v4241 = vadd.f32 %v4163, %v4218
    %v4242 = vadd.f32 %v4164, %v4220
    %v4243 = vadd.f32 %v4165, %v4222
    %v4244 = vadd.f32 %v4166, %v4224
    %v4245 = vadd.f32 %v4167, %v4226
    %v4246 = vadd.f32 %v4168, %v4228
    %v4247 = vadd.f32 %v4169, %v4230
    %v4248 = vadd.f32 %v4170, %v4232
    %s4249 = sld [smem:[#allocation4 + $0x3f]]
    %v4250 = vstv %s4249
    %v4251 = vmul.f32 %v4250, %v3683
    %v4252 = vmul.f32 %v4250, %v3684
    %v4253 = vmul.f32 %v4250, %v3686
    %v4254 = vmul.f32 %v4250, %v3687
    %v4255 = vmul.f32 %v4250, %v3689
    %v4256 = vmul.f32 %v4250, %v3690
    %v4257 = vmul.f32 %v4250, %v3692
    %v4258 = vmul.f32 %v4250, %v3693
    %v4259 = vadd.f32 %v3674, %v4251
    %v4260 = vadd.f32 %v3675, %v4252
    %v4261 = vadd.f32 %v3676, %v4253
    %v4262 = vadd.f32 %v3677, %v4254
    %v4263 = vadd.f32 %v3678, %v4255
    %v4264 = vadd.f32 %v3679, %v4256
    %v4265 = vadd.f32 %v3680, %v4257
    %v4266 = vadd.f32 %v3681, %v4258
    %s4267 = sld [smem:[#allocation4 + $0x40]]
    %v4268 = vstv %s4267
    %v4269 = vmul.f32 %v4268, %v3683
    %v4270 = vmul.f32 %v4268, %v3684
    %v4271 = vmul.f32 %v4268, %v3686
    %v4272 = vmul.f32 %v4268, %v3687
    %v4273 = vmul.f32 %v4268, %v3689
    %v4274 = vmul.f32 %v4268, %v3690
    %v4275 = vmul.f32 %v4268, %v3692
    %v4276 = vmul.f32 %v4268, %v3693
    %4285 = vrot.lane.b32.xlu0 %v4269, 127
    %v4286 = vpop.permute.xlu0 %4285
    %4287 = vrot.lane.b32.xlu0 %v4270, 127
    %v4288 = vpop.permute.xlu0 %4287
    %4289 = vrot.lane.b32.xlu0 %v4271, 127
    %v4290 = vpop.permute.xlu0 %4289
    %4291 = vrot.lane.b32.xlu0 %v4272, 127
    %v4292 = vpop.permute.xlu0 %4291
    %4293 = vrot.lane.b32.xlu0 %v4273, 127
    %v4294 = vpop.permute.xlu0 %4293
    %4295 = vrot.lane.b32.xlu0 %v4274, 127
    %v4296 = vpop.permute.xlu0 %4295
    %4297 = vrot.lane.b32.xlu0 %v4275, 127
    %v4298 = vpop.permute.xlu0 %4297
    %4299 = vrot.lane.b32.xlu0 %v4276, 127
    %v4300 = vpop.permute.xlu0 %4299
    %v4309 = vadd.f32 %v4259, %v4286
    %v4310 = vadd.f32 %v4260, %v4288
    %v4311 = vadd.f32 %v4261, %v4290
    %v4312 = vadd.f32 %v4262, %v4292
    %v4313 = vadd.f32 %v4263, %v4294
    %v4314 = vadd.f32 %v4264, %v4296
    %v4315 = vadd.f32 %v4265, %v4298
    %v4316 = vadd.f32 %v4266, %v4300
    %s4317 = sld [smem:[#allocation4 + $0x41]]
    %v4318 = vstv %s4317
    %v4319 = vmul.f32 %v4318, %v3683
    %v4320 = vmul.f32 %v4318, %v3684
    %v4321 = vmul.f32 %v4318, %v3686
    %v4322 = vmul.f32 %v4318, %v3687
    %v4323 = vmul.f32 %v4318, %v3689
    %v4324 = vmul.f32 %v4318, %v3690
    %v4325 = vmul.f32 %v4318, %v3692
    %v4326 = vmul.f32 %v4318, %v3693
    %4335 = vrot.lane.b32.xlu0 %v4319, 126
    %v4336 = vpop.permute.xlu0 %4335
    %4337 = vrot.lane.b32.xlu0 %v4320, 126
    %v4338 = vpop.permute.xlu0 %4337
    %4339 = vrot.lane.b32.xlu0 %v4321, 126
    %v4340 = vpop.permute.xlu0 %4339
    %4341 = vrot.lane.b32.xlu0 %v4322, 126
    %v4342 = vpop.permute.xlu0 %4341
    %4343 = vrot.lane.b32.xlu0 %v4323, 126
    %v4344 = vpop.permute.xlu0 %4343
    %4345 = vrot.lane.b32.xlu0 %v4324, 126
    %v4346 = vpop.permute.xlu0 %4345
    %4347 = vrot.lane.b32.xlu0 %v4325, 126
    %v4348 = vpop.permute.xlu0 %4347
    %4349 = vrot.lane.b32.xlu0 %v4326, 126
    %v4350 = vpop.permute.xlu0 %4349
    %v4359 = vadd.f32 %v4309, %v4336
    %v4360 = vadd.f32 %v4310, %v4338
    %v4361 = vadd.f32 %v4311, %v4340
    %v4362 = vadd.f32 %v4312, %v4342
    %v4363 = vadd.f32 %v4313, %v4344
    %v4364 = vadd.f32 %v4314, %v4346
    %v4365 = vadd.f32 %v4315, %v4348
    %v4366 = vadd.f32 %v4316, %v4350
    %s4367 = sld [smem:[#allocation4 + $0x42]]
    %v4368 = vstv %s4367
    %v4369 = vmul.f32 %v4368, %v3683
    %v4370 = vmul.f32 %v4368, %v3684
    %v4371 = vmul.f32 %v4368, %v3685
    %v4372 = vmul.f32 %v4368, %v3686
    %v4373 = vmul.f32 %v4368, %v3687
    %v4374 = vmul.f32 %v4368, %v3688
    %v4375 = vmul.f32 %v4368, %v3689
    %v4376 = vmul.f32 %v4368, %v3690
    %v4377 = vmul.f32 %v4368, %v3691
    %v4378 = vmul.f32 %v4368, %v3692
    %v4379 = vmul.f32 %v4368, %v3693
    %v4380 = vmul.f32 %v4368, %v3694
    %v4393 = vrot.slane %v4369, 1
    %v4394 = vrot.slane %v4370, 1
    %v4395 = vsel %vm474, %v4393, %v4394
    %v4396 = vrot.slane %v4371, 1
    %v4397 = vsel %vm474, %v4394, %v4396
    %v4398 = vrot.slane %v4372, 1
    %v4399 = vrot.slane %v4373, 1
    %v4400 = vsel %vm474, %v4398, %v4399
    %v4401 = vrot.slane %v4374, 1
    %v4402 = vsel %vm474, %v4399, %v4401
    %v4403 = vrot.slane %v4375, 1
    %v4404 = vrot.slane %v4376, 1
    %v4405 = vsel %vm474, %v4403, %v4404
    %v4406 = vrot.slane %v4377, 1
    %v4407 = vsel %vm474, %v4404, %v4406
    %v4408 = vrot.slane %v4378, 1
    %v4409 = vrot.slane %v4379, 1
    %v4410 = vsel %vm474, %v4408, %v4409
    %v4411 = vrot.slane %v4380, 1
    %v4412 = vsel %vm474, %v4409, %v4411
    %v4421 = vadd.f32 %v4359, %v4395
    %v4422 = vadd.f32 %v4360, %v4397
    %v4423 = vadd.f32 %v4361, %v4400
    %v4424 = vadd.f32 %v4362, %v4402
    %v4425 = vadd.f32 %v4363, %v4405
    %v4426 = vadd.f32 %v4364, %v4407
    %v4427 = vadd.f32 %v4365, %v4410
    %v4428 = vadd.f32 %v4366, %v4412
    %s4429 = sld [smem:[#allocation4 + $0x43]]
    %v4430 = vstv %s4429
    %v4431 = vmul.f32 %v4430, %v3683
    %v4432 = vmul.f32 %v4430, %v3684
    %v4433 = vmul.f32 %v4430, %v3685
    %v4434 = vmul.f32 %v4430, %v3686
    %v4435 = vmul.f32 %v4430, %v3687
    %v4436 = vmul.f32 %v4430, %v3688
    %v4437 = vmul.f32 %v4430, %v3689
    %v4438 = vmul.f32 %v4430, %v3690
    %v4439 = vmul.f32 %v4430, %v3691
    %v4440 = vmul.f32 %v4430, %v3692
    %v4441 = vmul.f32 %v4430, %v3693
    %v4442 = vmul.f32 %v4430, %v3694
    %v4455 = vrot.slane %v4431, 1
    %v4456 = vrot.slane %v4432, 1
    %v4457 = vsel %vm474, %v4455, %v4456
    %v4458 = vrot.slane %v4433, 1
    %v4459 = vsel %vm474, %v4456, %v4458
    %v4460 = vrot.slane %v4434, 1
    %v4461 = vrot.slane %v4435, 1
    %v4462 = vsel %vm474, %v4460, %v4461
    %v4463 = vrot.slane %v4436, 1
    %v4464 = vsel %vm474, %v4461, %v4463
    %v4465 = vrot.slane %v4437, 1
    %v4466 = vrot.slane %v4438, 1
    %v4467 = vsel %vm474, %v4465, %v4466
    %v4468 = vrot.slane %v4439, 1
    %v4469 = vsel %vm474, %v4466, %v4468
    %v4470 = vrot.slane %v4440, 1
    %v4471 = vrot.slane %v4441, 1
    %v4472 = vsel %vm474, %v4470, %v4471
    %v4473 = vrot.slane %v4442, 1
    %v4474 = vsel %vm474, %v4471, %v4473
    %4475 = vrot.lane.b32.xlu0 %v4457, 127
    %v4476 = vpop.permute.xlu0 %4475
    %4477 = vrot.lane.b32.xlu0 %v4459, 127
    %v4478 = vpop.permute.xlu0 %4477
    %4479 = vrot.lane.b32.xlu0 %v4462, 127
    %v4480 = vpop.permute.xlu0 %4479
    %4481 = vrot.lane.b32.xlu0 %v4464, 127
    %v4482 = vpop.permute.xlu0 %4481
    %4483 = vrot.lane.b32.xlu0 %v4467, 127
    %v4484 = vpop.permute.xlu0 %4483
    %4485 = vrot.lane.b32.xlu0 %v4469, 127
    %v4486 = vpop.permute.xlu0 %4485
    %4487 = vrot.lane.b32.xlu0 %v4472, 127
    %v4488 = vpop.permute.xlu0 %4487
    %4489 = vrot.lane.b32.xlu0 %v4474, 127
    %v4490 = vpop.permute.xlu0 %4489
    %v4499 = vadd.f32 %v4421, %v4476
    %v4500 = vadd.f32 %v4422, %v4478
    %v4501 = vadd.f32 %v4423, %v4480
    %v4502 = vadd.f32 %v4424, %v4482
    %v4503 = vadd.f32 %v4425, %v4484
    %v4504 = vadd.f32 %v4426, %v4486
    %v4505 = vadd.f32 %v4427, %v4488
    %v4506 = vadd.f32 %v4428, %v4490
    %s4507 = sld [smem:[#allocation4 + $0x44]]
    %v4508 = vstv %s4507
    %v4509 = vmul.f32 %v4508, %v3683
    %v4510 = vmul.f32 %v4508, %v3684
    %v4511 = vmul.f32 %v4508, %v3685
    %v4512 = vmul.f32 %v4508, %v3686
    %v4513 = vmul.f32 %v4508, %v3687
    %v4514 = vmul.f32 %v4508, %v3688
    %v4515 = vmul.f32 %v4508, %v3689
    %v4516 = vmul.f32 %v4508, %v3690
    %v4517 = vmul.f32 %v4508, %v3691
    %v4518 = vmul.f32 %v4508, %v3692
    %v4519 = vmul.f32 %v4508, %v3693
    %v4520 = vmul.f32 %v4508, %v3694
    %v4533 = vrot.slane %v4509, 1
    %v4534 = vrot.slane %v4510, 1
    %v4535 = vsel %vm474, %v4533, %v4534
    %v4536 = vrot.slane %v4511, 1
    %v4537 = vsel %vm474, %v4534, %v4536
    %v4538 = vrot.slane %v4512, 1
    %v4539 = vrot.slane %v4513, 1
    %v4540 = vsel %vm474, %v4538, %v4539
    %v4541 = vrot.slane %v4514, 1
    %v4542 = vsel %vm474, %v4539, %v4541
    %v4543 = vrot.slane %v4515, 1
    %v4544 = vrot.slane %v4516, 1
    %v4545 = vsel %vm474, %v4543, %v4544
    %v4546 = vrot.slane %v4517, 1
    %v4547 = vsel %vm474, %v4544, %v4546
    %v4548 = vrot.slane %v4518, 1
    %v4549 = vrot.slane %v4519, 1
    %v4550 = vsel %vm474, %v4548, %v4549
    %v4551 = vrot.slane %v4520, 1
    %v4552 = vsel %vm474, %v4549, %v4551
    %4553 = vrot.lane.b32.xlu0 %v4535, 126
    %v4554 = vpop.permute.xlu0 %4553
    %4555 = vrot.lane.b32.xlu0 %v4537, 126
    %v4556 = vpop.permute.xlu0 %4555
    %4557 = vrot.lane.b32.xlu0 %v4540, 126
    %v4558 = vpop.permute.xlu0 %4557
    %4559 = vrot.lane.b32.xlu0 %v4542, 126
    %v4560 = vpop.permute.xlu0 %4559
    %4561 = vrot.lane.b32.xlu0 %v4545, 126
    %v4562 = vpop.permute.xlu0 %4561
    %4563 = vrot.lane.b32.xlu0 %v4547, 126
    %v4564 = vpop.permute.xlu0 %4563
    %4565 = vrot.lane.b32.xlu0 %v4550, 126
    %v4566 = vpop.permute.xlu0 %4565
    %4567 = vrot.lane.b32.xlu0 %v4552, 126
    %v4568 = vpop.permute.xlu0 %4567
    %v4577 = vadd.f32 %v4499, %v4554
    %v4578 = vadd.f32 %v4500, %v4556
    %v4579 = vadd.f32 %v4501, %v4558
    %v4580 = vadd.f32 %v4502, %v4560
    %v4581 = vadd.f32 %v4503, %v4562
    %v4582 = vadd.f32 %v4504, %v4564
    %v4583 = vadd.f32 %v4505, %v4566
    %v4584 = vadd.f32 %v4506, %v4568
    %s4585 = sld [smem:[#allocation4 + $0x45]]
    %v4586 = vstv %s4585
    %v4587 = vmul.f32 %v4586, %v3683
    %v4588 = vmul.f32 %v4586, %v3684
    %v4589 = vmul.f32 %v4586, %v3685
    %v4590 = vmul.f32 %v4586, %v3686
    %v4591 = vmul.f32 %v4586, %v3687
    %v4592 = vmul.f32 %v4586, %v3688
    %v4593 = vmul.f32 %v4586, %v3689
    %v4594 = vmul.f32 %v4586, %v3690
    %v4595 = vmul.f32 %v4586, %v3691
    %v4596 = vmul.f32 %v4586, %v3692
    %v4597 = vmul.f32 %v4586, %v3693
    %v4598 = vmul.f32 %v4586, %v3694
    %v4611 = vrot.slane %v4587, 2
    %v4612 = vrot.slane %v4588, 2
    %v4613 = vsel %vm693, %v4611, %v4612
    %v4614 = vrot.slane %v4589, 2
    %v4615 = vsel %vm693, %v4612, %v4614
    %v4616 = vrot.slane %v4590, 2
    %v4617 = vrot.slane %v4591, 2
    %v4618 = vsel %vm693, %v4616, %v4617
    %v4619 = vrot.slane %v4592, 2
    %v4620 = vsel %vm693, %v4617, %v4619
    %v4621 = vrot.slane %v4593, 2
    %v4622 = vrot.slane %v4594, 2
    %v4623 = vsel %vm693, %v4621, %v4622
    %v4624 = vrot.slane %v4595, 2
    %v4625 = vsel %vm693, %v4622, %v4624
    %v4626 = vrot.slane %v4596, 2
    %v4627 = vrot.slane %v4597, 2
    %v4628 = vsel %vm693, %v4626, %v4627
    %v4629 = vrot.slane %v4598, 2
    %v4630 = vsel %vm693, %v4627, %v4629
    %v4639 = vadd.f32 %v4577, %v4613
    %v4640 = vadd.f32 %v4578, %v4615
    %v4641 = vadd.f32 %v4579, %v4618
    %v4642 = vadd.f32 %v4580, %v4620
    %v4643 = vadd.f32 %v4581, %v4623
    %v4644 = vadd.f32 %v4582, %v4625
    %v4645 = vadd.f32 %v4583, %v4628
    %v4646 = vadd.f32 %v4584, %v4630
    %s4647 = sld [smem:[#allocation4 + $0x46]]
    %v4648 = vstv %s4647
    %v4649 = vmul.f32 %v4648, %v3683
    %v4650 = vmul.f32 %v4648, %v3684
    %v4651 = vmul.f32 %v4648, %v3685
    %v4652 = vmul.f32 %v4648, %v3686
    %v4653 = vmul.f32 %v4648, %v3687
    %v4654 = vmul.f32 %v4648, %v3688
    %v4655 = vmul.f32 %v4648, %v3689
    %v4656 = vmul.f32 %v4648, %v3690
    %v4657 = vmul.f32 %v4648, %v3691
    %v4658 = vmul.f32 %v4648, %v3692
    %v4659 = vmul.f32 %v4648, %v3693
    %v4660 = vmul.f32 %v4648, %v3694
    %v4673 = vrot.slane %v4649, 2
    %v4674 = vrot.slane %v4650, 2
    %v4675 = vsel %vm693, %v4673, %v4674
    %v4676 = vrot.slane %v4651, 2
    %v4677 = vsel %vm693, %v4674, %v4676
    %v4678 = vrot.slane %v4652, 2
    %v4679 = vrot.slane %v4653, 2
    %v4680 = vsel %vm693, %v4678, %v4679
    %v4681 = vrot.slane %v4654, 2
    %v4682 = vsel %vm693, %v4679, %v4681
    %v4683 = vrot.slane %v4655, 2
    %v4684 = vrot.slane %v4656, 2
    %v4685 = vsel %vm693, %v4683, %v4684
    %v4686 = vrot.slane %v4657, 2
    %v4687 = vsel %vm693, %v4684, %v4686
    %v4688 = vrot.slane %v4658, 2
    %v4689 = vrot.slane %v4659, 2
    %v4690 = vsel %vm693, %v4688, %v4689
    %v4691 = vrot.slane %v4660, 2
    %v4692 = vsel %vm693, %v4689, %v4691
    %4693 = vrot.lane.b32.xlu0 %v4675, 127
    %v4694 = vpop.permute.xlu0 %4693
    %4695 = vrot.lane.b32.xlu0 %v4677, 127
    %v4696 = vpop.permute.xlu0 %4695
    %4697 = vrot.lane.b32.xlu0 %v4680, 127
    %v4698 = vpop.permute.xlu0 %4697
    %4699 = vrot.lane.b32.xlu0 %v4682, 127
    %v4700 = vpop.permute.xlu0 %4699
    %4701 = vrot.lane.b32.xlu0 %v4685, 127
    %v4702 = vpop.permute.xlu0 %4701
    %4703 = vrot.lane.b32.xlu0 %v4687, 127
    %v4704 = vpop.permute.xlu0 %4703
    %4705 = vrot.lane.b32.xlu0 %v4690, 127
    %v4706 = vpop.permute.xlu0 %4705
    %4707 = vrot.lane.b32.xlu0 %v4692, 127
    %v4708 = vpop.permute.xlu0 %4707
    %v4717 = vadd.f32 %v4639, %v4694
    %v4718 = vadd.f32 %v4640, %v4696
    %v4719 = vadd.f32 %v4641, %v4698
    %v4720 = vadd.f32 %v4642, %v4700
    %v4721 = vadd.f32 %v4643, %v4702
    %v4722 = vadd.f32 %v4644, %v4704
    %v4723 = vadd.f32 %v4645, %v4706
    %v4724 = vadd.f32 %v4646, %v4708
    %s4725 = sld [smem:[#allocation4 + $0x47]]
    %v4726 = vstv %s4725
    %v4727 = vmul.f32 %v4726, %v3683
    %v4728 = vmul.f32 %v4726, %v3684
    %v4729 = vmul.f32 %v4726, %v3685
    %v4730 = vmul.f32 %v4726, %v3686
    %v4731 = vmul.f32 %v4726, %v3687
    %v4732 = vmul.f32 %v4726, %v3688
    %v4733 = vmul.f32 %v4726, %v3689
    %v4734 = vmul.f32 %v4726, %v3690
    %v4735 = vmul.f32 %v4726, %v3691
    %v4736 = vmul.f32 %v4726, %v3692
    %v4737 = vmul.f32 %v4726, %v3693
    %v4738 = vmul.f32 %v4726, %v3694
    %v4751 = vrot.slane %v4727, 2
    %v4752 = vrot.slane %v4728, 2
    %v4753 = vsel %vm693, %v4751, %v4752
    %v4754 = vrot.slane %v4729, 2
    %v4755 = vsel %vm693, %v4752, %v4754
    %v4756 = vrot.slane %v4730, 2
    %v4757 = vrot.slane %v4731, 2
    %v4758 = vsel %vm693, %v4756, %v4757
    %v4759 = vrot.slane %v4732, 2
    %v4760 = vsel %vm693, %v4757, %v4759
    %v4761 = vrot.slane %v4733, 2
    %v4762 = vrot.slane %v4734, 2
    %v4763 = vsel %vm693, %v4761, %v4762
    %v4764 = vrot.slane %v4735, 2
    %v4765 = vsel %vm693, %v4762, %v4764
    %v4766 = vrot.slane %v4736, 2
    %v4767 = vrot.slane %v4737, 2
    %v4768 = vsel %vm693, %v4766, %v4767
    %v4769 = vrot.slane %v4738, 2
    %v4770 = vsel %vm693, %v4767, %v4769
    %4771 = vrot.lane.b32.xlu0 %v4753, 126
    %v4772 = vpop.permute.xlu0 %4771
    %4773 = vrot.lane.b32.xlu0 %v4755, 126
    %v4774 = vpop.permute.xlu0 %4773
    %4775 = vrot.lane.b32.xlu0 %v4758, 126
    %v4776 = vpop.permute.xlu0 %4775
    %4777 = vrot.lane.b32.xlu0 %v4760, 126
    %v4778 = vpop.permute.xlu0 %4777
    %4779 = vrot.lane.b32.xlu0 %v4763, 126
    %v4780 = vpop.permute.xlu0 %4779
    %4781 = vrot.lane.b32.xlu0 %v4765, 126
    %v4782 = vpop.permute.xlu0 %4781
    %4783 = vrot.lane.b32.xlu0 %v4768, 126
    %v4784 = vpop.permute.xlu0 %4783
    %4785 = vrot.lane.b32.xlu0 %v4770, 126
    %v4786 = vpop.permute.xlu0 %4785
    %v4795 = vadd.f32 %v4717, %v4772
    %v4796 = vadd.f32 %v4718, %v4774
    %v4797 = vadd.f32 %v4719, %v4776
    %v4798 = vadd.f32 %v4720, %v4778
    %v4799 = vadd.f32 %v4721, %v4780
    %v4800 = vadd.f32 %v4722, %v4782
    %v4801 = vadd.f32 %v4723, %v4784
    %v4802 = vadd.f32 %v4724, %v4786
    %v4803 = vmax.f32 %v4241, 0.0
    %v4804 = vmax.f32 %v4242, 0.0
    %v4805 = vmax.f32 %v4243, 0.0
    %v4806 = vmax.f32 %v4244, 0.0
    %v4807 = vmax.f32 %v4245, 0.0
    %v4808 = vmax.f32 %v4246, 0.0
    %v4809 = vmax.f32 %v4247, 0.0
    %v4810 = vmax.f32 %v4248, 0.0
    %v4815 = vrot.slane %v4805, 7
    %vm4816 = vcmask 1041409
    %v4817 = vsel %vm4816, %v4815, %v4803
    %vm4818 = vcmask 1045509
    %v4819 = vsel %vm4818, %v4815, %v4817
    %v4820 = vrot.slane %v4807, 6
    %vm4821 = vcmask 1042434
    %v4822 = vsel %vm4821, %v4820, %v4819
    %vm4823 = vcmask 1046534
    %v4824 = vsel %vm4823, %v4820, %v4822
    %v4825 = vrot.slane %v4809, 5
    %vm4826 = vcmask 1043459
    %v4827 = vsel %vm4826, %v4825, %v4824
    %vm4828 = vcmask 1047559
    %v4829 = vsel %vm4828, %v4825, %v4827
    %vm4831 = vcmask 125952
    %4832 = vst.msk [vmem:[#allocation3] sm:$0xf] %vm4831, %v4829
    %v4833 = vrot.slane %v4803, 1
    %v4834 = vsel %vm4816, %v4805, %v4833
    %v4835 = vsel %vm4818, %v4805, %v4834
    %v4836 = vrot.slane %v4807, 7
    %v4837 = vsel %vm4821, %v4836, %v4835
    %v4838 = vsel %vm4823, %v4836, %v4837
    %v4839 = vrot.slane %v4809, 6
    %v4840 = vsel %vm4826, %v4839, %v4838
    %v4841 = vsel %vm4828, %v4839, %v4840
    %4842 = vrot.lane.b32.xlu0 %v4841, 16
    %v4843 = vpop.permute.xlu0 %4842
    %vm4845 = vcmask 257152
    %4846 = vst.msk [vmem:[#allocation3] sm:$0xf] %vm4845, %v4843
    %v4847 = vrot.slane %v4803, 2
    %v4848 = vrot.slane %v4805, 1
    %v4849 = vsel %vm4816, %v4848, %v4847
    %v4850 = vsel %vm4818, %v4848, %v4849
    %v4851 = vsel %vm4821, %v4807, %v4850
    %v4852 = vsel %vm4823, %v4807, %v4851
    %v4853 = vrot.slane %v4809, 7
    %v4854 = vsel %vm4826, %v4853, %v4852
    %v4855 = vsel %vm4828, %v4853, %v4854
    %4856 = vrot.lane.b32.xlu0 %v4855, 32
    %v4857 = vpop.permute.xlu0 %4856
    %vm4859 = vcmask 388352
    %4860 = vst.msk [vmem:[#allocation3] sm:$0xf] %vm4859, %v4857
    %v4861 = vrot.slane %v4803, 3
    %v4862 = vrot.slane %v4805, 2
    %v4863 = vsel %vm4816, %v4862, %v4861
    %v4864 = vsel %vm4818, %v4862, %v4863
    %v4865 = vrot.slane %v4807, 1
    %v4866 = vsel %vm4821, %v4865, %v4864
    %v4867 = vsel %vm4823, %v4865, %v4866
    %v4868 = vsel %vm4826, %v4809, %v4867
    %v4869 = vsel %vm4828, %v4809, %v4868
    %4870 = vrot.lane.b32.xlu0 %v4869, 48
    %v4871 = vpop.permute.xlu0 %4870
    %vm4873 = vcmask 519552
    %4874 = vst.msk [vmem:[#allocation3] sm:$0xf] %vm4873, %v4871
    %v4875 = vcombine.high %v4803, %v4803
    %v4876 = vcombine.high %v4805, %v4805
    %v4877 = vcombine.high %v4807, %v4807
    %v4878 = vcombine.high %v4809, %v4809
    %v4879 = vrot.slane %v4876, 7
    %v4880 = vsel %vm4816, %v4879, %v4875
    %v4881 = vsel %vm4818, %v4879, %v4880
    %v4882 = vrot.slane %v4877, 6
    %v4883 = vsel %vm4821, %v4882, %v4881
    %v4884 = vsel %vm4823, %v4882, %v4883
    %v4885 = vrot.slane %v4878, 5
    %v4886 = vsel %vm4826, %v4885, %v4884
    %v4887 = vsel %vm4828, %v4885, %v4886
    %4888 = vrot.lane.b32.xlu0 %v4887, 64
    %v4889 = vpop.permute.xlu0 %4888
    %vm4891 = vcmask 650752
    %4892 = vst.msk [vmem:[#allocation3] sm:$0xf] %vm4891, %v4889
    %v4893 = vrot.slane %v4875, 1
    %v4894 = vsel %vm4816, %v4876, %v4893
    %v4895 = vsel %vm4818, %v4876, %v4894
    %v4896 = vrot.slane %v4877, 7
    %v4897 = vsel %vm4821, %v4896, %v4895
    %v4898 = vsel %vm4823, %v4896, %v4897
    %v4899 = vrot.slane %v4878, 6
    %v4900 = vsel %vm4826, %v4899, %v4898
    %v4901 = vsel %vm4828, %v4899, %v4900
    %4902 = vrot.lane.b32.xlu0 %v4901, 80
    %v4903 = vpop.permute.xlu0 %4902
    %vm4905 = vcmask 781952
    %4906 = vst.msk [vmem:[#allocation3] sm:$0xf] %vm4905, %v4903
    %v4907 = vrot.slane %v4875, 2
    %v4908 = vrot.slane %v4876, 1
    %v4909 = vsel %vm4816, %v4908, %v4907
    %v4910 = vsel %vm4818, %v4908, %v4909
    %v4911 = vsel %vm4821, %v4877, %v4910
    %v4912 = vsel %vm4823, %v4877, %v4911
    %v4913 = vrot.slane %v4878, 7
    %v4914 = vsel %vm4826, %v4913, %v4912
    %v4915 = vsel %vm4828, %v4913, %v4914
    %4916 = vrot.lane.b32.xlu0 %v4915, 96
    %v4917 = vpop.permute.xlu0 %4916
    %vm4919 = vcmask 913152
    %4920 = vst.msk [vmem:[#allocation3] sm:$0xf] %vm4919, %v4917
    %v4921 = vrot.slane %v4875, 3
    %v4922 = vrot.slane %v4876, 2
    %v4923 = vsel %vm4816, %v4922, %v4921
    %v4924 = vsel %vm4818, %v4922, %v4923
    %v4925 = vrot.slane %v4877, 1
    %v4926 = vsel %vm4821, %v4925, %v4924
    %v4927 = vsel %vm4823, %v4925, %v4926
    %v4928 = vsel %vm4826, %v4878, %v4927
    %v4929 = vsel %vm4828, %v4878, %v4928
    %4930 = vrot.lane.b32.xlu0 %v4929, 112
    %v4931 = vpop.permute.xlu0 %4930
    %vm4933 = vcmask 1044352
    %4934 = vst.msk [vmem:[#allocation3] sm:$0xf] %vm4933, %v4931
    %v4939 = vrot.slane %v4806, 7
    %v4940 = vsel %vm4816, %v4939, %v4804
    %v4941 = vsel %vm4818, %v4939, %v4940
    %v4942 = vrot.slane %v4808, 6
    %v4943 = vsel %vm4821, %v4942, %v4941
    %v4944 = vsel %vm4823, %v4942, %v4943
    %v4945 = vrot.slane %v4810, 5
    %v4946 = vsel %vm4826, %v4945, %v4944
    %v4947 = vsel %vm4828, %v4945, %v4946
    %4949 = vst.msk [vmem:[#allocation3 + $0x4] sm:$0xf] %vm4831, %v4947
    %v4950 = vrot.slane %v4804, 1
    %v4951 = vsel %vm4816, %v4806, %v4950
    %v4952 = vsel %vm4818, %v4806, %v4951
    %v4953 = vrot.slane %v4808, 7
    %v4954 = vsel %vm4821, %v4953, %v4952
    %v4955 = vsel %vm4823, %v4953, %v4954
    %v4956 = vrot.slane %v4810, 6
    %v4957 = vsel %vm4826, %v4956, %v4955
    %v4958 = vsel %vm4828, %v4956, %v4957
    %4959 = vrot.lane.b32.xlu0 %v4958, 16
    %v4960 = vpop.permute.xlu0 %4959
    %4962 = vst.msk [vmem:[#allocation3 + $0x4] sm:$0xf] %vm4845, %v4960
    %v4963 = vrot.slane %v4804, 2
    %v4964 = vrot.slane %v4806, 1
    %v4965 = vsel %vm4816, %v4964, %v4963
    %v4966 = vsel %vm4818, %v4964, %v4965
    %v4967 = vsel %vm4821, %v4808, %v4966
    %v4968 = vsel %vm4823, %v4808, %v4967
    %v4969 = vrot.slane %v4810, 7
    %v4970 = vsel %vm4826, %v4969, %v4968
    %v4971 = vsel %vm4828, %v4969, %v4970
    %4972 = vrot.lane.b32.xlu0 %v4971, 32
    %v4973 = vpop.permute.xlu0 %4972
    %4975 = vst.msk [vmem:[#allocation3 + $0x4] sm:$0xf] %vm4859, %v4973
    %v4976 = vrot.slane %v4804, 3
    %v4977 = vrot.slane %v4806, 2
    %v4978 = vsel %vm4816, %v4977, %v4976
    %v4979 = vsel %vm4818, %v4977, %v4978
    %v4980 = vrot.slane %v4808, 1
    %v4981 = vsel %vm4821, %v4980, %v4979
    %v4982 = vsel %vm4823, %v4980, %v4981
    %v4983 = vsel %vm4826, %v4810, %v4982
    %v4984 = vsel %vm4828, %v4810, %v4983
    %4985 = vrot.lane.b32.xlu0 %v4984, 48
    %v4986 = vpop.permute.xlu0 %4985
    %4988 = vst.msk [vmem:[#allocation3 + $0x4] sm:$0xf] %vm4873, %v4986
    %v4989 = vcombine.high %v4804, %v4804
    %v4990 = vcombine.high %v4806, %v4806
    %v4991 = vcombine.high %v4808, %v4808
    %v4992 = vcombine.high %v4810, %v4810
    %v4993 = vrot.slane %v4990, 7
    %v4994 = vsel %vm4816, %v4993, %v4989
    %v4995 = vsel %vm4818, %v4993, %v4994
    %v4996 = vrot.slane %v4991, 6
    %v4997 = vsel %vm4821, %v4996, %v4995
    %v4998 = vsel %vm4823, %v4996, %v4997
    %v4999 = vrot.slane %v4992, 5
    %v5000 = vsel %vm4826, %v4999, %v4998
    %v5001 = vsel %vm4828, %v4999, %v5000
    %5002 = vrot.lane.b32.xlu0 %v5001, 64
    %v5003 = vpop.permute.xlu0 %5002
    %5005 = vst.msk [vmem:[#allocation3 + $0x4] sm:$0xf] %vm4891, %v5003
    %v5006 = vrot.slane %v4989, 1
    %v5007 = vsel %vm4816, %v4990, %v5006
    %v5008 = vsel %vm4818, %v4990, %v5007
    %v5009 = vrot.slane %v4991, 7
    %v5010 = vsel %vm4821, %v5009, %v5008
    %v5011 = vsel %vm4823, %v5009, %v5010
    %v5012 = vrot.slane %v4992, 6
    %v5013 = vsel %vm4826, %v5012, %v5011
    %v5014 = vsel %vm4828, %v5012, %v5013
    %5015 = vrot.lane.b32.xlu0 %v5014, 80
    %v5016 = vpop.permute.xlu0 %5015
    %5018 = vst.msk [vmem:[#allocation3 + $0x4] sm:$0xf] %vm4905, %v5016
    %v5019 = vrot.slane %v4989, 2
    %v5020 = vrot.slane %v4990, 1
    %v5021 = vsel %vm4816, %v5020, %v5019
    %v5022 = vsel %vm4818, %v5020, %v5021
    %v5023 = vsel %vm4821, %v4991, %v5022
    %v5024 = vsel %vm4823, %v4991, %v5023
    %v5025 = vrot.slane %v4992, 7
    %v5026 = vsel %vm4826, %v5025, %v5024
    %v5027 = vsel %vm4828, %v5025, %v5026
    %5028 = vrot.lane.b32.xlu0 %v5027, 96
    %v5029 = vpop.permute.xlu0 %5028
    %5031 = vst.msk [vmem:[#allocation3 + $0x4] sm:$0xf] %vm4919, %v5029
    %v5032 = vrot.slane %v4989, 3
    %v5033 = vrot.slane %v4990, 2
    %v5034 = vsel %vm4816, %v5033, %v5032
    %v5035 = vsel %vm4818, %v5033, %v5034
    %v5036 = vrot.slane %v4991, 1
    %v5037 = vsel %vm4821, %v5036, %v5035
    %v5038 = vsel %vm4823, %v5036, %v5037
    %v5039 = vsel %vm4826, %v4992, %v5038
    %v5040 = vsel %vm4828, %v4992, %v5039
    %5041 = vrot.lane.b32.xlu0 %v5040, 112
    %v5042 = vpop.permute.xlu0 %5041
    %5044 = vst.msk [vmem:[#allocation3 + $0x4] sm:$0xf] %vm4933, %v5042
    %v5045 = vmax.f32 %v4795, 0.0
    %v5046 = vmax.f32 %v4796, 0.0
    %v5047 = vmax.f32 %v4797, 0.0
    %v5048 = vmax.f32 %v4798, 0.0
    %v5049 = vmax.f32 %v4799, 0.0
    %v5050 = vmax.f32 %v4800, 0.0
    %v5051 = vmax.f32 %v4801, 0.0
    %v5052 = vmax.f32 %v4802, 0.0
    %v5057 = vrot.slane %v5047, 7
    %v5058 = vsel %vm4816, %v5057, %v5045
    %v5059 = vsel %vm4818, %v5057, %v5058
    %v5060 = vrot.slane %v5049, 6
    %v5061 = vsel %vm4821, %v5060, %v5059
    %v5062 = vsel %vm4823, %v5060, %v5061
    %v5063 = vrot.slane %v5051, 5
    %v5064 = vsel %vm4826, %v5063, %v5062
    %v5065 = vsel %vm4828, %v5063, %v5064
    %5067 = vst.msk [vmem:[#allocation3 + $0x8] sm:$0xf] %vm4831, %v5065
    %v5068 = vrot.slane %v5045, 1
    %v5069 = vsel %vm4816, %v5047, %v5068
    %v5070 = vsel %vm4818, %v5047, %v5069
    %v5071 = vrot.slane %v5049, 7
    %v5072 = vsel %vm4821, %v5071, %v5070
    %v5073 = vsel %vm4823, %v5071, %v5072
    %v5074 = vrot.slane %v5051, 6
    %v5075 = vsel %vm4826, %v5074, %v5073
    %v5076 = vsel %vm4828, %v5074, %v5075
    %5077 = vrot.lane.b32.xlu0 %v5076, 16
    %v5078 = vpop.permute.xlu0 %5077
    %5080 = vst.msk [vmem:[#allocation3 + $0x8] sm:$0xf] %vm4845, %v5078
    %v5081 = vrot.slane %v5045, 2
    %v5082 = vrot.slane %v5047, 1
    %v5083 = vsel %vm4816, %v5082, %v5081
    %v5084 = vsel %vm4818, %v5082, %v5083
    %v5085 = vsel %vm4821, %v5049, %v5084
    %v5086 = vsel %vm4823, %v5049, %v5085
    %v5087 = vrot.slane %v5051, 7
    %v5088 = vsel %vm4826, %v5087, %v5086
    %v5089 = vsel %vm4828, %v5087, %v5088
    %5090 = vrot.lane.b32.xlu0 %v5089, 32
    %v5091 = vpop.permute.xlu0 %5090
    %5093 = vst.msk [vmem:[#allocation3 + $0x8] sm:$0xf] %vm4859, %v5091
    %v5094 = vrot.slane %v5045, 3
    %v5095 = vrot.slane %v5047, 2
    %v5096 = vsel %vm4816, %v5095, %v5094
    %v5097 = vsel %vm4818, %v5095, %v5096
    %v5098 = vrot.slane %v5049, 1
    %v5099 = vsel %vm4821, %v5098, %v5097
    %v5100 = vsel %vm4823, %v5098, %v5099
    %v5101 = vsel %vm4826, %v5051, %v5100
    %v5102 = vsel %vm4828, %v5051, %v5101
    %5103 = vrot.lane.b32.xlu0 %v5102, 48
    %v5104 = vpop.permute.xlu0 %5103
    %5106 = vst.msk [vmem:[#allocation3 + $0x8] sm:$0xf] %vm4873, %v5104
    %v5107 = vcombine.high %v5045, %v5045
    %v5108 = vcombine.high %v5047, %v5047
    %v5109 = vcombine.high %v5049, %v5049
    %v5110 = vcombine.high %v5051, %v5051
    %v5111 = vrot.slane %v5108, 7
    %v5112 = vsel %vm4816, %v5111, %v5107
    %v5113 = vsel %vm4818, %v5111, %v5112
    %v5114 = vrot.slane %v5109, 6
    %v5115 = vsel %vm4821, %v5114, %v5113
    %v5116 = vsel %vm4823, %v5114, %v5115
    %v5117 = vrot.slane %v5110, 5
    %v5118 = vsel %vm4826, %v5117, %v5116
    %v5119 = vsel %vm4828, %v5117, %v5118
    %5120 = vrot.lane.b32.xlu0 %v5119, 64
    %v5121 = vpop.permute.xlu0 %5120
    %5123 = vst.msk [vmem:[#allocation3 + $0x8] sm:$0xf] %vm4891, %v5121
    %v5124 = vrot.slane %v5107, 1
    %v5125 = vsel %vm4816, %v5108, %v5124
    %v5126 = vsel %vm4818, %v5108, %v5125
    %v5127 = vrot.slane %v5109, 7
    %v5128 = vsel %vm4821, %v5127, %v5126
    %v5129 = vsel %vm4823, %v5127, %v5128
    %v5130 = vrot.slane %v5110, 6
    %v5131 = vsel %vm4826, %v5130, %v5129
    %v5132 = vsel %vm4828, %v5130, %v5131
    %5133 = vrot.lane.b32.xlu0 %v5132, 80
    %v5134 = vpop.permute.xlu0 %5133
    %5136 = vst.msk [vmem:[#allocation3 + $0x8] sm:$0xf] %vm4905, %v5134
    %v5137 = vrot.slane %v5107, 2
    %v5138 = vrot.slane %v5108, 1
    %v5139 = vsel %vm4816, %v5138, %v5137
    %v5140 = vsel %vm4818, %v5138, %v5139
    %v5141 = vsel %vm4821, %v5109, %v5140
    %v5142 = vsel %vm4823, %v5109, %v5141
    %v5143 = vrot.slane %v5110, 7
    %v5144 = vsel %vm4826, %v5143, %v5142
    %v5145 = vsel %vm4828, %v5143, %v5144
    %5146 = vrot.lane.b32.xlu0 %v5145, 96
    %v5147 = vpop.permute.xlu0 %5146
    %5149 = vst.msk [vmem:[#allocation3 + $0x8] sm:$0xf] %vm4919, %v5147
    %v5150 = vrot.slane %v5107, 3
    %v5151 = vrot.slane %v5108, 2
    %v5152 = vsel %vm4816, %v5151, %v5150
    %v5153 = vsel %vm4818, %v5151, %v5152
    %v5154 = vrot.slane %v5109, 1
    %v5155 = vsel %vm4821, %v5154, %v5153
    %v5156 = vsel %vm4823, %v5154, %v5155
    %v5157 = vsel %vm4826, %v5110, %v5156
    %v5158 = vsel %vm4828, %v5110, %v5157
    %5159 = vrot.lane.b32.xlu0 %v5158, 112
    %v5160 = vpop.permute.xlu0 %5159
    %5162 = vst.msk [vmem:[#allocation3 + $0x8] sm:$0xf] %vm4933, %v5160
    %v5167 = vrot.slane %v5048, 7
    %v5168 = vsel %vm4816, %v5167, %v5046
    %v5169 = vsel %vm4818, %v5167, %v5168
    %v5170 = vrot.slane %v5050, 6
    %v5171 = vsel %vm4821, %v5170, %v5169
    %v5172 = vsel %vm4823, %v5170, %v5171
    %v5173 = vrot.slane %v5052, 5
    %v5174 = vsel %vm4826, %v5173, %v5172
    %v5175 = vsel %vm4828, %v5173, %v5174
    %5177 = vst.msk [vmem:[#allocation3 + $0xc] sm:$0xf] %vm4831, %v5175
    %v5178 = vrot.slane %v5046, 1
    %v5179 = vsel %vm4816, %v5048, %v5178
    %v5180 = vsel %vm4818, %v5048, %v5179
    %v5181 = vrot.slane %v5050, 7
    %v5182 = vsel %vm4821, %v5181, %v5180
    %v5183 = vsel %vm4823, %v5181, %v5182
    %v5184 = vrot.slane %v5052, 6
    %v5185 = vsel %vm4826, %v5184, %v5183
    %v5186 = vsel %vm4828, %v5184, %v5185
    %5187 = vrot.lane.b32.xlu0 %v5186, 16
    %v5188 = vpop.permute.xlu0 %5187
    %5190 = vst.msk [vmem:[#allocation3 + $0xc] sm:$0xf] %vm4845, %v5188
    %v5191 = vrot.slane %v5046, 2
    %v5192 = vrot.slane %v5048, 1
    %v5193 = vsel %vm4816, %v5192, %v5191
    %v5194 = vsel %vm4818, %v5192, %v5193
    %v5195 = vsel %vm4821, %v5050, %v5194
    %v5196 = vsel %vm4823, %v5050, %v5195
    %v5197 = vrot.slane %v5052, 7
    %v5198 = vsel %vm4826, %v5197, %v5196
    %v5199 = vsel %vm4828, %v5197, %v5198
    %5200 = vrot.lane.b32.xlu0 %v5199, 32
    %v5201 = vpop.permute.xlu0 %5200
    %5203 = vst.msk [vmem:[#allocation3 + $0xc] sm:$0xf] %vm4859, %v5201
    %v5204 = vrot.slane %v5046, 3
    %v5205 = vrot.slane %v5048, 2
    %v5206 = vsel %vm4816, %v5205, %v5204
    %v5207 = vsel %vm4818, %v5205, %v5206
    %v5208 = vrot.slane %v5050, 1
    %v5209 = vsel %vm4821, %v5208, %v5207
    %v5210 = vsel %vm4823, %v5208, %v5209
    %v5211 = vsel %vm4826, %v5052, %v5210
    %v5212 = vsel %vm4828, %v5052, %v5211
    %5213 = vrot.lane.b32.xlu0 %v5212, 48
    %v5214 = vpop.permute.xlu0 %5213
    %5216 = vst.msk [vmem:[#allocation3 + $0xc] sm:$0xf] %vm4873, %v5214
    %v5217 = vcombine.high %v5046, %v5046
    %v5218 = vcombine.high %v5048, %v5048
    %v5219 = vcombine.high %v5050, %v5050
    %v5220 = vcombine.high %v5052, %v5052
    %v5221 = vrot.slane %v5218, 7
    %v5222 = vsel %vm4816, %v5221, %v5217
    %v5223 = vsel %vm4818, %v5221, %v5222
    %v5224 = vrot.slane %v5219, 6
    %v5225 = vsel %vm4821, %v5224, %v5223
    %v5226 = vsel %vm4823, %v5224, %v5225
    %v5227 = vrot.slane %v5220, 5
    %v5228 = vsel %vm4826, %v5227, %v5226
    %v5229 = vsel %vm4828, %v5227, %v5228
    %5230 = vrot.lane.b32.xlu0 %v5229, 64
    %v5231 = vpop.permute.xlu0 %5230
    %5233 = vst.msk [vmem:[#allocation3 + $0xc] sm:$0xf] %vm4891, %v5231
    %v5234 = vrot.slane %v5217, 1
    %v5235 = vsel %vm4816, %v5218, %v5234
    %v5236 = vsel %vm4818, %v5218, %v5235
    %v5237 = vrot.slane %v5219, 7
    %v5238 = vsel %vm4821, %v5237, %v5236
    %v5239 = vsel %vm4823, %v5237, %v5238
    %v5240 = vrot.slane %v5220, 6
    %v5241 = vsel %vm4826, %v5240, %v5239
    %v5242 = vsel %vm4828, %v5240, %v5241
    %5243 = vrot.lane.b32.xlu0 %v5242, 80
    %v5244 = vpop.permute.xlu0 %5243
    %5246 = vst.msk [vmem:[#allocation3 + $0xc] sm:$0xf] %vm4905, %v5244
    %v5247 = vrot.slane %v5217, 2
    %v5248 = vrot.slane %v5218, 1
    %v5249 = vsel %vm4816, %v5248, %v5247
    %v5250 = vsel %vm4818, %v5248, %v5249
    %v5251 = vsel %vm4821, %v5219, %v5250
    %v5252 = vsel %vm4823, %v5219, %v5251
    %v5253 = vrot.slane %v5220, 7
    %v5254 = vsel %vm4826, %v5253, %v5252
    %v5255 = vsel %vm4828, %v5253, %v5254
    %5256 = vrot.lane.b32.xlu0 %v5255, 96
    %v5257 = vpop.permute.xlu0 %5256
    %5259 = vst.msk [vmem:[#allocation3 + $0xc] sm:$0xf] %vm4919, %v5257
    %v5260 = vrot.slane %v5217, 3
    %v5261 = vrot.slane %v5218, 2
    %v5262 = vsel %vm4816, %v5261, %v5260
    %v5263 = vsel %vm4818, %v5261, %v5262
    %v5264 = vrot.slane %v5219, 1
    %v5265 = vsel %vm4821, %v5264, %v5263
    %v5266 = vsel %vm4823, %v5264, %v5265
    %v5267 = vsel %vm4826, %v5220, %v5266
    %v5268 = vsel %vm4828, %v5220, %v5267
    %5269 = vrot.lane.b32.xlu0 %v5268, 112
    %v5270 = vpop.permute.xlu0 %5269
    %5272 = vst.msk [vmem:[#allocation3 + $0xc] sm:$0xf] %vm4933, %v5270
    %v5273 = vld [vmem:[#allocation3] sm:$0xff]
    %v5274 = vld [vmem:[#allocation3 + $0x8] sm:$0xff]
    %v5275 = vld [vmem:[#allocation10] sm:$0xff]
    %v5276 = vld [vmem:[#allocation10 + $0x8] sm:$0xff]
    %v5277 = vld [vmem:[#allocation10 + $0x10] sm:$0xff]
    %v5278 = vld [vmem:[#allocation10 + $0x18] sm:$0xff]
    %v5279 = vld [vmem:[#allocation10 + $0x20] sm:$0xff]
    %v5280 = vld [vmem:[#allocation10 + $0x28] sm:$0xff]
    %v5281 = vld [vmem:[#allocation10 + $0x30] sm:$0xff]
    %v5282 = vld [vmem:[#allocation10 + $0x38] sm:$0xff]
    %v5283 = vld [vmem:[#allocation10 + $0x40] sm:$0xff]
    %v5284 = vld [vmem:[#allocation10 + $0x48] sm:$0xff]
    %v5285 = vld [vmem:[#allocation10 + $0x50] sm:$0xff]
    %v5286 = vld [vmem:[#allocation10 + $0x58] sm:$0xff]
    %v5287 = vld [vmem:[#allocation10 + $0x60] sm:$0xff]
    %v5288 = vld [vmem:[#allocation10 + $0x68] sm:$0xff]
    %v5289 = vld [vmem:[#allocation10 + $0x70] sm:$0xff]
    %v5290 = vld [vmem:[#allocation10 + $0x78] sm:$0xff]
    %v5291 = vld [vmem:[#allocation10 + $0x80] sm:$0xff]
    %v5292 = vld [vmem:[#allocation10 + $0x88] sm:$0xff]
    %v5293 = vld [vmem:[#allocation10 + $0x90] sm:$0xff]
    %v5294 = vld [vmem:[#allocation10 + $0x98] sm:$0xff]
    %v5295 = vld [vmem:[#allocation10 + $0xa0] sm:$0xff]
    %v5296 = vld [vmem:[#allocation10 + $0xa8] sm:$0xff]
    %v5297 = vld [vmem:[#allocation10 + $0xb0] sm:$0xff]
    %v5298 = vld [vmem:[#allocation10 + $0xb8] sm:$0xff]
    %v5299 = vld [vmem:[#allocation10 + $0xc0] sm:$0xff]
    %v5300 = vld [vmem:[#allocation10 + $0xc8] sm:$0xff]
    %v5301 = vld [vmem:[#allocation10 + $0xd0] sm:$0xff]
    %v5302 = vld [vmem:[#allocation10 + $0xd8] sm:$0xff]
    %v5303 = vld [vmem:[#allocation10 + $0xe0] sm:$0xff]
    %v5304 = vld [vmem:[#allocation10 + $0xe8] sm:$0xff]
    %v5305 = vld [vmem:[#allocation10 + $0xf0] sm:$0xff]
    %v5306 = vld [vmem:[#allocation10 + $0xf8] sm:$0xff]
    %v5307 = vld [vmem:[#allocation10 + $0x100] sm:$0xff]
    %v5308 = vld [vmem:[#allocation10 + $0x108] sm:$0xff]
    %v5309 = vld [vmem:[#allocation10 + $0x110] sm:$0xff]
    %v5310 = vld [vmem:[#allocation10 + $0x118] sm:$0xff]
    %v5311 = vld [vmem:[#allocation10 + $0x120] sm:$0xff]
    %v5312 = vld [vmem:[#allocation10 + $0x128] sm:$0xff]
    %v5313 = vld [vmem:[#allocation10 + $0x130] sm:$0xff]
    %v5314 = vld [vmem:[#allocation10 + $0x138] sm:$0xff]
    %v5315 = vld [vmem:[#allocation10 + $0x140] sm:$0xff]
    %v5316 = vld [vmem:[#allocation10 + $0x148] sm:$0xff]
    %v5317 = vld [vmem:[#allocation10 + $0x150] sm:$0xff]
    %v5318 = vld [vmem:[#allocation10 + $0x158] sm:$0xff]
    %v5319 = vld [vmem:[#allocation10 + $0x160] sm:$0xff]
    %v5320 = vld [vmem:[#allocation10 + $0x168] sm:$0xff]
    %v5321 = vld [vmem:[#allocation10 + $0x170] sm:$0xff]
    %v5322 = vld [vmem:[#allocation10 + $0x178] sm:$0xff]
    %v5323 = vld [vmem:[#allocation10 + $0x180] sm:$0xff]
    %v5324 = vld [vmem:[#allocation10 + $0x188] sm:$0xff]
    %v5325 = vld [vmem:[#allocation10 + $0x190] sm:$0xff]
    %v5326 = vld [vmem:[#allocation10 + $0x198] sm:$0xff]
    %v5327 = vld [vmem:[#allocation10 + $0x1a0] sm:$0xff]
    %v5328 = vld [vmem:[#allocation10 + $0x1a8] sm:$0xff]
    %v5329 = vld [vmem:[#allocation10 + $0x1b0] sm:$0xff]
    %v5330 = vld [vmem:[#allocation10 + $0x1b8] sm:$0xff]
    %v5331 = vld [vmem:[#allocation10 + $0x1c0] sm:$0xff]
    %v5332 = vld [vmem:[#allocation10 + $0x1c8] sm:$0xff]
    %v5333 = vld [vmem:[#allocation10 + $0x1d0] sm:$0xff]
    %v5334 = vld [vmem:[#allocation10 + $0x1d8] sm:$0xff]
    %v5335 = vld [vmem:[#allocation10 + $0x1e0] sm:$0xff]
    %v5336 = vld [vmem:[#allocation10 + $0x1e8] sm:$0xff]
    %v5337 = vld [vmem:[#allocation10 + $0x1f0] sm:$0xff]
    %v5338 = vld [vmem:[#allocation10 + $0x1f8] sm:$0xff]
    %v5339 = vld [vmem:[#allocation10 + $0x200] sm:$0xff]
    %v5340 = vld [vmem:[#allocation10 + $0x208] sm:$0xff]
    %v5341 = vld [vmem:[#allocation10 + $0x210] sm:$0xff]
    %v5342 = vld [vmem:[#allocation10 + $0x218] sm:$0xff]
    %v5343 = vld [vmem:[#allocation10 + $0x220] sm:$0xff]
    %v5344 = vld [vmem:[#allocation10 + $0x228] sm:$0xff]
    %v5345 = vld [vmem:[#allocation10 + $0x230] sm:$0xff]
    %v5346 = vld [vmem:[#allocation10 + $0x238] sm:$0xff]
    %v5347 = vld [vmem:[#allocation10 + $0x240] sm:$0xff]
    %v5348 = vld [vmem:[#allocation10 + $0x248] sm:$0xff]
    %v5349 = vld [vmem:[#allocation10 + $0x250] sm:$0xff]
    %v5350 = vld [vmem:[#allocation10 + $0x258] sm:$0xff]
    %v5351 = vld [vmem:[#allocation10 + $0x260] sm:$0xff]
    %v5352 = vld [vmem:[#allocation10 + $0x268] sm:$0xff]
    %v5353 = vld [vmem:[#allocation10 + $0x270] sm:$0xff]
    %v5354 = vld [vmem:[#allocation10 + $0x278] sm:$0xff]
    %v5355 = vld [vmem:[#allocation10 + $0x280] sm:$0xff]
    %v5356 = vld [vmem:[#allocation10 + $0x288] sm:$0xff]
    %v5357 = vld [vmem:[#allocation10 + $0x290] sm:$0xff]
    %v5358 = vld [vmem:[#allocation10 + $0x298] sm:$0xff]
    %v5359 = vld [vmem:[#allocation10 + $0x2a0] sm:$0xff]
    %v5360 = vld [vmem:[#allocation10 + $0x2a8] sm:$0xff]
    %v5361 = vld [vmem:[#allocation10 + $0x2b0] sm:$0xff]
    %v5362 = vld [vmem:[#allocation10 + $0x2b8] sm:$0xff]
    %v5363 = vld [vmem:[#allocation10 + $0x2c0] sm:$0xff]
    %v5364 = vld [vmem:[#allocation10 + $0x2c8] sm:$0xff]
    %v5365 = vld [vmem:[#allocation10 + $0x2d0] sm:$0xff]
    %v5366 = vld [vmem:[#allocation10 + $0x2d8] sm:$0xff]
    %v5367 = vld [vmem:[#allocation10 + $0x2e0] sm:$0xff]
    %v5368 = vld [vmem:[#allocation10 + $0x2e8] sm:$0xff]
    %v5369 = vld [vmem:[#allocation10 + $0x2f0] sm:$0xff]
    %v5370 = vld [vmem:[#allocation10 + $0x2f8] sm:$0xff]
    %v5371 = vld [vmem:[#allocation10 + $0x300] sm:$0xff]
    %v5372 = vld [vmem:[#allocation10 + $0x308] sm:$0xff]
    %v5373 = vld [vmem:[#allocation10 + $0x310] sm:$0xff]
    %v5374 = vld [vmem:[#allocation10 + $0x318] sm:$0xff]
    %v5375 = vld [vmem:[#allocation10 + $0x320] sm:$0xff]
    %v5376 = vld [vmem:[#allocation10 + $0x328] sm:$0xff]
    %v5377 = vld [vmem:[#allocation10 + $0x330] sm:$0xff]
    %v5378 = vld [vmem:[#allocation10 + $0x338] sm:$0xff]
    %v5379 = vld [vmem:[#allocation10 + $0x340] sm:$0xff]
    %v5380 = vld [vmem:[#allocation10 + $0x348] sm:$0xff]
    %v5381 = vld [vmem:[#allocation10 + $0x350] sm:$0xff]
    %v5382 = vld [vmem:[#allocation10 + $0x358] sm:$0xff]
    %v5383 = vld [vmem:[#allocation10 + $0x360] sm:$0xff]
    %v5384 = vld [vmem:[#allocation10 + $0x368] sm:$0xff]
    %v5385 = vld [vmem:[#allocation10 + $0x370] sm:$0xff]
    %v5386 = vld [vmem:[#allocation10 + $0x378] sm:$0xff]
    %v5387 = vld [vmem:[#allocation10 + $0x380] sm:$0xff]
    %v5388 = vld [vmem:[#allocation10 + $0x388] sm:$0xff]
    %v5389 = vld [vmem:[#allocation10 + $0x390] sm:$0xff]
    %v5390 = vld [vmem:[#allocation10 + $0x398] sm:$0xff]
    %v5391 = vld [vmem:[#allocation10 + $0x3a0] sm:$0xff]
    %v5392 = vld [vmem:[#allocation10 + $0x3a8] sm:$0xff]
    %v5393 = vld [vmem:[#allocation10 + $0x3b0] sm:$0xff]
    %v5394 = vld [vmem:[#allocation10 + $0x3b8] sm:$0xff]
    %v5395 = vld [vmem:[#allocation10 + $0x3c0] sm:$0xff]
    %v5396 = vld [vmem:[#allocation10 + $0x3c8] sm:$0xff]
    %v5397 = vld [vmem:[#allocation10 + $0x3d0] sm:$0xff]
    %v5398 = vld [vmem:[#allocation10 + $0x3d8] sm:$0xff]
    %v5399 = vld [vmem:[#allocation10 + $0x3e0] sm:$0xff]
    %v5400 = vld [vmem:[#allocation10 + $0x3e8] sm:$0xff]
    %v5401 = vld [vmem:[#allocation10 + $0x3f0] sm:$0xff]
    %v5402 = vld [vmem:[#allocation10 + $0x3f8] sm:$0xff]
    %v5403 = vld [vmem:[#allocation10 + $0x400] sm:$0xff]
    %v5404 = vld [vmem:[#allocation10 + $0x408] sm:$0xff]
    %v5405 = vld [vmem:[#allocation10 + $0x410] sm:$0xff]
    %v5406 = vld [vmem:[#allocation10 + $0x418] sm:$0xff]
    %v5407 = vld [vmem:[#allocation10 + $0x420] sm:$0xff]
    %v5408 = vld [vmem:[#allocation10 + $0x428] sm:$0xff]
    %v5409 = vld [vmem:[#allocation10 + $0x430] sm:$0xff]
    %v5410 = vld [vmem:[#allocation10 + $0x438] sm:$0xff]
    %v5411 = vld [vmem:[#allocation10 + $0x440] sm:$0xff]
    %v5412 = vld [vmem:[#allocation10 + $0x448] sm:$0xff]
    %v5413 = vld [vmem:[#allocation10 + $0x450] sm:$0xff]
    %v5414 = vld [vmem:[#allocation10 + $0x458] sm:$0xff]
    %v5415 = vld [vmem:[#allocation10 + $0x460] sm:$0xff]
    %v5416 = vld [vmem:[#allocation10 + $0x468] sm:$0xff]
    %v5417 = vld [vmem:[#allocation10 + $0x470] sm:$0xff]
    %v5418 = vld [vmem:[#allocation10 + $0x478] sm:$0xff]
    %v5419 = vld [vmem:[#allocation10 + $0x480] sm:$0xff]
    %v5420 = vld [vmem:[#allocation10 + $0x488] sm:$0xff]
    %v5421 = vld [vmem:[#allocation10 + $0x490] sm:$0xff]
    %v5422 = vld [vmem:[#allocation10 + $0x498] sm:$0xff]
    %v5423 = vld [vmem:[#allocation10 + $0x4a0] sm:$0xff]
    %v5424 = vld [vmem:[#allocation10 + $0x4a8] sm:$0xff]
    %v5425 = vld [vmem:[#allocation10 + $0x4b0] sm:$0xff]
    %v5426 = vld [vmem:[#allocation10 + $0x4b8] sm:$0xff]
    %v5427 = vld [vmem:[#allocation10 + $0x4c0] sm:$0xff]
    %v5428 = vld [vmem:[#allocation10 + $0x4c8] sm:$0xff]
    %v5429 = vld [vmem:[#allocation10 + $0x4d0] sm:$0xff]
    %v5430 = vld [vmem:[#allocation10 + $0x4d8] sm:$0xff]
    %v5431 = vld [vmem:[#allocation10 + $0x4e0] sm:$0xff]
    %v5432 = vld [vmem:[#allocation10 + $0x4e8] sm:$0xff]
    %v5433 = vld [vmem:[#allocation10 + $0x4f0] sm:$0xff]
    %v5434 = vld [vmem:[#allocation10 + $0x4f8] sm:$0xff]
    %v5435 = vld [vmem:[#allocation10 + $0x500] sm:$0xff]
    %v5436 = vld [vmem:[#allocation10 + $0x508] sm:$0xff]
    %v5437 = vld [vmem:[#allocation10 + $0x510] sm:$0xff]
    %v5438 = vld [vmem:[#allocation10 + $0x518] sm:$0xff]
    %v5439 = vld [vmem:[#allocation10 + $0x520] sm:$0xff]
    %v5440 = vld [vmem:[#allocation10 + $0x528] sm:$0xff]
    %v5441 = vld [vmem:[#allocation10 + $0x530] sm:$0xff]
    %v5442 = vld [vmem:[#allocation10 + $0x538] sm:$0xff]
    %v5443 = vld [vmem:[#allocation10 + $0x540] sm:$0xff]
    %v5444 = vld [vmem:[#allocation10 + $0x548] sm:$0xff]
    %v5445 = vld [vmem:[#allocation10 + $0x550] sm:$0xff]
    %v5446 = vld [vmem:[#allocation10 + $0x558] sm:$0xff]
    %v5447 = vld [vmem:[#allocation10 + $0x560] sm:$0xff]
    %v5448 = vld [vmem:[#allocation10 + $0x568] sm:$0xff]
    %v5449 = vld [vmem:[#allocation10 + $0x570] sm:$0xff]
    %v5450 = vld [vmem:[#allocation10 + $0x578] sm:$0xff]
    %v5451 = vld [vmem:[#allocation10 + $0x580] sm:$0xff]
    %v5452 = vld [vmem:[#allocation10 + $0x588] sm:$0xff]
    %v5453 = vld [vmem:[#allocation10 + $0x590] sm:$0xff]
    %v5454 = vld [vmem:[#allocation10 + $0x598] sm:$0xff]
    %v5455 = vld [vmem:[#allocation10 + $0x5a0] sm:$0xff]
    %v5456 = vld [vmem:[#allocation10 + $0x5a8] sm:$0xff]
    %v5457 = vld [vmem:[#allocation10 + $0x5b0] sm:$0xff]
    %v5458 = vld [vmem:[#allocation10 + $0x5b8] sm:$0xff]
    %v5459 = vld [vmem:[#allocation10 + $0x5c0] sm:$0xff]
    %v5460 = vld [vmem:[#allocation10 + $0x5c8] sm:$0xff]
    %v5461 = vld [vmem:[#allocation10 + $0x5d0] sm:$0xff]
    %v5462 = vld [vmem:[#allocation10 + $0x5d8] sm:$0xff]
    %v5463 = vld [vmem:[#allocation10 + $0x5e0] sm:$0xff]
    %v5464 = vld [vmem:[#allocation10 + $0x5e8] sm:$0xff]
    %v5465 = vld [vmem:[#allocation10 + $0x5f0] sm:$0xff]
    %v5466 = vld [vmem:[#allocation10 + $0x5f8] sm:$0xff]
    %v5467 = vld [vmem:[#allocation10 + $0x600] sm:$0xff]
    %v5468 = vld [vmem:[#allocation10 + $0x608] sm:$0xff]
    %v5469 = vld [vmem:[#allocation10 + $0x610] sm:$0xff]
    %v5470 = vld [vmem:[#allocation10 + $0x618] sm:$0xff]
    %v5471 = vld [vmem:[#allocation10 + $0x620] sm:$0xff]
    %v5472 = vld [vmem:[#allocation10 + $0x628] sm:$0xff]
    %v5473 = vld [vmem:[#allocation10 + $0x630] sm:$0xff]
    %v5474 = vld [vmem:[#allocation10 + $0x638] sm:$0xff]
    %v5475 = vld [vmem:[#allocation10 + $0x640] sm:$0xff]
    %v5476 = vld [vmem:[#allocation10 + $0x648] sm:$0xff]
    %v5477 = vld [vmem:[#allocation10 + $0x650] sm:$0xff]
    %v5478 = vld [vmem:[#allocation10 + $0x658] sm:$0xff]
    %v5479 = vld [vmem:[#allocation10 + $0x660] sm:$0xff]
    %v5480 = vld [vmem:[#allocation10 + $0x668] sm:$0xff]
    %v5481 = vld [vmem:[#allocation10 + $0x670] sm:$0xff]
    %v5482 = vld [vmem:[#allocation10 + $0x678] sm:$0xff]
    %v5483 = vld [vmem:[#allocation10 + $0x680] sm:$0xff]
    %v5484 = vld [vmem:[#allocation10 + $0x688] sm:$0xff]
    %v5485 = vld [vmem:[#allocation10 + $0x690] sm:$0xff]
    %v5486 = vld [vmem:[#allocation10 + $0x698] sm:$0xff]
    %v5487 = vld [vmem:[#allocation10 + $0x6a0] sm:$0xff]
    %v5488 = vld [vmem:[#allocation10 + $0x6a8] sm:$0xff]
    %v5489 = vld [vmem:[#allocation10 + $0x6b0] sm:$0xff]
    %v5490 = vld [vmem:[#allocation10 + $0x6b8] sm:$0xff]
    %v5491 = vld [vmem:[#allocation10 + $0x6c0] sm:$0xff]
    %v5492 = vld [vmem:[#allocation10 + $0x6c8] sm:$0xff]
    %v5493 = vld [vmem:[#allocation10 + $0x6d0] sm:$0xff]
    %v5494 = vld [vmem:[#allocation10 + $0x6d8] sm:$0xff]
    %v5495 = vld [vmem:[#allocation10 + $0x6e0] sm:$0xff]
    %v5496 = vld [vmem:[#allocation10 + $0x6e8] sm:$0xff]
    %v5497 = vld [vmem:[#allocation10 + $0x6f0] sm:$0xff]
    %v5498 = vld [vmem:[#allocation10 + $0x6f8] sm:$0xff]
    %v5499 = vld [vmem:[#allocation10 + $0x700] sm:$0xff]
    %v5500 = vld [vmem:[#allocation10 + $0x708] sm:$0xff]
    %v5501 = vld [vmem:[#allocation10 + $0x710] sm:$0xff]
    %v5502 = vld [vmem:[#allocation10 + $0x718] sm:$0xff]
    %v5503 = vld [vmem:[#allocation10 + $0x720] sm:$0xff]
    %v5504 = vld [vmem:[#allocation10 + $0x728] sm:$0xff]
    %v5505 = vld [vmem:[#allocation10 + $0x730] sm:$0xff]
    %v5506 = vld [vmem:[#allocation10 + $0x738] sm:$0xff]
    %v5507 = vld [vmem:[#allocation10 + $0x740] sm:$0xff]
    %v5508 = vld [vmem:[#allocation10 + $0x748] sm:$0xff]
    %v5509 = vld [vmem:[#allocation10 + $0x750] sm:$0xff]
    %v5510 = vld [vmem:[#allocation10 + $0x758] sm:$0xff]
    %v5511 = vld [vmem:[#allocation10 + $0x760] sm:$0xff]
    %v5512 = vld [vmem:[#allocation10 + $0x768] sm:$0xff]
    %v5513 = vld [vmem:[#allocation10 + $0x770] sm:$0xff]
    %v5514 = vld [vmem:[#allocation10 + $0x778] sm:$0xff]
    %v5515 = vld [vmem:[#allocation10 + $0x780] sm:$0xff]
    %v5516 = vld [vmem:[#allocation10 + $0x788] sm:$0xff]
    %v5517 = vld [vmem:[#allocation10 + $0x790] sm:$0xff]
    %v5518 = vld [vmem:[#allocation10 + $0x798] sm:$0xff]
    %v5519 = vld [vmem:[#allocation10 + $0x7a0] sm:$0xff]
    %v5520 = vld [vmem:[#allocation10 + $0x7a8] sm:$0xff]
    %v5521 = vld [vmem:[#allocation10 + $0x7b0] sm:$0xff]
    %v5522 = vld [vmem:[#allocation10 + $0x7b8] sm:$0xff]
    %v5523 = vld [vmem:[#allocation10 + $0x7c0] sm:$0xff]
    %v5524 = vld [vmem:[#allocation10 + $0x7c8] sm:$0xff]
    %v5525 = vld [vmem:[#allocation10 + $0x7d0] sm:$0xff]
    %v5526 = vld [vmem:[#allocation10 + $0x7d8] sm:$0xff]
    %v5527 = vld [vmem:[#allocation10 + $0x7e0] sm:$0xff]
    %v5528 = vld [vmem:[#allocation10 + $0x7e8] sm:$0xff]
    %v5529 = vld [vmem:[#allocation10 + $0x7f0] sm:$0xff]
    %v5530 = vld [vmem:[#allocation10 + $0x7f8] sm:$0xff]
    %v5531 = vld [vmem:[%s4] sm:$0xf]
    %v5533 = vlaneseq
    %v5534 = vshrl.u32 %v5533, 7
    %v5535 = vsub.s32 0, %v5534
    %v5536 = vrot.slane %v5531, %v5535
    %v5537 = vlaneseq
    %v5538 = vshrl.u32 %v5537, 7
    %v5539 = vsub.s32 1, %v5538
    %v5540 = vrot.slane %v5531, %v5539
    %v5541 = vlaneseq
    %v5542 = vshrl.u32 %v5541, 7
    %v5543 = vsub.s32 2, %v5542
    %v5544 = vrot.slane %v5531, %v5543
    %v5545 = vlaneseq
    %v5546 = vshrl.u32 %v5545, 7
    %v5547 = vsub.s32 3, %v5546
    %v5548 = vrot.slane %v5531, %v5547
    %v5555 = vcombine.high %v5273, %v5273
    %v5556 = vcombine.high %v5274, %v5274
    %5559 = vmatprep.subr.mxu0 %v5276
    %5560 = vmatpush1.msra.mxu0 %v5275
    %5561 = vmatprep.subr.mxu0 %v5280
    %5562 = vmatpush1.msra.mxu0 %v5279
    %5563 = vmatprep.subr.mxu0 %v5284
    %5564 = vmatpush1.msra.mxu0 %v5283
    %5565 = vmatprep.subr.mxu0 %v5288
    %5566 = vmatpush1.msra.mxu0 %v5287
    %5567 = vmatprep.subr.mxu0 %v5292
    %5568 = vmatpush1.msra.mxu0 %v5291
    %5569 = vmatprep.subr.mxu0 %v5296
    %5570 = vmatpush1.msra.mxu0 %v5295
    %5571 = vmatprep.subr.mxu0 %v5300
    %5572 = vmatpush1.msra.mxu0 %v5299
    %5573 = vmatprep.subr.mxu0 %v5304
    %5574 = vmatpush1.msra.mxu0 %v5303
    %5575 = vmatprep.subr.mxu0 %v5308
    %5576 = vmatpush1.msra.mxu0 %v5307
    %5577 = vmatprep.subr.mxu0 %v5312
    %5578 = vmatpush1.msra.mxu0 %v5311
    %5579 = vmatprep.subr.mxu0 %v5316
    %5580 = vmatpush1.msra.mxu0 %v5315
    %5581 = vmatprep.subr.mxu0 %v5320
    %5582 = vmatpush1.msra.mxu0 %v5319
    %5583 = vmatprep.subr.mxu0 %v5324
    %5584 = vmatpush1.msra.mxu0 %v5323
    %5585 = vmatprep.subr.mxu0 %v5328
    %5586 = vmatpush1.msra.mxu0 %v5327
    %5587 = vmatprep.subr.mxu0 %v5332
    %5588 = vmatpush1.msra.mxu0 %v5331
    %5589 = vmatprep.subr.mxu0 %v5336
    %5590 = vmatpush1.msra.mxu0 %v5335
    %5591 = vmatprep.subr.mxu0 %v5340
    %5592 = vmatpush1.msra.mxu0 %v5339
    %5593 = vmatprep.subr.mxu0 %v5344
    %5594 = vmatpush1.msra.mxu0 %v5343
    %5595 = vmatprep.subr.mxu0 %v5348
    %5596 = vmatpush1.msra.mxu0 %v5347
    %5597 = vmatprep.subr.mxu0 %v5352
    %5598 = vmatpush1.msra.mxu0 %v5351
    %5599 = vmatprep.subr.mxu0 %v5356
    %5600 = vmatpush1.msra.mxu0 %v5355
    %5601 = vmatprep.subr.mxu0 %v5360
    %5602 = vmatpush1.msra.mxu0 %v5359
    %5603 = vmatprep.subr.mxu0 %v5364
    %5604 = vmatpush1.msra.mxu0 %v5363
    %5605 = vmatprep.subr.mxu0 %v5368
    %5606 = vmatpush1.msra.mxu0 %v5367
    %5607 = vmatprep.subr.mxu0 %v5372
    %5608 = vmatpush1.msra.mxu0 %v5371
    %5609 = vmatprep.subr.mxu0 %v5376
    %5610 = vmatpush1.msra.mxu0 %v5375
    %5611 = vmatprep.subr.mxu0 %v5380
    %5612 = vmatpush1.msra.mxu0 %v5379
    %5613 = vmatprep.subr.mxu0 %v5384
    %5614 = vmatpush1.msra.mxu0 %v5383
    %5615 = vmatprep.subr.mxu0 %v5388
    %5616 = vmatpush1.msra.mxu0 %v5387
    %5617 = vmatprep.subr.mxu0 %v5392
    %5618 = vmatpush1.msra.mxu0 %v5391
    %5619 = vmatprep.subr.mxu0 %v5396
    %5620 = vmatpush1.msra.mxu0 %v5395
    %5621 = vmatprep.subr.mxu0 %v5400
    %5622 = vmatpush1.msra.mxu0 %v5399
    %5623 = vmatprep.mubr.f32.mxu0 %v5555
    %5624 = vmatmul.mubr.f32.gmra.mrb[0].mxu0 %v5273
    %v5625 = vpop.f32.mrb[0].mxu0
    %v5626 = vadd.f32 %v5536, %v5625
    %v5627 = vpop.f32.mrb[0].mxu0
    %v5628 = vadd.f32 %v5540, %v5627
    %5629 = vdwg.mxu0
    %5630 = vmatprep.subr.mxu0 %v5404
    %5631 = vmatpush1.msra.mxu0 %v5403
    %5632 = vmatprep.subr.mxu0 %v5408
    %5633 = vmatpush1.msra.mxu0 %v5407
    %5634 = vmatprep.subr.mxu0 %v5412
    %5635 = vmatpush1.msra.mxu0 %v5411
    %5636 = vmatprep.subr.mxu0 %v5416
    %5637 = vmatpush1.msra.mxu0 %v5415
    %5638 = vmatprep.subr.mxu0 %v5420
    %5639 = vmatpush1.msra.mxu0 %v5419
    %5640 = vmatprep.subr.mxu0 %v5424
    %5641 = vmatpush1.msra.mxu0 %v5423
    %5642 = vmatprep.subr.mxu0 %v5428
    %5643 = vmatpush1.msra.mxu0 %v5427
    %5644 = vmatprep.subr.mxu0 %v5432
    %5645 = vmatpush1.msra.mxu0 %v5431
    %5646 = vmatprep.subr.mxu0 %v5436
    %5647 = vmatpush1.msra.mxu0 %v5435
    %5648 = vmatprep.subr.mxu0 %v5440
    %5649 = vmatpush1.msra.mxu0 %v5439
    %5650 = vmatprep.subr.mxu0 %v5444
    %5651 = vmatpush1.msra.mxu0 %v5443
    %5652 = vmatprep.subr.mxu0 %v5448
    %5653 = vmatpush1.msra.mxu0 %v5447
    %5654 = vmatprep.subr.mxu0 %v5452
    %5655 = vmatpush1.msra.mxu0 %v5451
    %5656 = vmatprep.subr.mxu0 %v5456
    %5657 = vmatpush1.msra.mxu0 %v5455
    %5658 = vmatprep.subr.mxu0 %v5460
    %5659 = vmatpush1.msra.mxu0 %v5459
    %5660 = vmatprep.subr.mxu0 %v5464
    %5661 = vmatpush1.msra.mxu0 %v5463
    %5662 = vmatprep.subr.mxu0 %v5468
    %5663 = vmatpush1.msra.mxu0 %v5467
    %5664 = vmatprep.subr.mxu0 %v5472
    %5665 = vmatpush1.msra.mxu0 %v5471
    %5666 = vmatprep.subr.mxu0 %v5476
    %5667 = vmatpush1.msra.mxu0 %v5475
    %5668 = vmatprep.subr.mxu0 %v5480
    %5669 = vmatpush1.msra.mxu0 %v5479
    %5670 = vmatprep.subr.mxu0 %v5484
    %5671 = vmatpush1.msra.mxu0 %v5483
    %5672 = vmatprep.subr.mxu0 %v5488
    %5673 = vmatpush1.msra.mxu0 %v5487
    %5674 = vmatprep.subr.mxu0 %v5492
    %5675 = vmatpush1.msra.mxu0 %v5491
    %5676 = vmatprep.subr.mxu0 %v5496
    %5677 = vmatpush1.msra.mxu0 %v5495
    %5678 = vmatprep.subr.mxu0 %v5500
    %5679 = vmatpush1.msra.mxu0 %v5499
    %5680 = vmatprep.subr.mxu0 %v5504
    %5681 = vmatpush1.msra.mxu0 %v5503
    %5682 = vmatprep.subr.mxu0 %v5508
    %5683 = vmatpush1.msra.mxu0 %v5507
    %5684 = vmatprep.subr.mxu0 %v5512
    %5685 = vmatpush1.msra.mxu0 %v5511
    %5686 = vmatprep.subr.mxu0 %v5516
    %5687 = vmatpush1.msra.mxu0 %v5515
    %5688 = vmatprep.subr.mxu0 %v5520
    %5689 = vmatpush1.msra.mxu0 %v5519
    %5690 = vmatprep.subr.mxu0 %v5524
    %5691 = vmatpush1.msra.mxu0 %v5523
    %5692 = vmatprep.subr.mxu0 %v5528
    %5693 = vmatpush1.msra.mxu0 %v5527
    %5694 = vmatprep.mubr.f32.mxu0 %v5556
    %5695 = vmatmul.mubr.f32.gmra.mrb[0].mxu0 %v5274
    %v5696 = vpop.f32.mrb[0].mxu0
    %v5697 = vadd.f32 %v5626, %v5696
    %v5698 = vpop.f32.mrb[0].mxu0
    %v5699 = vadd.f32 %v5628, %v5698
    %5700 = vdwg.mxu0
    %5701 = vmatprep.subr.mxu0 %v5278
    %5702 = vmatpush1.msra.mxu0 %v5277
    %5703 = vmatprep.subr.mxu0 %v5282
    %5704 = vmatpush1.msra.mxu0 %v5281
    %5705 = vmatprep.subr.mxu0 %v5286
    %5706 = vmatpush1.msra.mxu0 %v5285
    %5707 = vmatprep.subr.mxu0 %v5290
    %5708 = vmatpush1.msra.mxu0 %v5289
    %5709 = vmatprep.subr.mxu0 %v5294
    %5710 = vmatpush1.msra.mxu0 %v5293
    %5711 = vmatprep.subr.mxu0 %v5298
    %5712 = vmatpush1.msra.mxu0 %v5297
    %5713 = vmatprep.subr.mxu0 %v5302
    %5714 = vmatpush1.msra.mxu0 %v5301
    %5715 = vmatprep.subr.mxu0 %v5306
    %5716 = vmatpush1.msra.mxu0 %v5305
    %5717 = vmatprep.subr.mxu0 %v5310
    %5718 = vmatpush1.msra.mxu0 %v5309
    %5719 = vmatprep.subr.mxu0 %v5314
    %5720 = vmatpush1.msra.mxu0 %v5313
    %5721 = vmatprep.subr.mxu0 %v5318
    %5722 = vmatpush1.msra.mxu0 %v5317
    %5723 = vmatprep.subr.mxu0 %v5322
    %5724 = vmatpush1.msra.mxu0 %v5321
    %5725 = vmatprep.subr.mxu0 %v5326
    %5726 = vmatpush1.msra.mxu0 %v5325
    %5727 = vmatprep.subr.mxu0 %v5330
    %5728 = vmatpush1.msra.mxu0 %v5329
    %5729 = vmatprep.subr.mxu0 %v5334
    %5730 = vmatpush1.msra.mxu0 %v5333
    %5731 = vmatprep.subr.mxu0 %v5338
    %5732 = vmatpush1.msra.mxu0 %v5337
    %5733 = vmatprep.subr.mxu0 %v5342
    %5734 = vmatpush1.msra.mxu0 %v5341
    %5735 = vmatprep.subr.mxu0 %v5346
    %5736 = vmatpush1.msra.mxu0 %v5345
    %5737 = vmatprep.subr.mxu0 %v5350
    %5738 = vmatpush1.msra.mxu0 %v5349
    %5739 = vmatprep.subr.mxu0 %v5354
    %5740 = vmatpush1.msra.mxu0 %v5353
    %5741 = vmatprep.subr.mxu0 %v5358
    %5742 = vmatpush1.msra.mxu0 %v5357
    %5743 = vmatprep.subr.mxu0 %v5362
    %5744 = vmatpush1.msra.mxu0 %v5361
    %5745 = vmatprep.subr.mxu0 %v5366
    %5746 = vmatpush1.msra.mxu0 %v5365
    %5747 = vmatprep.subr.mxu0 %v5370
    %5748 = vmatpush1.msra.mxu0 %v5369
    %5749 = vmatprep.subr.mxu0 %v5374
    %5750 = vmatpush1.msra.mxu0 %v5373
    %5751 = vmatprep.subr.mxu0 %v5378
    %5752 = vmatpush1.msra.mxu0 %v5377
    %5753 = vmatprep.subr.mxu0 %v5382
    %5754 = vmatpush1.msra.mxu0 %v5381
    %5755 = vmatprep.subr.mxu0 %v5386
    %5756 = vmatpush1.msra.mxu0 %v5385
    %5757 = vmatprep.subr.mxu0 %v5390
    %5758 = vmatpush1.msra.mxu0 %v5389
    %5759 = vmatprep.subr.mxu0 %v5394
    %5760 = vmatpush1.msra.mxu0 %v5393
    %5761 = vmatprep.subr.mxu0 %v5398
    %5762 = vmatpush1.msra.mxu0 %v5397
    %5763 = vmatprep.subr.mxu0 %v5402
    %5764 = vmatpush1.msra.mxu0 %v5401
    %5765 = vmatprep.mubr.f32.mxu0 %v5555
    %5766 = vmatmul.mubr.f32.gmra.mrb[0].mxu0 %v5273
    %v5767 = vpop.f32.mrb[0].mxu0
    %v5768 = vadd.f32 %v5544, %v5767
    %v5769 = vpop.f32.mrb[0].mxu0
    %v5770 = vadd.f32 %v5548, %v5769
    %5771 = vdwg.mxu0
    %5772 = vmatprep.subr.mxu0 %v5406
    %5773 = vmatpush1.msra.mxu0 %v5405
    %5774 = vmatprep.subr.mxu0 %v5410
    %5775 = vmatpush1.msra.mxu0 %v5409
    %5776 = vmatprep.subr.mxu0 %v5414
    %5777 = vmatpush1.msra.mxu0 %v5413
    %5778 = vmatprep.subr.mxu0 %v5418
    %5779 = vmatpush1.msra.mxu0 %v5417
    %5780 = vmatprep.subr.mxu0 %v5422
    %5781 = vmatpush1.msra.mxu0 %v5421
    %5782 = vmatprep.subr.mxu0 %v5426
    %5783 = vmatpush1.msra.mxu0 %v5425
    %5784 = vmatprep.subr.mxu0 %v5430
    %5785 = vmatpush1.msra.mxu0 %v5429
    %5786 = vmatprep.subr.mxu0 %v5434
    %5787 = vmatpush1.msra.mxu0 %v5433
    %5788 = vmatprep.subr.mxu0 %v5438
    %5789 = vmatpush1.msra.mxu0 %v5437
    %5790 = vmatprep.subr.mxu0 %v5442
    %5791 = vmatpush1.msra.mxu0 %v5441
    %5792 = vmatprep.subr.mxu0 %v5446
    %5793 = vmatpush1.msra.mxu0 %v5445
    %5794 = vmatprep.subr.mxu0 %v5450
    %5795 = vmatpush1.msra.mxu0 %v5449
    %5796 = vmatprep.subr.mxu0 %v5454
    %5797 = vmatpush1.msra.mxu0 %v5453
    %5798 = vmatprep.subr.mxu0 %v5458
    %5799 = vmatpush1.msra.mxu0 %v5457
    %5800 = vmatprep.subr.mxu0 %v5462
    %5801 = vmatpush1.msra.mxu0 %v5461
    %5802 = vmatprep.subr.mxu0 %v5466
    %5803 = vmatpush1.msra.mxu0 %v5465
    %5804 = vmatprep.subr.mxu0 %v5470
    %5805 = vmatpush1.msra.mxu0 %v5469
    %5806 = vmatprep.subr.mxu0 %v5474
    %5807 = vmatpush1.msra.mxu0 %v5473
    %5808 = vmatprep.subr.mxu0 %v5478
    %5809 = vmatpush1.msra.mxu0 %v5477
    %5810 = vmatprep.subr.mxu0 %v5482
    %5811 = vmatpush1.msra.mxu0 %v5481
    %5812 = vmatprep.subr.mxu0 %v5486
    %5813 = vmatpush1.msra.mxu0 %v5485
    %5814 = vmatprep.subr.mxu0 %v5490
    %5815 = vmatpush1.msra.mxu0 %v5489
    %5816 = vmatprep.subr.mxu0 %v5494
    %5817 = vmatpush1.msra.mxu0 %v5493
    %5818 = vmatprep.subr.mxu0 %v5498
    %5819 = vmatpush1.msra.mxu0 %v5497
    %5820 = vmatprep.subr.mxu0 %v5502
    %5821 = vmatpush1.msra.mxu0 %v5501
    %5822 = vmatprep.subr.mxu0 %v5506
    %5823 = vmatpush1.msra.mxu0 %v5505
    %5824 = vmatprep.subr.mxu0 %v5510
    %5825 = vmatpush1.msra.mxu0 %v5509
    %5826 = vmatprep.subr.mxu0 %v5514
    %5827 = vmatpush1.msra.mxu0 %v5513
    %5828 = vmatprep.subr.mxu0 %v5518
    %5829 = vmatpush1.msra.mxu0 %v5517
    %5830 = vmatprep.subr.mxu0 %v5522
    %5831 = vmatpush1.msra.mxu0 %v5521
    %5832 = vmatprep.subr.mxu0 %v5526
    %5833 = vmatpush1.msra.mxu0 %v5525
    %5834 = vmatprep.subr.mxu0 %v5530
    %5835 = vmatpush1.msra.mxu0 %v5529
    %5836 = vmatprep.mubr.f32.mxu0 %v5556
    %5837 = vmatmul.mubr.f32.gmra.mrb[0].mxu0 %v5274
    %v5838 = vpop.f32.mrb[0].mxu0
    %v5839 = vadd.f32 %v5768, %v5838
    %v5840 = vpop.f32.mrb[0].mxu0
    %v5841 = vadd.f32 %v5770, %v5840
    %5842 = vdwg.mxu0
    %v5843 = vmax.f32 %v5697, 0.0
    %v5844 = vmax.f32 %v5699, 0.0
    %v5845 = vmax.f32 %v5839, 0.0
    %v5846 = vmax.f32 %v5841, 0.0
    %v5847 = vld [vmem:[%s5] sm:$0xff]
    %v5848 = vld [vmem:[%s5 + $0x8] sm:$0xff]
    %v5849 = vld [vmem:[%s5 + $0x10] sm:$0xff]
    %v5850 = vld [vmem:[%s5 + $0x18] sm:$0xff]
    %v5851 = vld [vmem:[%s5 + $0x20] sm:$0xff]
    %v5852 = vld [vmem:[%s5 + $0x28] sm:$0xff]
    %v5853 = vld [vmem:[%s5 + $0x30] sm:$0xff]
    %v5854 = vld [vmem:[%s5 + $0x38] sm:$0xff]
    %v5855 = vld [vmem:[%s5 + $0x40] sm:$0xff]
    %v5856 = vld [vmem:[%s5 + $0x48] sm:$0xff]
    %v5857 = vld [vmem:[%s5 + $0x50] sm:$0xff]
    %v5858 = vld [vmem:[%s5 + $0x58] sm:$0xff]
    %v5859 = vld [vmem:[%s5 + $0x60] sm:$0xff]
    %v5860 = vld [vmem:[%s5 + $0x68] sm:$0xff]
    %v5861 = vld [vmem:[%s5 + $0x70] sm:$0xff]
    %v5862 = vld [vmem:[%s5 + $0x78] sm:$0xff]
    %v5863 = vld [vmem:[%s5 + $0x80] sm:$0xff]
    %v5864 = vld [vmem:[%s5 + $0x88] sm:$0xff]
    %v5865 = vld [vmem:[%s5 + $0x90] sm:$0xff]
    %v5866 = vld [vmem:[%s5 + $0x98] sm:$0xff]
    %v5867 = vld [vmem:[%s5 + $0xa0] sm:$0xff]
    %v5868 = vld [vmem:[%s5 + $0xa8] sm:$0xff]
    %v5869 = vld [vmem:[%s5 + $0xb0] sm:$0xff]
    %v5870 = vld [vmem:[%s5 + $0xb8] sm:$0xff]
    %v5871 = vld [vmem:[%s5 + $0xc0] sm:$0xff]
    %v5872 = vld [vmem:[%s5 + $0xc8] sm:$0xff]
    %v5873 = vld [vmem:[%s5 + $0xd0] sm:$0xff]
    %v5874 = vld [vmem:[%s5 + $0xd8] sm:$0xff]
    %v5875 = vld [vmem:[%s5 + $0xe0] sm:$0xff]
    %v5876 = vld [vmem:[%s5 + $0xe8] sm:$0xff]
    %v5877 = vld [vmem:[%s5 + $0xf0] sm:$0xff]
    %v5878 = vld [vmem:[%s5 + $0xf8] sm:$0xff]
    %v5879 = vld [vmem:[%s5 + $0x100] sm:$0xff]
    %v5880 = vld [vmem:[%s5 + $0x108] sm:$0xff]
    %v5881 = vld [vmem:[%s5 + $0x110] sm:$0xff]
    %v5882 = vld [vmem:[%s5 + $0x118] sm:$0xff]
    %v5883 = vld [vmem:[%s5 + $0x120] sm:$0xff]
    %v5884 = vld [vmem:[%s5 + $0x128] sm:$0xff]
    %v5885 = vld [vmem:[%s5 + $0x130] sm:$0xff]
    %v5886 = vld [vmem:[%s5 + $0x138] sm:$0xff]
    %v5887 = vld [vmem:[%s5 + $0x140] sm:$0xff]
    %v5888 = vld [vmem:[%s5 + $0x148] sm:$0xff]
    %v5889 = vld [vmem:[%s5 + $0x150] sm:$0xff]
    %v5890 = vld [vmem:[%s5 + $0x158] sm:$0xff]
    %v5891 = vld [vmem:[%s5 + $0x160] sm:$0xff]
    %v5892 = vld [vmem:[%s5 + $0x168] sm:$0xff]
    %v5893 = vld [vmem:[%s5 + $0x170] sm:$0xff]
    %v5894 = vld [vmem:[%s5 + $0x178] sm:$0xff]
    %v5895 = vld [vmem:[%s5 + $0x180] sm:$0xff]
    %v5896 = vld [vmem:[%s5 + $0x188] sm:$0xff]
    %v5897 = vld [vmem:[%s5 + $0x190] sm:$0xff]
    %v5898 = vld [vmem:[%s5 + $0x198] sm:$0xff]
    %v5899 = vld [vmem:[%s5 + $0x1a0] sm:$0xff]
    %v5900 = vld [vmem:[%s5 + $0x1a8] sm:$0xff]
    %v5901 = vld [vmem:[%s5 + $0x1b0] sm:$0xff]
    %v5902 = vld [vmem:[%s5 + $0x1b8] sm:$0xff]
    %v5903 = vld [vmem:[%s5 + $0x1c0] sm:$0xff]
    %v5904 = vld [vmem:[%s5 + $0x1c8] sm:$0xff]
    %v5905 = vld [vmem:[%s5 + $0x1d0] sm:$0xff]
    %v5906 = vld [vmem:[%s5 + $0x1d8] sm:$0xff]
    %v5907 = vld [vmem:[%s5 + $0x1e0] sm:$0xff]
    %v5908 = vld [vmem:[%s5 + $0x1e8] sm:$0xff]
    %v5909 = vld [vmem:[%s5 + $0x1f0] sm:$0xff]
    %v5910 = vld [vmem:[%s5 + $0x1f8] sm:$0xff]
    %v5911 = vld [vmem:[%s6] sm:$0x1]
    %v5913 = vlaneseq
    %v5914 = vshrl.u32 %v5913, 7
    %v5915 = vsub.s32 0, %v5914
    %v5916 = vrot.slane %v5911, %v5915
    %5918 = vmatprep.subr.mxu0 0.0
    %5919 = vmatpush1.msra.mxu0 %v5847
    %5920 = vmatprep.subr.mxu0 0.0
    %5921 = vmatpush1.msra.mxu0 %v5848
    %5922 = vmatprep.subr.mxu0 0.0
    %5923 = vmatpush1.msra.mxu0 %v5849
    %5924 = vmatprep.subr.mxu0 0.0
    %5925 = vmatpush1.msra.mxu0 %v5850
    %5926 = vmatprep.subr.mxu0 0.0
    %5927 = vmatpush1.msra.mxu0 %v5851
    %5928 = vmatprep.subr.mxu0 0.0
    %5929 = vmatpush1.msra.mxu0 %v5852
    %5930 = vmatprep.subr.mxu0 0.0
    %5931 = vmatpush1.msra.mxu0 %v5853
    %5932 = vmatprep.subr.mxu0 0.0
    %5933 = vmatpush1.msra.mxu0 %v5854
    %5934 = vmatprep.subr.mxu0 0.0
    %5935 = vmatpush1.msra.mxu0 %v5855
    %5936 = vmatprep.subr.mxu0 0.0
    %5937 = vmatpush1.msra.mxu0 %v5856
    %5938 = vmatprep.subr.mxu0 0.0
    %5939 = vmatpush1.msra.mxu0 %v5857
    %5940 = vmatprep.subr.mxu0 0.0
    %5941 = vmatpush1.msra.mxu0 %v5858
    %5942 = vmatprep.subr.mxu0 0.0
    %5943 = vmatpush1.msra.mxu0 %v5859
    %5944 = vmatprep.subr.mxu0 0.0
    %5945 = vmatpush1.msra.mxu0 %v5860
    %5946 = vmatprep.subr.mxu0 0.0
    %5947 = vmatpush1.msra.mxu0 %v5861
    %5948 = vmatprep.subr.mxu0 0.0
    %5949 = vmatpush1.msra.mxu0 %v5862
    %5950 = vmatprep.subr.mxu0 0.0
    %5951 = vmatpush1.msra.mxu0 %v5863
    %5952 = vmatprep.subr.mxu0 0.0
    %5953 = vmatpush1.msra.mxu0 %v5864
    %5954 = vmatprep.subr.mxu0 0.0
    %5955 = vmatpush1.msra.mxu0 %v5865
    %5956 = vmatprep.subr.mxu0 0.0
    %5957 = vmatpush1.msra.mxu0 %v5866
    %5958 = vmatprep.subr.mxu0 0.0
    %5959 = vmatpush1.msra.mxu0 %v5867
    %5960 = vmatprep.subr.mxu0 0.0
    %5961 = vmatpush1.msra.mxu0 %v5868
    %5962 = vmatprep.subr.mxu0 0.0
    %5963 = vmatpush1.msra.mxu0 %v5869
    %5964 = vmatprep.subr.mxu0 0.0
    %5965 = vmatpush1.msra.mxu0 %v5870
    %5966 = vmatprep.subr.mxu0 0.0
    %5967 = vmatpush1.msra.mxu0 %v5871
    %5968 = vmatprep.subr.mxu0 0.0
    %5969 = vmatpush1.msra.mxu0 %v5872
    %5970 = vmatprep.subr.mxu0 0.0
    %5971 = vmatpush1.msra.mxu0 %v5873
    %5972 = vmatprep.subr.mxu0 0.0
    %5973 = vmatpush1.msra.mxu0 %v5874
    %5974 = vmatprep.subr.mxu0 0.0
    %5975 = vmatpush1.msra.mxu0 %v5875
    %5976 = vmatprep.subr.mxu0 0.0
    %5977 = vmatpush1.msra.mxu0 %v5876
    %5978 = vmatprep.subr.mxu0 0.0
    %5979 = vmatpush1.msra.mxu0 %v5877
    %5980 = vmatprep.subr.mxu0 0.0
    %5981 = vmatpush1.msra.mxu0 %v5878
    %5982 = vmatprep.mubr.f32.mxu0 %v5844
    %5983 = vmatmul.mubr.f32.gmra.mrb[0].mxu0 %v5843
    %v5984 = vpop.f32.mrb[0].mxu0
    %v5985 = vadd.f32 %v5916, %v5984
    %v5986 = vpop.f32.mrb[0].mxu0
    %5987 = vdwg.mxu0
    %5988 = vmatprep.subr.mxu0 0.0
    %5989 = vmatpush1.msra.mxu0 %v5879
    %5990 = vmatprep.subr.mxu0 0.0
    %5991 = vmatpush1.msra.mxu0 %v5880
    %5992 = vmatprep.subr.mxu0 0.0
    %5993 = vmatpush1.msra.mxu0 %v5881
    %5994 = vmatprep.subr.mxu0 0.0
    %5995 = vmatpush1.msra.mxu0 %v5882
    %5996 = vmatprep.subr.mxu0 0.0
    %5997 = vmatpush1.msra.mxu0 %v5883
    %5998 = vmatprep.subr.mxu0 0.0
    %5999 = vmatpush1.msra.mxu0 %v5884
    %6000 = vmatprep.subr.mxu0 0.0
    %6001 = vmatpush1.msra.mxu0 %v5885
    %6002 = vmatprep.subr.mxu0 0.0
    %6003 = vmatpush1.msra.mxu0 %v5886
    %6004 = vmatprep.subr.mxu0 0.0
    %6005 = vmatpush1.msra.mxu0 %v5887
    %6006 = vmatprep.subr.mxu0 0.0
    %6007 = vmatpush1.msra.mxu0 %v5888
    %6008 = vmatprep.subr.mxu0 0.0
    %6009 = vmatpush1.msra.mxu0 %v5889
    %6010 = vmatprep.subr.mxu0 0.0
    %6011 = vmatpush1.msra.mxu0 %v5890
    %6012 = vmatprep.subr.mxu0 0.0
    %6013 = vmatpush1.msra.mxu0 %v5891
    %6014 = vmatprep.subr.mxu0 0.0
    %6015 = vmatpush1.msra.mxu0 %v5892
    %6016 = vmatprep.subr.mxu0 0.0
    %6017 = vmatpush1.msra.mxu0 %v5893
    %6018 = vmatprep.subr.mxu0 0.0
    %6019 = vmatpush1.msra.mxu0 %v5894
    %6020 = vmatprep.subr.mxu0 0.0
    %6021 = vmatpush1.msra.mxu0 %v5895
    %6022 = vmatprep.subr.mxu0 0.0
    %6023 = vmatpush1.msra.mxu0 %v5896
    %6024 = vmatprep.subr.mxu0 0.0
    %6025 = vmatpush1.msra.mxu0 %v5897
    %6026 = vmatprep.subr.mxu0 0.0
    %6027 = vmatpush1.msra.mxu0 %v5898
    %6028 = vmatprep.subr.mxu0 0.0
    %6029 = vmatpush1.msra.mxu0 %v5899
    %6030 = vmatprep.subr.mxu0 0.0
    %6031 = vmatpush1.msra.mxu0 %v5900
    %6032 = vmatprep.subr.mxu0 0.0
    %6033 = vmatpush1.msra.mxu0 %v5901
    %6034 = vmatprep.subr.mxu0 0.0
    %6035 = vmatpush1.msra.mxu0 %v5902
    %6036 = vmatprep.subr.mxu0 0.0
    %6037 = vmatpush1.msra.mxu0 %v5903
    %6038 = vmatprep.subr.mxu0 0.0
    %6039 = vmatpush1.msra.mxu0 %v5904
    %6040 = vmatprep.subr.mxu0 0.0
    %6041 = vmatpush1.msra.mxu0 %v5905
    %6042 = vmatprep.subr.mxu0 0.0
    %6043 = vmatpush1.msra.mxu0 %v5906
    %6044 = vmatprep.subr.mxu0 0.0
    %6045 = vmatpush1.msra.mxu0 %v5907
    %6046 = vmatprep.subr.mxu0 0.0
    %6047 = vmatpush1.msra.mxu0 %v5908
    %6048 = vmatprep.subr.mxu0 0.0
    %6049 = vmatpush1.msra.mxu0 %v5909
    %6050 = vmatprep.subr.mxu0 0.0
    %6051 = vmatpush1.msra.mxu0 %v5910
    %6052 = vmatprep.mubr.f32.mxu0 %v5846
    %6053 = vmatmul.mubr.f32.gmra.mrb[0].mxu0 %v5845
    %v6054 = vpop.f32.mrb[0].mxu0
    %v6055 = vadd.f32 %v5985, %v6054
    %v6056 = vpop.f32.mrb[0].mxu0
    %6057 = vdwg.mxu0
    %vm6058 = vcmask 58368
    %6059 = vst.msk [vmem:[#allocation11] sm:$0x3] %vm6058, %v6055
    %vm6060 = vcmask 60418
    %6061 = vst.msk [vmem:[#allocation12 - $0x2] sm:$0xc] %vm6060, %v6055
    // Predicated region
    $region42: #{n_concat_cnns_forward.1} parent=1 // pred_check
      _
    $region43: #{n_concat_cnns_forward.1} parent=1 // pred_check_branch
      %6063 = sbr.rel (0) target = $region45
    $region44: #{n_concat_cnns_forward.1} parent=1 // pred_region
      %s6065 = ssub.s32 32, 32
      %6066 = vsyncadd [#allocation6], %s6065
      %s6068 = sshll.u32 [#allocation11], 4
      %s6069 = int_to_ptr.vmem [resolvable:$true] %s6068
      %6071 = dma.vmem_to_hbm [thread:$0]  %s6069, 32, %s7, [#allocation6]
    $region45: #{n_concat_cnns_forward.1} parent=1 // pred_fallthru
      _
    // Predicated region
    $region46: #{n_concat_cnns_forward.1} parent=1 // pred_check
      _
    $region47: #{n_concat_cnns_forward.1} parent=1 // pred_check_branch
      %6073 = sbr.rel (0) target = $region49
    $region48: #{n_concat_cnns_forward.1} parent=1 // pred_region
      %s6075 = ssub.s32 32, 32
      %6076 = vsyncadd [#allocation13], %s6075
      %s6078 = sshll.u32 [#allocation12], 4
      %s6079 = int_to_ptr.vmem [resolvable:$true] %s6078
      %6081 = dma.vmem_to_hbm [thread:$0]  %s6079, 32, %s8, [#allocation13]
    $region49: #{n_concat_cnns_forward.1} parent=1 // pred_fallthru
      _
    // Predicated region
    $region50: #{n_concat_cnns_forward.1} parent=1 // pred_check
      _
    $region51: #{n_concat_cnns_forward.1} parent=1 // pred_check_branch
      %6083 = sbr.rel (0) target = $region53
    $region52: #{n_concat_cnns_forward.1} parent=1 // pred_region
      %6084 = dma.done [#allocation6], 32
    $region53: #{n_concat_cnns_forward.1} parent=1 // pred_fallthru
      _
    // Predicated region
    $region54: #{n_concat_cnns_forward.1} parent=1 // pred_check
      _
    $region55: #{n_concat_cnns_forward.1} parent=1 // pred_check_branch
      %6086 = sbr.rel (0) target = $region57
    $region56: #{n_concat_cnns_forward.1} parent=1 // pred_region
      %6087 = dma.done [#allocation13], 32
    $region57: #{n_concat_cnns_forward.1} parent=1 // pred_fallthru
      _
    %6088 = vsyncpa [#allocation5], 1
    %6089 = vsyncpa [#allocation6], 1
    %6090 = vsyncpa [#allocation13], 1
    %6091 = vsyncpa [#allocation7], 1
    %6092 = vsyncpa [#allocation9], 1

</llo_original>
